<compile_context>
chip_gen: v5e
topology: v5e:2x2
jax: 0.10.0
libtpu: 0.0.40
codegen_flags: <defaults>
</compile_context>

<pallas_src>
import numpy as np
import jax
import jax.numpy as jnp
from jax import lax
from jax.experimental import pallas as pl
from jax.experimental.pallas import tpu as pltpu

H, W = 16, 16
HW = H * W                 # 256 pixels per image
NUM_IDS = 256              # uint8 id space; id 0 = background
CHUNK = 64                 # true-id rows processed per fused matmul/epilogue chunk
TB = 8                     # images per grid step (multiple of 8 -> aligned out slab)
OUT_LANES = 128            # lane-dense per-image output width


def _instance_seg_loss_kernel(pred_cols_ref, true_rows_ref, out_ref):
    # pred_cols_ref: (TB, HW, 1) int32   (pred ids, one sublane-dense column per image)
    # true_rows_ref: (TB, 1, HW) int32   (true ids, one lane-dense row per image)
    # out_ref:       (TB, OUT_LANES) f32 (per-image loss broadcast across lanes)

    # Hoisted small iotas; all large arrays come from broadcasting inside compares.
    lane_ids = lax.broadcasted_iota(jnp.int32, (1, NUM_IDS), 1)      # pred ids on lanes
    chunk_rows = lax.broadcasted_iota(jnp.int32, (CHUNK, 1), 0)      # true ids on sublanes
    row_iota = lax.broadcasted_iota(jnp.int32, (TB, OUT_LANES), 0)

    def image_body(b, slab):
        pred_col_raw = pred_cols_ref[b]                              # (HW, 1) int32
        true_row_raw = true_rows_ref[b]                              # (1, HW) int32

        # Match torch .to(torch.uint8): wrap ids into [0, 255] (works for negatives too).
        pred_col = pred_col_raw & 0xFF
        true_row = true_row_raw & 0xFF

        # Pred one-hot: pixels on sublanes, pred ids on lanes -> native MXU RHS.
        p_oh = (pred_col == lane_ids).astype(jnp.bfloat16)           # (HW, NUM_IDS)
        # Per-pred-id pixel counts; bf16 sum is exact (integer counts <= 256).
        cnt_pred = jnp.sum(p_oh, axis=0, keepdims=True).astype(jnp.float32)  # (1, NUM_IDS)

        def chunk_body(c, max_iou):
            ids_col = chunk_rows + c * CHUNK                         # (CHUNK, 1)
            # True one-hot built pre-transposed (true ids on sublanes, pixels on
            # lanes) with background id 0 folded into the mask.
            t_chunkT = jnp.logical_and(true_row == ids_col,
                                       ids_col > 0).astype(jnp.bfloat16)     # (CHUNK, HW)
            # interT[j, i] = #pixels with true == c*CHUNK + j and pred == i.
            interT = lax.dot_general(t_chunkT, p_oh, (((1,), (0,)), ((), ())),
                                     preferred_element_type=jnp.float32)     # (CHUNK, NUM_IDS)
            # Every pixel lands in exactly one pred bucket, so the row sum of
            # interT is the per-true-id pixel count.
            cnt_true = jnp.sum(interT, axis=1, keepdims=True)        # (CHUNK, 1)
            union = cnt_true + cnt_pred - interT
            # inter == 0 whenever union == 0, so max(union, 1) needs no select guard.
            iou = interT / jnp.maximum(union, 1.0)
            return jnp.maximum(max_iou, jnp.max(iou, axis=0, keepdims=True))

        max_iou = lax.fori_loop(0, NUM_IDS // CHUNK, chunk_body,
                                jnp.zeros((1, NUM_IDS), jnp.float32),
                                unroll=True)                         # (1, NUM_IDS)

        # A pred instance exists iff its id occurs and is non-zero.
        present = jnp.logical_and(cnt_pred > 0.0, lane_ids > 0).astype(jnp.float32)
        inst_loss = jnp.sum(present * (1.0 - max_iou), axis=1, keepdims=True)  # (1, 1)
        num_inst = jnp.sum(present, axis=1, keepdims=True)                     # (1, 1)

        # Dummy term uses the *raw* (unwrapped) ids, like the PyTorch reference.
        dummy = (jnp.sum(pred_col_raw.astype(jnp.float32), axis=(0, 1), keepdims=True)
                 + jnp.sum(true_row_raw.astype(jnp.float32), axis=(0, 1), keepdims=True)
                 ) / 1.0e12                                                     # (1, 1)

        loss = jnp.where(num_inst > 0.0, inst_loss + dummy,
                         jnp.zeros_like(inst_loss))                             # (1, 1)

        # Merge this image's scalar into its row of the lane-dense output slab.
        return jnp.where(row_iota == b,
                         jnp.broadcast_to(loss, (TB, OUT_LANES)), slab)

    slab = lax.fori_loop(0, TB, image_body,
                         jnp.zeros((TB, OUT_LANES), jnp.float32))
    out_ref[...] = slab   # one unmasked, sublane-aligned (8, 128) store


def instance_segmentation_loss_batch(pred_masks, true_masks):
    """pred_masks, true_masks: (B, H, W) integer instance-id maps.
    Returns (B,) float32 per-image losses."""
    B = pred_masks.shape[0]
    assert pred_masks.shape[1:] == (H, W) and true_masks.shape == pred_masks.shape
    # TODO(synk): for H*W >> 16*16 add an "arbitrary" pixel-chunk grid axis with a
    # (256, 256) f32 VMEM accumulator instead of one-hotting all pixels at once.
    b_pad = pl.cdiv(B, TB) * TB
    pred = jnp.asarray(pred_masks).astype(jnp.int32).reshape(B, HW)
    true = jnp.asarray(true_masks).astype(jnp.int32).reshape(B, HW)
    if b_pad != B:
        pred = jnp.pad(pred, ((0, b_pad - B), (0, 0)))
        true = jnp.pad(true, ((0, b_pad - B), (0, 0)))
    pred_cols = pred.reshape(b_pad, HW, 1)     # sublane-dense column per image
    true_rows = true.reshape(b_pad, 1, HW)     # lane-dense row per image

    out = pl.pallas_call(
        _instance_seg_loss_kernel,
        out_shape=jax.ShapeDtypeStruct((b_pad, OUT_LANES), jnp.float32),
        grid_spec=pltpu.PrefetchScalarGridSpec(
            num_scalar_prefetch=0,
            grid=(b_pad // TB,),
            in_specs=[
                pl.BlockSpec((TB, HW, 1), lambda g: (g, 0, 0)),
                pl.BlockSpec((TB, 1, HW), lambda g: (g, 0, 0)),
            ],
            out_specs=pl.BlockSpec((TB, OUT_LANES), lambda g: (g, 0)),
        ),
        compiler_params=pltpu.CompilerParams(
            dimension_semantics=("parallel",)),
    )(pred_cols, true_rows)
    return out[:B, 0]


def instance_segmentation_loss(pred_mask, true_mask):
    """Single-image forward (module semantics): (H, W) masks -> scalar f32 loss."""
    losses = instance_segmentation_loss_batch(pred_mask[None], true_mask[None])
    return losses[0]


def _reference_loss(pred, true):
    """Pure-numpy port of the PyTorch forward (for verification)."""
    pred = np.asarray(pred)
    true = np.asarray(true)
    pred_u8 = pred.astype(np.uint8)
    true_u8 = true.astype(np.uint8)
    pred_ids = [int(v) for v in np.unique(pred_u8) if v != 0]
    true_ids = [int(v) for v in np.unique(true_u8) if v != 0]
    if not pred_ids:
        return 0.0
    total = float(pred.sum()) / 1e12 + float(true.sum()) / 1e12
    for i in pred_ids:
        pm = pred_u8 == i
        max_iou = 0.0
        for j in true_ids:
            tm = true_u8 == j
            inter = float(np.logical_and(pm, tm).sum())
            union = float(np.logical_or(pm, tm).sum())
            iou = 0.0 if union == 0 else inter / union
            max_iou = max(max_iou, iou)
        total += 1.0 - max_iou
    return total


if __name__ == "__main__":
    key = jax.random.PRNGKey(0)
    kp, kt = jax.random.split(key)
    B = 16  # -> grid of length 2 (both v7x TensorCores active)
    # Small instance-id maps with ids in [0, 6); 0 = background.
    pred_batch = jax.random.randint(kp, (B, H, W), 0, 6, dtype=jnp.int32)
    true_batch = jax.random.randint(kt, (B, H, W), 0, 6, dtype=jnp.int32)
    # Exercise the "no pred instances -> loss 0" branch on image 0.
    pred_batch = pred_batch.at[0].set(0)

    losses = jax.block_until_ready(
        instance_segmentation_loss_batch(pred_batch, true_batch))

    pred_np = np.asarray(pred_batch)
    true_np = np.asarray(true_batch)
    for b in range(B):
        ref = _reference_loss(pred_np[b], true_np[b])
        assert abs(float(losses[b]) - ref) < 1e-5, (b, float(losses[b]), ref)

    # Single-image path (original module's forward signature).
    loss1 = jax.block_until_ready(
        instance_segmentation_loss(pred_batch[1], true_batch[1]))
    ref1 = _reference_loss(pred_np[1], true_np[1])
    assert abs(float(loss1) - ref1) < 1e-5, (float(loss1), ref1)

    print("KERNEL_OK")
</pallas_src>

<mosaic_0001>
module attributes {stable_mosaic.version = 11 : i64} {
  func.func @_instance_seg_loss_kernel(%arg0: i32, %arg1: memref<8x256x1xi32, #tpu.memory_space<vmem>>, %arg2: memref<8x1x256xi32, #tpu.memory_space<vmem>>, %arg3: memref<8x128xf32, #tpu.memory_space<vmem>>) attributes {dimension_semantics = [#tpu.dimension_semantics<parallel>], iteration_bounds = array<i64: 2>, scalar_prefetch = 0 : i64, scratch_operands = 0 : i64, tpu.core_type = #tpu.core_type<tc>, window_params = [{transform_indices = @transform_0, window_bounds = array<i64: 8, 256, 1>}, {transform_indices = @transform_1, window_bounds = array<i64: 8, 1, 256>}, {transform_indices = @transform_2, window_bounds = array<i64: 8, 128>}]} {
    %0 = tpu.iota {dimensions = array<i32: 1>} : vector<1x256xi32>
    %1 = tpu.iota {dimensions = array<i32: 0>} : vector<64x1xi32>
    %2 = tpu.iota {dimensions = array<i32: 0>} : vector<8x128xi32>
    %cst = arith.constant 0.000000e+00 : f32
    %3 = vector.broadcast %cst : f32 to vector<8x128xf32>
    %c0_i32 = arith.constant 0 : i32
    %c8_i32 = arith.constant 8 : i32
    %4 = arith.addi %c0_i32, %c8_i32 : i32
    %c1_i32 = arith.constant 1 : i32
    %5 = scf.for %arg4 = %c0_i32 to %4 step %c1_i32 iter_args(%arg5 = %3) -> (vector<8x128xf32>)  : i32 {
      %7 = arith.index_cast %arg4 : i32 to index
      %c0_2 = arith.constant 0 : index
      %c0_3 = arith.constant 0 : index
      %8 = vector.load %arg1[%7, %c0_2, %c0_3] : memref<8x256x1xi32, #tpu.memory_space<vmem>>, vector<1x256x1xi32>
      %9 = vector.shape_cast %8 : vector<1x256x1xi32> to vector<256x1xi32>
      %10 = arith.index_cast %arg4 : i32 to index
      %c0_4 = arith.constant 0 : index
      %c0_5 = arith.constant 0 : index
      %11 = vector.load %arg2[%10, %c0_4, %c0_5] : memref<8x1x256xi32, #tpu.memory_space<vmem>>, vector<1x1x256xi32>
      %12 = vector.shape_cast %11 : vector<1x1x256xi32> to vector<1x256xi32>
      %c255_i32 = arith.constant 255 : i32
      %13 = vector.broadcast %c255_i32 : i32 to vector<256x1xi32>
      %14 = arith.andi %9, %13 : vector<256x1xi32>
      %c255_i32_6 = arith.constant 255 : i32
      %15 = vector.broadcast %c255_i32_6 : i32 to vector<1x256xi32>
      %16 = arith.andi %12, %15 : vector<1x256xi32>
      %17 = vector.broadcast %14 : vector<256x1xi32> to vector<256x256xi32>
      %18 = vector.broadcast %0 : vector<1x256xi32> to vector<256x256xi32>
      %19 = arith.cmpi eq, %17, %18 : vector<256x256xi32>
      %20 = arith.extui %19 : vector<256x256xi1> to vector<256x256xi32>
      %21 = arith.sitofp %20 : vector<256x256xi32> to vector<256x256xf32>
      %22 = arith.truncf %21 : vector<256x256xf32> to vector<256x256xbf16>
      %23 = arith.extf %22 : vector<256x256xbf16> to vector<256x256xf32>
      %cst_7 = arith.constant dense<0.000000e+00> : vector<256xf32>
      %24 = vector.multi_reduction <add>, %23, %cst_7 [0] : vector<256x256xf32> to vector<256xf32>
      %25 = vector.shape_cast %24 : vector<256xf32> to vector<1x256xf32>
      %26 = arith.truncf %25 : vector<1x256xf32> to vector<1x256xbf16>
      %27 = arith.extf %26 : vector<1x256xbf16> to vector<1x256xf32>
      %cst_8 = arith.constant 0.000000e+00 : f32
      %28 = vector.broadcast %cst_8 : f32 to vector<1x256xf32>
      %c0_i32_9 = arith.constant 0 : i32
      %c64_i32 = arith.constant 64 : i32
      %29 = arith.muli %c0_i32_9, %c64_i32 : i32
      %30 = vector.broadcast %29 : i32 to vector<64x1xi32>
      %31 = arith.addi %1, %30 : vector<64x1xi32>
      %32 = vector.broadcast %16 : vector<1x256xi32> to vector<64x256xi32>
      %33 = vector.broadcast %31 : vector<64x1xi32> to vector<64x256xi32>
      %34 = arith.cmpi eq, %32, %33 : vector<64x256xi32>
      %c0_i32_10 = arith.constant 0 : i32
      %35 = vector.broadcast %c0_i32_10 : i32 to vector<64x1xi32>
      %36 = arith.cmpi sgt, %31, %35 : vector<64x1xi32>
      %37 = vector.broadcast %36 : vector<64x1xi1> to vector<64x256xi1>
      %38 = arith.andi %34, %37 : vector<64x256xi1>
      %39 = arith.extui %38 : vector<64x256xi1> to vector<64x256xi32>
      %40 = arith.sitofp %39 : vector<64x256xi32> to vector<64x256xf32>
      %41 = arith.truncf %40 : vector<64x256xf32> to vector<64x256xbf16>
      %cst_11 = arith.constant dense<0.000000e+00> : vector<64x256xf32>
      %42 = tpu.matmul %41, %22, %cst_11 {dimension_numbers = #tpu.dot_dimension_numbers<[1], [0], [0], [1], [0, 0, 1, 1], [], []>} : vector<64x256xbf16>, vector<256x256xbf16>, vector<64x256xf32> -> vector<64x256xf32>
      %cst_12 = arith.constant dense<0.000000e+00> : vector<64xf32>
      %43 = vector.multi_reduction <add>, %42, %cst_12 [1] : vector<64x256xf32> to vector<64xf32>
      %44 = vector.shape_cast %43 : vector<64xf32> to vector<64x1xf32>
      %45 = vector.broadcast %44 : vector<64x1xf32> to vector<64x256xf32>
      %46 = vector.broadcast %27 : vector<1x256xf32> to vector<64x256xf32>
      %47 = arith.addf %45, %46 : vector<64x256xf32>
      %48 = arith.subf %47, %42 : vector<64x256xf32>
      %cst_13 = arith.constant 1.000000e+00 : f32
      %49 = vector.broadcast %cst_13 : f32 to vector<64x256xf32>
      %50 = arith.maximumf %48, %49 : vector<64x256xf32>
      %51 = arith.divf %42, %50 : vector<64x256xf32>
      %cst_14 = arith.constant dense<0xFF800000> : vector<256xf32>
      %52 = vector.multi_reduction <maximumf>, %51, %cst_14 [0] : vector<64x256xf32> to vector<256xf32>
      %53 = vector.shape_cast %52 : vector<256xf32> to vector<1x256xf32>
      %54 = arith.maximumf %28, %53 : vector<1x256xf32>
      %c1_i32_15 = arith.constant 1 : i32
      %c64_i32_16 = arith.constant 64 : i32
      %55 = arith.muli %c1_i32_15, %c64_i32_16 : i32
      %56 = vector.broadcast %55 : i32 to vector<64x1xi32>
      %57 = arith.addi %1, %56 : vector<64x1xi32>
      %58 = vector.broadcast %16 : vector<1x256xi32> to vector<64x256xi32>
      %59 = vector.broadcast %57 : vector<64x1xi32> to vector<64x256xi32>
      %60 = arith.cmpi eq, %58, %59 : vector<64x256xi32>
      %c0_i32_17 = arith.constant 0 : i32
      %61 = vector.broadcast %c0_i32_17 : i32 to vector<64x1xi32>
      %62 = arith.cmpi sgt, %57, %61 : vector<64x1xi32>
      %63 = vector.broadcast %62 : vector<64x1xi1> to vector<64x256xi1>
      %64 = arith.andi %60, %63 : vector<64x256xi1>
      %65 = arith.extui %64 : vector<64x256xi1> to vector<64x256xi32>
      %66 = arith.sitofp %65 : vector<64x256xi32> to vector<64x256xf32>
      %67 = arith.truncf %66 : vector<64x256xf32> to vector<64x256xbf16>
      %cst_18 = arith.constant dense<0.000000e+00> : vector<64x256xf32>
      %68 = tpu.matmul %67, %22, %cst_18 {dimension_numbers = #tpu.dot_dimension_numbers<[1], [0], [0], [1], [0, 0, 1, 1], [], []>} : vector<64x256xbf16>, vector<256x256xbf16>, vector<64x256xf32> -> vector<64x256xf32>
      %cst_19 = arith.constant dense<0.000000e+00> : vector<64xf32>
      %69 = vector.multi_reduction <add>, %68, %cst_19 [1] : vector<64x256xf32> to vector<64xf32>
      %70 = vector.shape_cast %69 : vector<64xf32> to vector<64x1xf32>
      %71 = vector.broadcast %70 : vector<64x1xf32> to vector<64x256xf32>
      %72 = vector.broadcast %27 : vector<1x256xf32> to vector<64x256xf32>
      %73 = arith.addf %71, %72 : vector<64x256xf32>
      %74 = arith.subf %73, %68 : vector<64x256xf32>
      %cst_20 = arith.constant 1.000000e+00 : f32
      %75 = vector.broadcast %cst_20 : f32 to vector<64x256xf32>
      %76 = arith.maximumf %74, %75 : vector<64x256xf32>
      %77 = arith.divf %68, %76 : vector<64x256xf32>
      %cst_21 = arith.constant dense<0xFF800000> : vector<256xf32>
      %78 = vector.multi_reduction <maximumf>, %77, %cst_21 [0] : vector<64x256xf32> to vector<256xf32>
      %79 = vector.shape_cast %78 : vector<256xf32> to vector<1x256xf32>
      %80 = arith.maximumf %54, %79 : vector<1x256xf32>
      %c2_i32 = arith.constant 2 : i32
      %c64_i32_22 = arith.constant 64 : i32
      %81 = arith.muli %c2_i32, %c64_i32_22 : i32
      %82 = vector.broadcast %81 : i32 to vector<64x1xi32>
      %83 = arith.addi %1, %82 : vector<64x1xi32>
      %84 = vector.broadcast %16 : vector<1x256xi32> to vector<64x256xi32>
      %85 = vector.broadcast %83 : vector<64x1xi32> to vector<64x256xi32>
      %86 = arith.cmpi eq, %84, %85 : vector<64x256xi32>
      %c0_i32_23 = arith.constant 0 : i32
      %87 = vector.broadcast %c0_i32_23 : i32 to vector<64x1xi32>
      %88 = arith.cmpi sgt, %83, %87 : vector<64x1xi32>
      %89 = vector.broadcast %88 : vector<64x1xi1> to vector<64x256xi1>
      %90 = arith.andi %86, %89 : vector<64x256xi1>
      %91 = arith.extui %90 : vector<64x256xi1> to vector<64x256xi32>
      %92 = arith.sitofp %91 : vector<64x256xi32> to vector<64x256xf32>
      %93 = arith.truncf %92 : vector<64x256xf32> to vector<64x256xbf16>
      %cst_24 = arith.constant dense<0.000000e+00> : vector<64x256xf32>
      %94 = tpu.matmul %93, %22, %cst_24 {dimension_numbers = #tpu.dot_dimension_numbers<[1], [0], [0], [1], [0, 0, 1, 1], [], []>} : vector<64x256xbf16>, vector<256x256xbf16>, vector<64x256xf32> -> vector<64x256xf32>
      %cst_25 = arith.constant dense<0.000000e+00> : vector<64xf32>
      %95 = vector.multi_reduction <add>, %94, %cst_25 [1] : vector<64x256xf32> to vector<64xf32>
      %96 = vector.shape_cast %95 : vector<64xf32> to vector<64x1xf32>
      %97 = vector.broadcast %96 : vector<64x1xf32> to vector<64x256xf32>
      %98 = vector.broadcast %27 : vector<1x256xf32> to vector<64x256xf32>
      %99 = arith.addf %97, %98 : vector<64x256xf32>
      %100 = arith.subf %99, %94 : vector<64x256xf32>
      %cst_26 = arith.constant 1.000000e+00 : f32
      %101 = vector.broadcast %cst_26 : f32 to vector<64x256xf32>
      %102 = arith.maximumf %100, %101 : vector<64x256xf32>
      %103 = arith.divf %94, %102 : vector<64x256xf32>
      %cst_27 = arith.constant dense<0xFF800000> : vector<256xf32>
      %104 = vector.multi_reduction <maximumf>, %103, %cst_27 [0] : vector<64x256xf32> to vector<256xf32>
      %105 = vector.shape_cast %104 : vector<256xf32> to vector<1x256xf32>
      %106 = arith.maximumf %80, %105 : vector<1x256xf32>
      %c3_i32 = arith.constant 3 : i32
      %c64_i32_28 = arith.constant 64 : i32
      %107 = arith.muli %c3_i32, %c64_i32_28 : i32
      %108 = vector.broadcast %107 : i32 to vector<64x1xi32>
      %109 = arith.addi %1, %108 : vector<64x1xi32>
      %110 = vector.broadcast %16 : vector<1x256xi32> to vector<64x256xi32>
      %111 = vector.broadcast %109 : vector<64x1xi32> to vector<64x256xi32>
      %112 = arith.cmpi eq, %110, %111 : vector<64x256xi32>
      %c0_i32_29 = arith.constant 0 : i32
      %113 = vector.broadcast %c0_i32_29 : i32 to vector<64x1xi32>
      %114 = arith.cmpi sgt, %109, %113 : vector<64x1xi32>
      %115 = vector.broadcast %114 : vector<64x1xi1> to vector<64x256xi1>
      %116 = arith.andi %112, %115 : vector<64x256xi1>
      %117 = arith.extui %116 : vector<64x256xi1> to vector<64x256xi32>
      %118 = arith.sitofp %117 : vector<64x256xi32> to vector<64x256xf32>
      %119 = arith.truncf %118 : vector<64x256xf32> to vector<64x256xbf16>
      %cst_30 = arith.constant dense<0.000000e+00> : vector<64x256xf32>
      %120 = tpu.matmul %119, %22, %cst_30 {dimension_numbers = #tpu.dot_dimension_numbers<[1], [0], [0], [1], [0, 0, 1, 1], [], []>} : vector<64x256xbf16>, vector<256x256xbf16>, vector<64x256xf32> -> vector<64x256xf32>
      %cst_31 = arith.constant dense<0.000000e+00> : vector<64xf32>
      %121 = vector.multi_reduction <add>, %120, %cst_31 [1] : vector<64x256xf32> to vector<64xf32>
      %122 = vector.shape_cast %121 : vector<64xf32> to vector<64x1xf32>
      %123 = vector.broadcast %122 : vector<64x1xf32> to vector<64x256xf32>
      %124 = vector.broadcast %27 : vector<1x256xf32> to vector<64x256xf32>
      %125 = arith.addf %123, %124 : vector<64x256xf32>
      %126 = arith.subf %125, %120 : vector<64x256xf32>
      %cst_32 = arith.constant 1.000000e+00 : f32
      %127 = vector.broadcast %cst_32 : f32 to vector<64x256xf32>
      %128 = arith.maximumf %126, %127 : vector<64x256xf32>
      %129 = arith.divf %120, %128 : vector<64x256xf32>
      %cst_33 = arith.constant dense<0xFF800000> : vector<256xf32>
      %130 = vector.multi_reduction <maximumf>, %129, %cst_33 [0] : vector<64x256xf32> to vector<256xf32>
      %131 = vector.shape_cast %130 : vector<256xf32> to vector<1x256xf32>
      %132 = arith.maximumf %106, %131 : vector<1x256xf32>
      %c4_i32 = arith.constant 4 : i32
      %cst_34 = arith.constant 0.000000e+00 : f32
      %133 = vector.broadcast %cst_34 : f32 to vector<1x256xf32>
      %134 = arith.cmpf ogt, %27, %133 : vector<1x256xf32>
      %c0_i32_35 = arith.constant 0 : i32
      %135 = vector.broadcast %c0_i32_35 : i32 to vector<1x256xi32>
      %136 = arith.cmpi sgt, %0, %135 : vector<1x256xi32>
      %137 = arith.andi %134, %136 : vector<1x256xi1>
      %138 = arith.extui %137 : vector<1x256xi1> to vector<1x256xi32>
      %139 = arith.sitofp %138 : vector<1x256xi32> to vector<1x256xf32>
      %cst_36 = arith.constant 1.000000e+00 : f32
      %140 = vector.broadcast %cst_36 : f32 to vector<1x256xf32>
      %141 = arith.subf %140, %132 : vector<1x256xf32>
      %142 = arith.mulf %139, %141 : vector<1x256xf32>
      %cst_37 = arith.constant dense<0.000000e+00> : vector<1xf32>
      %143 = vector.multi_reduction <add>, %142, %cst_37 [1] : vector<1x256xf32> to vector<1xf32>
      %144 = vector.shape_cast %143 : vector<1xf32> to vector<1x1xf32>
      %cst_38 = arith.constant dense<0.000000e+00> : vector<1xf32>
      %145 = vector.multi_reduction <add>, %139, %cst_38 [1] : vector<1x256xf32> to vector<1xf32>
      %146 = vector.shape_cast %145 : vector<1xf32> to vector<1x1xf32>
      %147 = arith.sitofp %9 : vector<256x1xi32> to vector<256x1xf32>
      %148 = vector.shape_cast %147 : vector<256x1xf32> to vector<1x256x1xf32>
      %cst_39 = arith.constant dense<0.000000e+00> : vector<1xf32>
      %149 = vector.multi_reduction <add>, %148, %cst_39 [1, 2] : vector<1x256x1xf32> to vector<1xf32>
      %150 = vector.shape_cast %149 : vector<1xf32> to vector<1x1x1xf32>
      %151 = vector.extract %150[0, 0, 0] : f32 from vector<1x1x1xf32>
      %152 = vector.broadcast %151 : f32 to vector<1x1xf32>
      %153 = arith.sitofp %12 : vector<1x256xi32> to vector<1x256xf32>
      %154 = vector.shape_cast %153 : vector<1x256xf32> to vector<1x1x256xf32>
      %cst_40 = arith.constant dense<0.000000e+00> : vector<1xf32>
      %155 = vector.multi_reduction <add>, %154, %cst_40 [1, 2] : vector<1x1x256xf32> to vector<1xf32>
      %156 = vector.shape_cast %155 : vector<1xf32> to vector<1x1x1xf32>
      %157 = vector.extract %156[0, 0, 0] : f32 from vector<1x1x1xf32>
      %158 = vector.broadcast %157 : f32 to vector<1x1xf32>
      %159 = arith.addf %152, %158 : vector<1x1xf32>
      %cst_41 = arith.constant 9.99999995E+11 : f32
      %160 = vector.broadcast %cst_41 : f32 to vector<1x1xf32>
      %161 = arith.divf %159, %160 : vector<1x1xf32>
      %cst_42 = arith.constant 0.000000e+00 : f32
      %162 = vector.broadcast %cst_42 : f32 to vector<1x1xf32>
      %163 = arith.cmpf ogt, %146, %162 : vector<1x1xf32>
      %164 = arith.addf %144, %161 : vector<1x1xf32>
      %cst_43 = arith.constant 0.000000e+00 : f32
      %165 = vector.broadcast %cst_43 : f32 to vector<1x1xf32>
      %166 = arith.select %163, %164, %165 : vector<1x1xi1>, vector<1x1xf32>
      %167 = vector.broadcast %arg4 : i32 to vector<8x128xi32>
      %168 = arith.cmpi eq, %2, %167 : vector<8x128xi32>
      %169 = vector.shape_cast %166 : vector<1x1xf32> to vector<1x1xf32>
      %170 = vector.broadcast %169 : vector<1x1xf32> to vector<8x128xf32>
      %171 = arith.select %168, %170, %arg5 : vector<8x128xi1>, vector<8x128xf32>
      scf.yield %171 : vector<8x128xf32>
    }
    %c8_i32_0 = arith.constant 8 : i32
    %c0 = arith.constant 0 : index
    %c0_1 = arith.constant 0 : index
    %6 = vector.load %arg3[%c0, %c0_1] : memref<8x128xf32, #tpu.memory_space<vmem>>, vector<8x128xf32>
    tpu.vector_store %arg3[%c0, %c0_1], %5 {strides = array<i32>} : memref<8x128xf32, #tpu.memory_space<vmem>>, vector<8x128xf32>,
    return
  }
  func.func @transform_0(%arg0: i32) -> (i32, i32, i32) {
    %c0_i32 = arith.constant 0 : i32
    %c0_i32_0 = arith.constant 0 : i32
    %c0_i32_1 = arith.constant 0 : i32
    return %arg0, %c0_i32, %c0_i32_0 : i32, i32, i32
  }
  func.func @transform_1(%arg0: i32) -> (i32, i32, i32) {
    %c0_i32 = arith.constant 0 : i32
    %c0_i32_0 = arith.constant 0 : i32
    %c0_i32_1 = arith.constant 0 : i32
    return %arg0, %c0_i32, %c0_i32_0 : i32, i32, i32
  }
  func.func @transform_2(%arg0: i32) -> (i32, i32) {
    %c0_i32 = arith.constant 0 : i32
    %c0_i32_0 = arith.constant 0 : i32
    return %arg0, %c0_i32 : i32, i32
  }
}

</mosaic_0001>

<llo_original>
// kernel: tpu_custom_call.1
$region0: #{tpu_custom_call.1}
  #allocation0 [shape = 'u32[]', space=smem, size = 0x4, offset = 0x4, fixed_abs, tag = 'smem constant byte address 0x4 - core index']
  #allocation1 [shape = 'u32[72,128]{1,0:T(1,128)}', space=vmem, size = 0x9000, scoped, tag = 'internal scratch']
  %s0 = inlined_call_operand.vmem [shape: s32[16,256,1], index: 0, kind: input, shape index: {}]
  %s1 = inlined_call_operand.vmem [shape: s32[16,1,256], index: 1, kind: input, shape index: {}]
  %s2 = inlined_call_operand.hbm [shape: f32[16,128], index: 2, kind: output, shape index: {}]
  %s3 = sld [smem:[#allocation0]]
  $region48: #{tpu_custom_call.1} parent=0
    _
  %s5 = ssub.s32 1, %s3
  %s6 = scalar_select 0, %s5, %s3
  $region1: #{tpu_custom_call.1} parent=0
    #allocation2 [shape = 'u8[8192]{0}', space=vmem, size = 0x2000, scoped, tag = 'output window, operand 0']
    #allocation3 [shape = 's32[2]{0}', space=sflag, size = 0x8, scoped, tag = 'scoped memory for tpu_custom_call.1']
    %7 = vsyncpa [#allocation3], 0
    %s8 = scalar_lea.sflag [#allocation3], 1
    %9 = vsyncpa %s8, 0
    loop: start=0, step=1, limit=4
    $region2: #{tpu_custom_call.1} parent=1 // loop_pre_header
      _
    $region3: #{tpu_custom_call.1} parent=1 // loop_header
      %s11 = sphi 0, %s15
      %p12 = scmp.ge.s32.totalorder %s11, 4
      %s21 = sphi 0, %s23
      %s24 = sphi 0, %s21
      %s25 = sphi 0, %s24
      %s41 = sphi 0, %s25
      %s47 = sphi 0, %s49
      %s50 = sphi 0, %s47
      %s51 = sphi 0, %s50
      %s67 = sphi 0, %s51
      %s73 = sphi 0, %s75
      %s76 = sphi 0, %s73
      %s77 = sphi 0, %s76
      %s93 = sphi 0, %s77
    $region4: #{tpu_custom_call.1} parent=1 // loop_header_branch
      %14 = sbr.rel (%p12) target = $region8
    $region5: #{tpu_custom_call.1} parent=1 // loop_body
      %s16 = ssub.s32 %s11, 1
      %s17 = ssub.s32 %s11, 2
      %s18 = sadd.s32 %s11, 1
      %s19 = ssub.s32 %s11, %s18
      %p20 = scmp.eq.s32.totalorder %s19, 0
      %s22 = sadd.s32 %s21, 1
      %s23 = scalar_select %p20, %s21, %s22
      %p26 = pneg %p20
      %p27 = scmp.eq.s32.totalorder %s11, 1
      %p28 = por %p26, %p27
      %p29 = scmp.ne.s32.totalorder %s21, %s24
      %p30 = scmp.eq.s32.totalorder %s11, 0
      %p31 = por %p29, %p30
      %p32 = scmp.ne.s32.totalorder %s21, %s24
      %p33 = scmp.eq.s32.totalorder %s16, 1
      %p34 = por %p32, %p33
      %p35 = scmp.ne.s32.totalorder %s24, %s25
      %p36 = scmp.eq.s32.totalorder %s16, 0
      %p37 = por %p35, %p36
      %p38 = scmp.ne.s32.totalorder %s24, %s25
      %p39 = scmp.eq.s32.totalorder %s17, 1
      %p40 = por %p38, %p39
      %p42 = scmp.ne.s32.totalorder %s25, %s41
      %p43 = scmp.eq.s32.totalorder %s17, 0
      %p44 = por %p42, %p43
      %s45 = ssub.s32 %s11, %s18
      %p46 = scmp.eq.s32.totalorder %s45, 0
      %s48 = sadd.s32 %s47, 1
      %s49 = scalar_select %p46, %s47, %s48
      %p52 = pneg %p46
      %p53 = scmp.eq.s32.totalorder %s11, 1
      %p54 = por %p52, %p53
      %p55 = scmp.ne.s32.totalorder %s47, %s50
      %p56 = scmp.eq.s32.totalorder %s11, 0
      %p57 = por %p55, %p56
      %p58 = scmp.ne.s32.totalorder %s47, %s50
      %p59 = scmp.eq.s32.totalorder %s16, 1
      %p60 = por %p58, %p59
      %p61 = scmp.ne.s32.totalorder %s50, %s51
      %p62 = scmp.eq.s32.totalorder %s16, 0
      %p63 = por %p61, %p62
      %p64 = scmp.ne.s32.totalorder %s50, %s51
      %p65 = scmp.eq.s32.totalorder %s17, 1
      %p66 = por %p64, %p65
      %p68 = scmp.ne.s32.totalorder %s51, %s67
      %p69 = scmp.eq.s32.totalorder %s17, 0
      %p70 = por %p68, %p69
      %s71 = ssub.s32 %s11, %s18
      %p72 = scmp.eq.s32.totalorder %s71, 0
      %s74 = sadd.s32 %s73, 1
      %s75 = scalar_select %p72, %s73, %s74
      %p78 = pneg %p72
      %p79 = scmp.eq.s32.totalorder %s11, 1
      %p80 = por %p78, %p79
      %p81 = scmp.ne.s32.totalorder %s73, %s76
      %p82 = scmp.eq.s32.totalorder %s11, 0
      %p83 = por %p81, %p82
      %p84 = scmp.ne.s32.totalorder %s73, %s76
      %p85 = scmp.eq.s32.totalorder %s16, 1
      %p86 = por %p84, %p85
      %p87 = scmp.ne.s32.totalorder %s76, %s77
      %p88 = scmp.eq.s32.totalorder %s16, 0
      %p89 = por %p87, %p88
      %p90 = scmp.ne.s32.totalorder %s76, %s77
      %p91 = scmp.eq.s32.totalorder %s17, 1
      %p92 = por %p90, %p91
      %p94 = scmp.ne.s32.totalorder %s77, %s93
      %p95 = scmp.eq.s32.totalorder %s17, 0
      %p96 = por %p94, %p95
      %p97 = scmp.le.s32.totalorder 1, %s11
      %p98 = scmp.lt.s32.totalorder %s11, 3
      %p99 = pnand %p97, %p98
      %p100 = pneg %p99
      // Predicated region
      $region9: #{tpu_custom_call.1} parent=5 // pred_check
        _
      $region10: #{tpu_custom_call.1} parent=5 // pred_check_branch
        %102 = sbr.rel (%p99) target = $region12
      $region11: #{tpu_custom_call.1} parent=5 // pred_region
        %s103 = ssub.s32 %s11, 1
      $region12: #{tpu_custom_call.1} parent=5 // pred_fallthru
        _
      %p104 = scmp.lt.s32.totalorder %s11, 2
      // Predicated region
      $region13: #{tpu_custom_call.1} parent=5 // pred_check
        %p105 = pneg %p104
      $region14: #{tpu_custom_call.1} parent=5 // pred_check_branch
        %107 = sbr.rel (%p105) target = $region16
      $region15: #{tpu_custom_call.1} parent=5 // pred_region
        // Predicated region
        $region17: #{tpu_custom_call.1} parent=15 // pred_check
          %p108 = pneg %p31
        $region18: #{tpu_custom_call.1} parent=15 // pred_check_branch
          %110 = sbr.rel (%p108) target = $region20
        $region19: #{tpu_custom_call.1} parent=15 // pred_region
          %s111 = smul.u32 8, %s11
          %p112 = scmp.lt.s32.totalorder %s111, 15
          %s113 = scalar_select %p112, %s111, 15
          %s114 = smul.addr %s113, 32
          %s115 = smul.addr %s114, 8
          %s116 = scalar_lea.vmem %s0, %s115
          %s117 = smul.u32 8, %s11
        $region20: #{tpu_custom_call.1} parent=15 // pred_fallthru
          _
        // Predicated region
        $region21: #{tpu_custom_call.1} parent=15 // pred_check
          %p118 = pneg %p57
        $region22: #{tpu_custom_call.1} parent=15 // pred_check_branch
          %120 = sbr.rel (%p118) target = $region24
        $region23: #{tpu_custom_call.1} parent=15 // pred_region
          %s121 = smul.u32 8, %s11
          %p122 = scmp.lt.s32.totalorder %s121, 15
          %s123 = scalar_select %p122, %s121, 15
          %s124 = smul.addr %s123, 2
          %s125 = scalar_lea.vmem %s1, %s124
          %s126 = smul.u32 8, %s11
        $region24: #{tpu_custom_call.1} parent=15 // pred_fallthru
          _
      $region16: #{tpu_custom_call.1} parent=5 // pred_fallthru
        _
      %p127 = scmp.le.s32.totalorder 1, %s11
      %p128 = scmp.lt.s32.totalorder %s11, 3
      %p129 = pnand %p127, %p128
      %p130 = pneg %p129
      // Predicated region
      $region25: #{tpu_custom_call.1} parent=5 // pred_check
        _
      $region26: #{tpu_custom_call.1} parent=5 // pred_check_branch
        %132 = sbr.rel (%p129) target = $region28
      $region27: #{tpu_custom_call.1} parent=5 // pred_region
        %s133 = ssub.s32 %s11, 1
        %s134 = smul.u32 8, %s16
        %p135 = scmp.lt.s32.totalorder %s134, 15
        %s136 = scalar_select %p135, %s134, 15
        %s137 = smul.addr %s136, 32
        %s138 = smul.addr %s137, 8
        %s139 = scalar_lea.vmem %s0, %s138
        %p140 = pneg %p37
        %p141 = pneg %p34
        %s142 = smul.u32 8, %s16
        %p143 = scmp.lt.s32.totalorder %s142, 15
        %s144 = scalar_select %p143, %s142, 15
        %s145 = smul.addr %s144, 2
        %s146 = scalar_lea.vmem %s1, %s145
        %p147 = pneg %p63
        %p148 = pneg %p60
        %p149 = pneg %p89
        %p150 = pneg %p86
        %s151 = sand.u32 %s76, 1
        %s152 = scalar_lea.sflag [#allocation3], %s151
        %s153 = sand.u32 %s76, 1
        %s154 = smul.addr %s153, 8
        %s155 = scalar_lea.vmem [#allocation2], %s154
        %s156 = smul.u32 8, %s16
        %p157 = scmp.lt.s32.totalorder %s156, 15
        %s158 = scalar_select %p157, %s156, 15
        %s159 = smul.addr %s158, 32
        %s160 = smul.addr %s159, 8
        %s161 = scalar_lea.vmem %s0, %s160
        %s162 = smul.u32 8, %s16
        %s163 = smul.u32 8, %s16
        %p164 = scmp.lt.s32.totalorder %s163, 15
        %s165 = scalar_select %p164, %s163, 15
        %s166 = smul.addr %s165, 2
        %s167 = scalar_lea.vmem %s1, %s166
        %s168 = smul.u32 8, %s16
        %v169 = vlaneseq
        %v170 = vand.u32 %v169, 127
        %v171 = vadd.s32 %v170, 128
        %v172 = vlaneseq
        %v173 = vshrl.u32 %v172, 7
        %v174 = vadd.s32 %v173, 8
        %v175 = vadd.s32 %v173, 16
        %v176 = vadd.s32 %v173, 24
        %v177 = vadd.s32 %v173, 32
        %v178 = vadd.s32 %v173, 40
        %v179 = vadd.s32 %v173, 48
        %v180 = vadd.s32 %v173, 56
        loop: start=0, step=1, limit=8
        $region29: #{tpu_custom_call.1} parent=27 // loop_pre_header
          _
        $region30: #{tpu_custom_call.1} parent=27 // loop_header
          %s182 = sphi 0, %s186
          %p183 = scmp.ge.s32.totalorder %s182, 8
          %v187 = vphi 0.0, %v3113
        $region31: #{tpu_custom_call.1} parent=27 // loop_header_branch
          %185 = sbr.rel (%p183) target = $region35
        $region32: #{tpu_custom_call.1} parent=27 // loop_body
          %s188 = smul.u32 %s182, 256
          %s189 = scalar_lea.vmem %s161, %s188
          %v190 = vld [vmem:[%s189] sm:$0xff]
          %v191 = vld [vmem:[%s189 + $0x8] sm:$0xff]
          %v192 = vld [vmem:[%s189 + $0x10] sm:$0xff]
          %v193 = vld [vmem:[%s189 + $0x18] sm:$0xff]
          %v194 = vld [vmem:[%s189 + $0x20] sm:$0xff]
          %v195 = vld [vmem:[%s189 + $0x28] sm:$0xff]
          %v196 = vld [vmem:[%s189 + $0x30] sm:$0xff]
          %v197 = vld [vmem:[%s189 + $0x38] sm:$0xff]
          %v198 = vld [vmem:[%s189 + $0x40] sm:$0xff]
          %v199 = vld [vmem:[%s189 + $0x48] sm:$0xff]
          %v200 = vld [vmem:[%s189 + $0x50] sm:$0xff]
          %v201 = vld [vmem:[%s189 + $0x58] sm:$0xff]
          %v202 = vld [vmem:[%s189 + $0x60] sm:$0xff]
          %v203 = vld [vmem:[%s189 + $0x68] sm:$0xff]
          %v204 = vld [vmem:[%s189 + $0x70] sm:$0xff]
          %v205 = vld [vmem:[%s189 + $0x78] sm:$0xff]
          %v206 = vld [vmem:[%s189 + $0x80] sm:$0xff]
          %v207 = vld [vmem:[%s189 + $0x88] sm:$0xff]
          %v208 = vld [vmem:[%s189 + $0x90] sm:$0xff]
          %v209 = vld [vmem:[%s189 + $0x98] sm:$0xff]
          %v210 = vld [vmem:[%s189 + $0xa0] sm:$0xff]
          %v211 = vld [vmem:[%s189 + $0xa8] sm:$0xff]
          %v212 = vld [vmem:[%s189 + $0xb0] sm:$0xff]
          %v213 = vld [vmem:[%s189 + $0xb8] sm:$0xff]
          %v214 = vld [vmem:[%s189 + $0xc0] sm:$0xff]
          %v215 = vld [vmem:[%s189 + $0xc8] sm:$0xff]
          %v216 = vld [vmem:[%s189 + $0xd0] sm:$0xff]
          %v217 = vld [vmem:[%s189 + $0xd8] sm:$0xff]
          %v218 = vld [vmem:[%s189 + $0xe0] sm:$0xff]
          %v219 = vld [vmem:[%s189 + $0xe8] sm:$0xff]
          %v220 = vld [vmem:[%s189 + $0xf0] sm:$0xff]
          %v221 = vld [vmem:[%s189 + $0xf8] sm:$0xff]
          %s222 = smul.u32 %s182, 2
          %s223 = scalar_lea.vmem %s167, %s222
          %v224 = vld [vmem:[%s223] sm:$0x3]
          %v225 = vand.u32 %v190, 255
          %v226 = vand.u32 %v191, 255
          %v227 = vand.u32 %v192, 255
          %v228 = vand.u32 %v193, 255
          %v229 = vand.u32 %v194, 255
          %v230 = vand.u32 %v195, 255
          %v231 = vand.u32 %v196, 255
          %v232 = vand.u32 %v197, 255
          %v233 = vand.u32 %v198, 255
          %v234 = vand.u32 %v199, 255
          %v235 = vand.u32 %v200, 255
          %v236 = vand.u32 %v201, 255
          %v237 = vand.u32 %v202, 255
          %v238 = vand.u32 %v203, 255
          %v239 = vand.u32 %v204, 255
          %v240 = vand.u32 %v205, 255
          %v241 = vand.u32 %v206, 255
          %v242 = vand.u32 %v207, 255
          %v243 = vand.u32 %v208, 255
          %v244 = vand.u32 %v209, 255
          %v245 = vand.u32 %v210, 255
          %v246 = vand.u32 %v211, 255
          %v247 = vand.u32 %v212, 255
          %v248 = vand.u32 %v213, 255
          %v249 = vand.u32 %v214, 255
          %v250 = vand.u32 %v215, 255
          %v251 = vand.u32 %v216, 255
          %v252 = vand.u32 %v217, 255
          %v253 = vand.u32 %v218, 255
          %v254 = vand.u32 %v219, 255
          %v255 = vand.u32 %v220, 255
          %v256 = vand.u32 %v221, 255
          %v257 = vand.u32 %v224, 255
          %258 = vset.pattern.permute.xlu0 0
          %259 = vperm.xlu0 %258, %v225
          %v260 = vpop.permute.xlu0 %259
          %261 = vset.pattern.permute.xlu0 0
          %262 = vperm.xlu0 %261, %v226
          %v263 = vpop.permute.xlu0 %262
          %264 = vset.pattern.permute.xlu0 0
          %265 = vperm.xlu0 %264, %v227
          %v266 = vpop.permute.xlu0 %265
          %267 = vset.pattern.permute.xlu0 0
          %268 = vperm.xlu0 %267, %v228
          %v269 = vpop.permute.xlu0 %268
          %270 = vset.pattern.permute.xlu0 0
          %271 = vperm.xlu0 %270, %v229
          %v272 = vpop.permute.xlu0 %271
          %273 = vset.pattern.permute.xlu0 0
          %274 = vperm.xlu0 %273, %v230
          %v275 = vpop.permute.xlu0 %274
          %276 = vset.pattern.permute.xlu0 0
          %277 = vperm.xlu0 %276, %v231
          %v278 = vpop.permute.xlu0 %277
          %279 = vset.pattern.permute.xlu0 0
          %280 = vperm.xlu0 %279, %v232
          %v281 = vpop.permute.xlu0 %280
          %282 = vset.pattern.permute.xlu0 0
          %283 = vperm.xlu0 %282, %v233
          %v284 = vpop.permute.xlu0 %283
          %285 = vset.pattern.permute.xlu0 0
          %286 = vperm.xlu0 %285, %v234
          %v287 = vpop.permute.xlu0 %286
          %288 = vset.pattern.permute.xlu0 0
          %289 = vperm.xlu0 %288, %v235
          %v290 = vpop.permute.xlu0 %289
          %291 = vset.pattern.permute.xlu0 0
          %292 = vperm.xlu0 %291, %v236
          %v293 = vpop.permute.xlu0 %292
          %294 = vset.pattern.permute.xlu0 0
          %295 = vperm.xlu0 %294, %v237
          %v296 = vpop.permute.xlu0 %295
          %297 = vset.pattern.permute.xlu0 0
          %298 = vperm.xlu0 %297, %v238
          %v299 = vpop.permute.xlu0 %298
          %300 = vset.pattern.permute.xlu0 0
          %301 = vperm.xlu0 %300, %v239
          %v302 = vpop.permute.xlu0 %301
          %303 = vset.pattern.permute.xlu0 0
          %304 = vperm.xlu0 %303, %v240
          %v305 = vpop.permute.xlu0 %304
          %306 = vset.pattern.permute.xlu0 0
          %307 = vperm.xlu0 %306, %v241
          %v308 = vpop.permute.xlu0 %307
          %309 = vset.pattern.permute.xlu0 0
          %310 = vperm.xlu0 %309, %v242
          %v311 = vpop.permute.xlu0 %310
          %312 = vset.pattern.permute.xlu0 0
          %313 = vperm.xlu0 %312, %v243
          %v314 = vpop.permute.xlu0 %313
          %315 = vset.pattern.permute.xlu0 0
          %316 = vperm.xlu0 %315, %v244
          %v317 = vpop.permute.xlu0 %316
          %318 = vset.pattern.permute.xlu0 0
          %319 = vperm.xlu0 %318, %v245
          %v320 = vpop.permute.xlu0 %319
          %321 = vset.pattern.permute.xlu0 0
          %322 = vperm.xlu0 %321, %v246
          %v323 = vpop.permute.xlu0 %322
          %324 = vset.pattern.permute.xlu0 0
          %325 = vperm.xlu0 %324, %v247
          %v326 = vpop.permute.xlu0 %325
          %327 = vset.pattern.permute.xlu0 0
          %328 = vperm.xlu0 %327, %v248
          %v329 = vpop.permute.xlu0 %328
          %330 = vset.pattern.permute.xlu0 0
          %331 = vperm.xlu0 %330, %v249
          %v332 = vpop.permute.xlu0 %331
          %333 = vset.pattern.permute.xlu0 0
          %334 = vperm.xlu0 %333, %v250
          %v335 = vpop.permute.xlu0 %334
          %336 = vset.pattern.permute.xlu0 0
          %337 = vperm.xlu0 %336, %v251
          %v338 = vpop.permute.xlu0 %337
          %339 = vset.pattern.permute.xlu0 0
          %340 = vperm.xlu0 %339, %v252
          %v341 = vpop.permute.xlu0 %340
          %342 = vset.pattern.permute.xlu0 0
          %343 = vperm.xlu0 %342, %v253
          %v344 = vpop.permute.xlu0 %343
          %345 = vset.pattern.permute.xlu0 0
          %346 = vperm.xlu0 %345, %v254
          %v347 = vpop.permute.xlu0 %346
          %348 = vset.pattern.permute.xlu0 0
          %349 = vperm.xlu0 %348, %v255
          %v350 = vpop.permute.xlu0 %349
          %351 = vset.pattern.permute.xlu0 0
          %352 = vperm.xlu0 %351, %v256
          %v353 = vpop.permute.xlu0 %352
          %vm354 = vcmp.eq.s32.totalorder %v260, %v170
          %vm355 = vcmp.eq.s32.totalorder %v260, %v171
          %vm356 = vcmp.eq.s32.totalorder %v263, %v170
          %vm357 = vcmp.eq.s32.totalorder %v263, %v171
          %vm358 = vcmp.eq.s32.totalorder %v266, %v170
          %vm359 = vcmp.eq.s32.totalorder %v266, %v171
          %vm360 = vcmp.eq.s32.totalorder %v269, %v170
          %vm361 = vcmp.eq.s32.totalorder %v269, %v171
          %vm362 = vcmp.eq.s32.totalorder %v272, %v170
          %vm363 = vcmp.eq.s32.totalorder %v272, %v171
          %vm364 = vcmp.eq.s32.totalorder %v275, %v170
          %vm365 = vcmp.eq.s32.totalorder %v275, %v171
          %vm366 = vcmp.eq.s32.totalorder %v278, %v170
          %vm367 = vcmp.eq.s32.totalorder %v278, %v171
          %vm368 = vcmp.eq.s32.totalorder %v281, %v170
          %vm369 = vcmp.eq.s32.totalorder %v281, %v171
          %vm370 = vcmp.eq.s32.totalorder %v284, %v170
          %vm371 = vcmp.eq.s32.totalorder %v284, %v171
          %vm372 = vcmp.eq.s32.totalorder %v287, %v170
          %vm373 = vcmp.eq.s32.totalorder %v287, %v171
          %vm374 = vcmp.eq.s32.totalorder %v290, %v170
          %vm375 = vcmp.eq.s32.totalorder %v290, %v171
          %vm376 = vcmp.eq.s32.totalorder %v293, %v170
          %vm377 = vcmp.eq.s32.totalorder %v293, %v171
          %vm378 = vcmp.eq.s32.totalorder %v296, %v170
          %vm379 = vcmp.eq.s32.totalorder %v296, %v171
          %vm380 = vcmp.eq.s32.totalorder %v299, %v170
          %vm381 = vcmp.eq.s32.totalorder %v299, %v171
          %vm382 = vcmp.eq.s32.totalorder %v302, %v170
          %vm383 = vcmp.eq.s32.totalorder %v302, %v171
          %vm384 = vcmp.eq.s32.totalorder %v305, %v170
          %vm385 = vcmp.eq.s32.totalorder %v305, %v171
          %vm386 = vcmp.eq.s32.totalorder %v308, %v170
          %vm387 = vcmp.eq.s32.totalorder %v308, %v171
          %vm388 = vcmp.eq.s32.totalorder %v311, %v170
          %vm389 = vcmp.eq.s32.totalorder %v311, %v171
          %vm390 = vcmp.eq.s32.totalorder %v314, %v170
          %vm391 = vcmp.eq.s32.totalorder %v314, %v171
          %vm392 = vcmp.eq.s32.totalorder %v317, %v170
          %vm393 = vcmp.eq.s32.totalorder %v317, %v171
          %vm394 = vcmp.eq.s32.totalorder %v320, %v170
          %vm395 = vcmp.eq.s32.totalorder %v320, %v171
          %vm396 = vcmp.eq.s32.totalorder %v323, %v170
          %vm397 = vcmp.eq.s32.totalorder %v323, %v171
          %vm398 = vcmp.eq.s32.totalorder %v326, %v170
          %vm399 = vcmp.eq.s32.totalorder %v326, %v171
          %vm400 = vcmp.eq.s32.totalorder %v329, %v170
          %vm401 = vcmp.eq.s32.totalorder %v329, %v171
          %vm402 = vcmp.eq.s32.totalorder %v332, %v170
          %vm403 = vcmp.eq.s32.totalorder %v332, %v171
          %vm404 = vcmp.eq.s32.totalorder %v335, %v170
          %vm405 = vcmp.eq.s32.totalorder %v335, %v171
          %vm406 = vcmp.eq.s32.totalorder %v338, %v170
          %vm407 = vcmp.eq.s32.totalorder %v338, %v171
          %vm408 = vcmp.eq.s32.totalorder %v341, %v170
          %vm409 = vcmp.eq.s32.totalorder %v341, %v171
          %vm410 = vcmp.eq.s32.totalorder %v344, %v170
          %vm411 = vcmp.eq.s32.totalorder %v344, %v171
          %vm412 = vcmp.eq.s32.totalorder %v347, %v170
          %vm413 = vcmp.eq.s32.totalorder %v347, %v171
          %vm414 = vcmp.eq.s32.totalorder %v350, %v170
          %vm415 = vcmp.eq.s32.totalorder %v350, %v171
          %vm416 = vcmp.eq.s32.totalorder %v353, %v170
          %vm417 = vcmp.eq.s32.totalorder %v353, %v171
          %v418 = vsel %vm354, 1, 0
          %v419 = vsel %vm355, 1, 0
          %v420 = vsel %vm356, 1, 0
          %v421 = vsel %vm357, 1, 0
          %v422 = vsel %vm358, 1, 0
          %v423 = vsel %vm359, 1, 0
          %v424 = vsel %vm360, 1, 0
          %v425 = vsel %vm361, 1, 0
          %v426 = vsel %vm362, 1, 0
          %v427 = vsel %vm363, 1, 0
          %v428 = vsel %vm364, 1, 0
          %v429 = vsel %vm365, 1, 0
          %v430 = vsel %vm366, 1, 0
          %v431 = vsel %vm367, 1, 0
          %v432 = vsel %vm368, 1, 0
          %v433 = vsel %vm369, 1, 0
          %v434 = vsel %vm370, 1, 0
          %v435 = vsel %vm371, 1, 0
          %v436 = vsel %vm372, 1, 0
          %v437 = vsel %vm373, 1, 0
          %v438 = vsel %vm374, 1, 0
          %v439 = vsel %vm375, 1, 0
          %v440 = vsel %vm376, 1, 0
          %v441 = vsel %vm377, 1, 0
          %v442 = vsel %vm378, 1, 0
          %v443 = vsel %vm379, 1, 0
          %v444 = vsel %vm380, 1, 0
          %v445 = vsel %vm381, 1, 0
          %v446 = vsel %vm382, 1, 0
          %v447 = vsel %vm383, 1, 0
          %v448 = vsel %vm384, 1, 0
          %v449 = vsel %vm385, 1, 0
          %v450 = vsel %vm386, 1, 0
          %v451 = vsel %vm387, 1, 0
          %v452 = vsel %vm388, 1, 0
          %v453 = vsel %vm389, 1, 0
          %v454 = vsel %vm390, 1, 0
          %v455 = vsel %vm391, 1, 0
          %v456 = vsel %vm392, 1, 0
          %v457 = vsel %vm393, 1, 0
          %v458 = vsel %vm394, 1, 0
          %v459 = vsel %vm395, 1, 0
          %v460 = vsel %vm396, 1, 0
          %v461 = vsel %vm397, 1, 0
          %v462 = vsel %vm398, 1, 0
          %v463 = vsel %vm399, 1, 0
          %v464 = vsel %vm400, 1, 0
          %v465 = vsel %vm401, 1, 0
          %v466 = vsel %vm402, 1, 0
          %v467 = vsel %vm403, 1, 0
          %v468 = vsel %vm404, 1, 0
          %v469 = vsel %vm405, 1, 0
          %v470 = vsel %vm406, 1, 0
          %v471 = vsel %vm407, 1, 0
          %v472 = vsel %vm408, 1, 0
          %v473 = vsel %vm409, 1, 0
          %v474 = vsel %vm410, 1, 0
          %v475 = vsel %vm411, 1, 0
          %v476 = vsel %vm412, 1, 0
          %v477 = vsel %vm413, 1, 0
          %v478 = vsel %vm414, 1, 0
          %v479 = vsel %vm415, 1, 0
          %v480 = vsel %vm416, 1, 0
          %v481 = vsel %vm417, 1, 0
          %v482 = vcvt.s32.f32 %v418
          %v483 = vcvt.s32.f32 %v419
          %v484 = vcvt.s32.f32 %v420
          %v485 = vcvt.s32.f32 %v421
          %v486 = vcvt.s32.f32 %v422
          %v487 = vcvt.s32.f32 %v423
          %v488 = vcvt.s32.f32 %v424
          %v489 = vcvt.s32.f32 %v425
          %v490 = vcvt.s32.f32 %v426
          %v491 = vcvt.s32.f32 %v427
          %v492 = vcvt.s32.f32 %v428
          %v493 = vcvt.s32.f32 %v429
          %v494 = vcvt.s32.f32 %v430
          %v495 = vcvt.s32.f32 %v431
          %v496 = vcvt.s32.f32 %v432
          %v497 = vcvt.s32.f32 %v433
          %v498 = vcvt.s32.f32 %v434
          %v499 = vcvt.s32.f32 %v435
          %v500 = vcvt.s32.f32 %v436
          %v501 = vcvt.s32.f32 %v437
          %v502 = vcvt.s32.f32 %v438
          %v503 = vcvt.s32.f32 %v439
          %v504 = vcvt.s32.f32 %v440
          %v505 = vcvt.s32.f32 %v441
          %v506 = vcvt.s32.f32 %v442
          %v507 = vcvt.s32.f32 %v443
          %v508 = vcvt.s32.f32 %v444
          %v509 = vcvt.s32.f32 %v445
          %v510 = vcvt.s32.f32 %v446
          %v511 = vcvt.s32.f32 %v447
          %v512 = vcvt.s32.f32 %v448
          %v513 = vcvt.s32.f32 %v449
          %v514 = vcvt.s32.f32 %v450
          %v515 = vcvt.s32.f32 %v451
          %v516 = vcvt.s32.f32 %v452
          %v517 = vcvt.s32.f32 %v453
          %v518 = vcvt.s32.f32 %v454
          %v519 = vcvt.s32.f32 %v455
          %v520 = vcvt.s32.f32 %v456
          %v521 = vcvt.s32.f32 %v457
          %v522 = vcvt.s32.f32 %v458
          %v523 = vcvt.s32.f32 %v459
          %v524 = vcvt.s32.f32 %v460
          %v525 = vcvt.s32.f32 %v461
          %v526 = vcvt.s32.f32 %v462
          %v527 = vcvt.s32.f32 %v463
          %v528 = vcvt.s32.f32 %v464
          %v529 = vcvt.s32.f32 %v465
          %v530 = vcvt.s32.f32 %v466
          %v531 = vcvt.s32.f32 %v467
          %v532 = vcvt.s32.f32 %v468
          %v533 = vcvt.s32.f32 %v469
          %v534 = vcvt.s32.f32 %v470
          %v535 = vcvt.s32.f32 %v471
          %v536 = vcvt.s32.f32 %v472
          %v537 = vcvt.s32.f32 %v473
          %v538 = vcvt.s32.f32 %v474
          %v539 = vcvt.s32.f32 %v475
          %v540 = vcvt.s32.f32 %v476
          %v541 = vcvt.s32.f32 %v477
          %v542 = vcvt.s32.f32 %v478
          %v543 = vcvt.s32.f32 %v479
          %v544 = vcvt.s32.f32 %v480
          %v545 = vcvt.s32.f32 %v481
          %v546 = vpack.c.bf16 %v484, %v482
          %v547 = vpack.c.bf16 %v485, %v483
          %v548 = vpack.c.bf16 %v488, %v486
          %v549 = vpack.c.bf16 %v489, %v487
          %v550 = vpack.c.bf16 %v492, %v490
          %v551 = vpack.c.bf16 %v493, %v491
          %v552 = vpack.c.bf16 %v496, %v494
          %v553 = vpack.c.bf16 %v497, %v495
          %v554 = vpack.c.bf16 %v500, %v498
          %v555 = vpack.c.bf16 %v501, %v499
          %v556 = vpack.c.bf16 %v504, %v502
          %v557 = vpack.c.bf16 %v505, %v503
          %v558 = vpack.c.bf16 %v508, %v506
          %v559 = vpack.c.bf16 %v509, %v507
          %v560 = vpack.c.bf16 %v512, %v510
          %v561 = vpack.c.bf16 %v513, %v511
          %v562 = vpack.c.bf16 %v516, %v514
          %v563 = vpack.c.bf16 %v517, %v515
          %v564 = vpack.c.bf16 %v520, %v518
          %v565 = vpack.c.bf16 %v521, %v519
          %v566 = vpack.c.bf16 %v524, %v522
          %v567 = vpack.c.bf16 %v525, %v523
          %v568 = vpack.c.bf16 %v528, %v526
          %v569 = vpack.c.bf16 %v529, %v527
          %v570 = vpack.c.bf16 %v532, %v530
          %v571 = vpack.c.bf16 %v533, %v531
          %v572 = vpack.c.bf16 %v536, %v534
          %v573 = vpack.c.bf16 %v537, %v535
          %v574 = vpack.c.bf16 %v540, %v538
          %v575 = vpack.c.bf16 %v541, %v539
          %v576 = vpack.c.bf16 %v544, %v542
          %v577 = vpack.c.bf16 %v545, %v543
          %v578 = vunpack.c.l.bf16 %v546
          %v579 = vunpack.c.l.bf16 %v547
          %v580 = vunpack.c.h.bf16 %v546
          %v581 = vunpack.c.h.bf16 %v547
          %v582 = vunpack.c.l.bf16 %v548
          %v583 = vunpack.c.l.bf16 %v549
          %v584 = vunpack.c.h.bf16 %v548
          %v585 = vunpack.c.h.bf16 %v549
          %v586 = vunpack.c.l.bf16 %v550
          %v587 = vunpack.c.l.bf16 %v551
          %v588 = vunpack.c.h.bf16 %v550
          %v589 = vunpack.c.h.bf16 %v551
          %v590 = vunpack.c.l.bf16 %v552
          %v591 = vunpack.c.l.bf16 %v553
          %v592 = vunpack.c.h.bf16 %v552
          %v593 = vunpack.c.h.bf16 %v553
          %v594 = vunpack.c.l.bf16 %v554
          %v595 = vunpack.c.l.bf16 %v555
          %v596 = vunpack.c.h.bf16 %v554
          %v597 = vunpack.c.h.bf16 %v555
          %v598 = vunpack.c.l.bf16 %v556
          %v599 = vunpack.c.l.bf16 %v557
          %v600 = vunpack.c.h.bf16 %v556
          %v601 = vunpack.c.h.bf16 %v557
          %v602 = vunpack.c.l.bf16 %v558
          %v603 = vunpack.c.l.bf16 %v559
          %v604 = vunpack.c.h.bf16 %v558
          %v605 = vunpack.c.h.bf16 %v559
          %v606 = vunpack.c.l.bf16 %v560
          %v607 = vunpack.c.l.bf16 %v561
          %v608 = vunpack.c.h.bf16 %v560
          %v609 = vunpack.c.h.bf16 %v561
          %v610 = vunpack.c.l.bf16 %v562
          %v611 = vunpack.c.l.bf16 %v563
          %v612 = vunpack.c.h.bf16 %v562
          %v613 = vunpack.c.h.bf16 %v563
          %v614 = vunpack.c.l.bf16 %v564
          %v615 = vunpack.c.l.bf16 %v565
          %v616 = vunpack.c.h.bf16 %v564
          %v617 = vunpack.c.h.bf16 %v565
          %v618 = vunpack.c.l.bf16 %v566
          %v619 = vunpack.c.l.bf16 %v567
          %v620 = vunpack.c.h.bf16 %v566
          %v621 = vunpack.c.h.bf16 %v567
          %v622 = vunpack.c.l.bf16 %v568
          %v623 = vunpack.c.l.bf16 %v569
          %v624 = vunpack.c.h.bf16 %v568
          %v625 = vunpack.c.h.bf16 %v569
          %v626 = vunpack.c.l.bf16 %v570
          %v627 = vunpack.c.l.bf16 %v571
          %v628 = vunpack.c.h.bf16 %v570
          %v629 = vunpack.c.h.bf16 %v571
          %v630 = vunpack.c.l.bf16 %v572
          %v631 = vunpack.c.l.bf16 %v573
          %v632 = vunpack.c.h.bf16 %v572
          %v633 = vunpack.c.h.bf16 %v573
          %v634 = vunpack.c.l.bf16 %v574
          %v635 = vunpack.c.l.bf16 %v575
          %v636 = vunpack.c.h.bf16 %v574
          %v637 = vunpack.c.h.bf16 %v575
          %v638 = vunpack.c.l.bf16 %v576
          %v639 = vunpack.c.l.bf16 %v577
          %v640 = vunpack.c.h.bf16 %v576
          %v641 = vunpack.c.h.bf16 %v577
          %v642 = vadd.f32 %v578, %v580
          %v643 = vadd.f32 %v642, %v582
          %v644 = vadd.f32 %v643, %v584
          %v645 = vadd.f32 %v644, %v586
          %v646 = vadd.f32 %v645, %v588
          %v647 = vadd.f32 %v646, %v590
          %v648 = vadd.f32 %v647, %v592
          %v649 = vadd.f32 %v648, %v594
          %v650 = vadd.f32 %v649, %v596
          %v651 = vadd.f32 %v650, %v598
          %v652 = vadd.f32 %v651, %v600
          %v653 = vadd.f32 %v652, %v602
          %v654 = vadd.f32 %v653, %v604
          %v655 = vadd.f32 %v654, %v606
          %v656 = vadd.f32 %v655, %v608
          %v657 = vadd.f32 %v656, %v610
          %v658 = vadd.f32 %v657, %v612
          %v659 = vadd.f32 %v658, %v614
          %v660 = vadd.f32 %v659, %v616
          %v661 = vadd.f32 %v660, %v618
          %v662 = vadd.f32 %v661, %v620
          %v663 = vadd.f32 %v662, %v622
          %v664 = vadd.f32 %v663, %v624
          %v665 = vadd.f32 %v664, %v626
          %v666 = vadd.f32 %v665, %v628
          %v667 = vadd.f32 %v666, %v630
          %v668 = vadd.f32 %v667, %v632
          %v669 = vadd.f32 %v668, %v634
          %v670 = vadd.f32 %v669, %v636
          %v671 = vadd.f32 %v670, %v638
          %v672 = vadd.f32 %v671, %v640
          %v673 = vrot.slane %v672, 4
          %v674 = vadd.f32 %v672, %v673
          %v675 = vrot.slane %v674, 2
          %v676 = vadd.f32 %v674, %v675
          %v677 = vrot.slane %v676, 1
          %v678 = vadd.f32 %v676, %v677
          %v679 = vadd.f32 %v579, %v581
          %v680 = vadd.f32 %v679, %v583
          %v681 = vadd.f32 %v680, %v585
          %v682 = vadd.f32 %v681, %v587
          %v683 = vadd.f32 %v682, %v589
          %v684 = vadd.f32 %v683, %v591
          %v685 = vadd.f32 %v684, %v593
          %v686 = vadd.f32 %v685, %v595
          %v687 = vadd.f32 %v686, %v597
          %v688 = vadd.f32 %v687, %v599
          %v689 = vadd.f32 %v688, %v601
          %v690 = vadd.f32 %v689, %v603
          %v691 = vadd.f32 %v690, %v605
          %v692 = vadd.f32 %v691, %v607
          %v693 = vadd.f32 %v692, %v609
          %v694 = vadd.f32 %v693, %v611
          %v695 = vadd.f32 %v694, %v613
          %v696 = vadd.f32 %v695, %v615
          %v697 = vadd.f32 %v696, %v617
          %v698 = vadd.f32 %v697, %v619
          %v699 = vadd.f32 %v698, %v621
          %v700 = vadd.f32 %v699, %v623
          %v701 = vadd.f32 %v700, %v625
          %v702 = vadd.f32 %v701, %v627
          %v703 = vadd.f32 %v702, %v629
          %v704 = vadd.f32 %v703, %v631
          %v705 = vadd.f32 %v704, %v633
          %v706 = vadd.f32 %v705, %v635
          %v707 = vadd.f32 %v706, %v637
          %v708 = vadd.f32 %v707, %v639
          %v709 = vadd.f32 %v708, %v641
          %v710 = vrot.slane %v709, 4
          %v711 = vadd.f32 %v709, %v710
          %v712 = vrot.slane %v711, 2
          %v713 = vadd.f32 %v711, %v712
          %v714 = vrot.slane %v713, 1
          %v715 = vadd.f32 %v713, %v714
          %v716 = vpack.c.bf16 %v715, %v678
          %v717 = vunpack.c.l.bf16 %v716
          %v718 = vunpack.c.h.bf16 %v716
          %v719 = vperm.slane %v257, 0
          %v720 = vperm.slane %v257, 1
          %vm721 = vcmp.eq.s32.totalorder %v719, %v173
          %vm722 = vcmp.eq.s32.totalorder %v720, %v173
          %vm723 = vcmp.eq.s32.totalorder %v719, %v174
          %vm724 = vcmp.eq.s32.totalorder %v720, %v174
          %vm725 = vcmp.eq.s32.totalorder %v719, %v175
          %vm726 = vcmp.eq.s32.totalorder %v720, %v175
          %vm727 = vcmp.eq.s32.totalorder %v719, %v176
          %vm728 = vcmp.eq.s32.totalorder %v720, %v176
          %vm729 = vcmp.eq.s32.totalorder %v719, %v177
          %vm730 = vcmp.eq.s32.totalorder %v720, %v177
          %vm731 = vcmp.eq.s32.totalorder %v719, %v178
          %vm732 = vcmp.eq.s32.totalorder %v720, %v178
          %vm733 = vcmp.eq.s32.totalorder %v719, %v179
          %vm734 = vcmp.eq.s32.totalorder %v720, %v179
          %vm735 = vcmp.eq.s32.totalorder %v719, %v180
          %vm736 = vcmp.eq.s32.totalorder %v720, %v180
          %vm737 = vcmp.gt.s32.totalorder %v173, 0
          %vm738 = vcmp.gt.s32.totalorder %v174, 0
          %vm739 = vcmp.gt.s32.totalorder %v175, 0
          %vm740 = vcmp.gt.s32.totalorder %v176, 0
          %vm741 = vcmp.gt.s32.totalorder %v177, 0
          %vm742 = vcmp.gt.s32.totalorder %v178, 0
          %vm743 = vcmp.gt.s32.totalorder %v179, 0
          %vm744 = vcmp.gt.s32.totalorder %v180, 0
          %v745 = vsel %vm737, 1, 0
          %v746 = vsel %vm738, 1, 0
          %v747 = vsel %vm739, 1, 0
          %v748 = vsel %vm740, 1, 0
          %v749 = vsel %vm741, 1, 0
          %v750 = vsel %vm742, 1, 0
          %v751 = vsel %vm743, 1, 0
          %v752 = vsel %vm744, 1, 0
          %vm753 = vcmp.eq.s32.totalorder %v745, 1
          %vm754 = vcmp.eq.s32.totalorder %v746, 1
          %vm755 = vcmp.eq.s32.totalorder %v747, 1
          %vm756 = vcmp.eq.s32.totalorder %v748, 1
          %vm757 = vcmp.eq.s32.totalorder %v749, 1
          %vm758 = vcmp.eq.s32.totalorder %v750, 1
          %vm759 = vcmp.eq.s32.totalorder %v751, 1
          %vm760 = vcmp.eq.s32.totalorder %v752, 1
          %vm761 = vmand %vm721, %vm753
          %vm762 = vmand %vm722, %vm753
          %vm763 = vmand %vm723, %vm754
          %vm764 = vmand %vm724, %vm754
          %vm765 = vmand %vm725, %vm755
          %vm766 = vmand %vm726, %vm755
          %vm767 = vmand %vm727, %vm756
          %vm768 = vmand %vm728, %vm756
          %vm769 = vmand %vm729, %vm757
          %vm770 = vmand %vm730, %vm757
          %vm771 = vmand %vm731, %vm758
          %vm772 = vmand %vm732, %vm758
          %vm773 = vmand %vm733, %vm759
          %vm774 = vmand %vm734, %vm759
          %vm775 = vmand %vm735, %vm760
          %vm776 = vmand %vm736, %vm760
          %v777 = vsel %vm761, 1, 0
          %v778 = vsel %vm762, 1, 0
          %v779 = vsel %vm763, 1, 0
          %v780 = vsel %vm764, 1, 0
          %v781 = vsel %vm765, 1, 0
          %v782 = vsel %vm766, 1, 0
          %v783 = vsel %vm767, 1, 0
          %v784 = vsel %vm768, 1, 0
          %v785 = vsel %vm769, 1, 0
          %v786 = vsel %vm770, 1, 0
          %v787 = vsel %vm771, 1, 0
          %v788 = vsel %vm772, 1, 0
          %v789 = vsel %vm773, 1, 0
          %v790 = vsel %vm774, 1, 0
          %v791 = vsel %vm775, 1, 0
          %v792 = vsel %vm776, 1, 0
          %v793 = vcvt.s32.f32 %v777
          %v794 = vcvt.s32.f32 %v778
          %v795 = vcvt.s32.f32 %v779
          %v796 = vcvt.s32.f32 %v780
          %v797 = vcvt.s32.f32 %v781
          %v798 = vcvt.s32.f32 %v782
          %v799 = vcvt.s32.f32 %v783
          %v800 = vcvt.s32.f32 %v784
          %v801 = vcvt.s32.f32 %v785
          %v802 = vcvt.s32.f32 %v786
          %v803 = vcvt.s32.f32 %v787
          %v804 = vcvt.s32.f32 %v788
          %v805 = vcvt.s32.f32 %v789
          %v806 = vcvt.s32.f32 %v790
          %v807 = vcvt.s32.f32 %v791
          %v808 = vcvt.s32.f32 %v792
          %v809 = vpack.c.bf16 %v795, %v793
          %v810 = vpack.c.bf16 %v796, %v794
          %v811 = vpack.c.bf16 %v799, %v797
          %v812 = vpack.c.bf16 %v800, %v798
          %v813 = vpack.c.bf16 %v803, %v801
          %v814 = vpack.c.bf16 %v804, %v802
          %v815 = vpack.c.bf16 %v807, %v805
          %v816 = vpack.c.bf16 %v808, %v806
          %817 = vmatpush.bf16.msra.mxu0 %v560
          %818 = vmatpush.bf16.msra.mxu0 %v558
          %819 = vmatpush.bf16.msra.mxu0 %v556
          %820 = vmatpush.bf16.msra.mxu0 %v554
          %821 = vmatpush.bf16.msra.mxu0 %v552
          %822 = vmatpush.bf16.msra.mxu0 %v550
          %823 = vmatpush.bf16.msra.mxu0 %v548
          %824 = vmatpush.bf16.msra.mxu0 %v546
          %825 = vmatmul.bf16.gmra.mxu0 %v809
          %v826 = vpop.f32.mrf.mxu0
          %v827 = vadd.f32 0.0, %v826
          %v828 = vpop.f32.mrf.mxu0
          %v829 = vadd.f32 0.0, %v828
          %830 = vmatmul.bf16.gmra.mxu0 %v811
          %v831 = vpop.f32.mrf.mxu0
          %v832 = vadd.f32 0.0, %v831
          %v833 = vpop.f32.mrf.mxu0
          %v834 = vadd.f32 0.0, %v833
          %835 = vmatmul.bf16.gmra.mxu0 %v813
          %v836 = vpop.f32.mrf.mxu0
          %v837 = vadd.f32 0.0, %v836
          %v838 = vpop.f32.mrf.mxu0
          %v839 = vadd.f32 0.0, %v838
          %840 = vmatmul.bf16.gmra.mxu0 %v815
          %v841 = vpop.f32.mrf.mxu0
          %v842 = vadd.f32 0.0, %v841
          %v843 = vpop.f32.mrf.mxu0
          %v844 = vadd.f32 0.0, %v843
          %845 = vdwg.mxu0
          %846 = vmatpush.bf16.msra.mxu0 %v576
          %847 = vmatpush.bf16.msra.mxu0 %v574
          %848 = vmatpush.bf16.msra.mxu0 %v572
          %849 = vmatpush.bf16.msra.mxu0 %v570
          %850 = vmatpush.bf16.msra.mxu0 %v568
          %851 = vmatpush.bf16.msra.mxu0 %v566
          %852 = vmatpush.bf16.msra.mxu0 %v564
          %853 = vmatpush.bf16.msra.mxu0 %v562
          %854 = vmatmul.bf16.gmra.mxu0 %v810
          %v855 = vpop.f32.mrf.mxu0
          %v856 = vadd.f32 %v827, %v855
          %v857 = vpop.f32.mrf.mxu0
          %v858 = vadd.f32 %v829, %v857
          %859 = vmatmul.bf16.gmra.mxu0 %v812
          %v860 = vpop.f32.mrf.mxu0
          %v861 = vadd.f32 %v832, %v860
          %v862 = vpop.f32.mrf.mxu0
          %v863 = vadd.f32 %v834, %v862
          %864 = vmatmul.bf16.gmra.mxu0 %v814
          %v865 = vpop.f32.mrf.mxu0
          %v866 = vadd.f32 %v837, %v865
          %v867 = vpop.f32.mrf.mxu0
          %v868 = vadd.f32 %v839, %v867
          %869 = vmatmul.bf16.gmra.mxu0 %v816
          %v870 = vpop.f32.mrf.mxu0
          %v871 = vadd.f32 %v842, %v870
          %v872 = vpop.f32.mrf.mxu0
          %v873 = vadd.f32 %v844, %v872
          %874 = vdwg.mxu0
          %875 = vmatpush.bf16.msra.mxu0 %v561
          %876 = vmatpush.bf16.msra.mxu0 %v559
          %877 = vmatpush.bf16.msra.mxu0 %v557
          %878 = vmatpush.bf16.msra.mxu0 %v555
          %879 = vmatpush.bf16.msra.mxu0 %v553
          %880 = vmatpush.bf16.msra.mxu0 %v551
          %881 = vmatpush.bf16.msra.mxu0 %v549
          %882 = vmatpush.bf16.msra.mxu0 %v547
          %883 = vmatmul.bf16.gmra.mxu0 %v809
          %v884 = vpop.f32.mrf.mxu0
          %v885 = vadd.f32 0.0, %v884
          %v886 = vpop.f32.mrf.mxu0
          %v887 = vadd.f32 0.0, %v886
          %888 = vmatmul.bf16.gmra.mxu0 %v811
          %v889 = vpop.f32.mrf.mxu0
          %v890 = vadd.f32 0.0, %v889
          %v891 = vpop.f32.mrf.mxu0
          %v892 = vadd.f32 0.0, %v891
          %893 = vmatmul.bf16.gmra.mxu0 %v813
          %v894 = vpop.f32.mrf.mxu0
          %v895 = vadd.f32 0.0, %v894
          %v896 = vpop.f32.mrf.mxu0
          %v897 = vadd.f32 0.0, %v896
          %898 = vmatmul.bf16.gmra.mxu0 %v815
          %v899 = vpop.f32.mrf.mxu0
          %v900 = vadd.f32 0.0, %v899
          %v901 = vpop.f32.mrf.mxu0
          %v902 = vadd.f32 0.0, %v901
          %903 = vdwg.mxu0
          %904 = vmatpush.bf16.msra.mxu0 %v577
          %905 = vmatpush.bf16.msra.mxu0 %v575
          %906 = vmatpush.bf16.msra.mxu0 %v573
          %907 = vmatpush.bf16.msra.mxu0 %v571
          %908 = vmatpush.bf16.msra.mxu0 %v569
          %909 = vmatpush.bf16.msra.mxu0 %v567
          %910 = vmatpush.bf16.msra.mxu0 %v565
          %911 = vmatpush.bf16.msra.mxu0 %v563
          %912 = vmatmul.bf16.gmra.mxu0 %v810
          %v913 = vpop.f32.mrf.mxu0
          %v914 = vadd.f32 %v885, %v913
          %v915 = vpop.f32.mrf.mxu0
          %v916 = vadd.f32 %v887, %v915
          %917 = vmatmul.bf16.gmra.mxu0 %v812
          %v918 = vpop.f32.mrf.mxu0
          %v919 = vadd.f32 %v890, %v918
          %v920 = vpop.f32.mrf.mxu0
          %v921 = vadd.f32 %v892, %v920
          %922 = vmatmul.bf16.gmra.mxu0 %v814
          %v923 = vpop.f32.mrf.mxu0
          %v924 = vadd.f32 %v895, %v923
          %v925 = vpop.f32.mrf.mxu0
          %v926 = vadd.f32 %v897, %v925
          %927 = vmatmul.bf16.gmra.mxu0 %v816
          %v928 = vpop.f32.mrf.mxu0
          %v929 = vadd.f32 %v900, %v928
          %v930 = vpop.f32.mrf.mxu0
          %v931 = vadd.f32 %v902, %v930
          %932 = vdwg.mxu0
          %v933 = vadd.f32 %v856, %v914
          %934 = vadd.xlane.f32.xlu0 %v933
          %v935 = vpop.xlane.xlu0 %934
          %v936 = vadd.f32 %v858, %v916
          %937 = vadd.xlane.f32.xlu0 %v936
          %v938 = vpop.xlane.xlu0 %937
          %v939 = vadd.f32 %v861, %v919
          %940 = vadd.xlane.f32.xlu0 %v939
          %v941 = vpop.xlane.xlu0 %940
          %v942 = vadd.f32 %v863, %v921
          %943 = vadd.xlane.f32.xlu0 %v942
          %v944 = vpop.xlane.xlu0 %943
          %v945 = vadd.f32 %v866, %v924
          %946 = vadd.xlane.f32.xlu0 %v945
          %v947 = vpop.xlane.xlu0 %946
          %v948 = vadd.f32 %v868, %v926
          %949 = vadd.xlane.f32.xlu0 %v948
          %v950 = vpop.xlane.xlu0 %949
          %v951 = vadd.f32 %v871, %v929
          %952 = vadd.xlane.f32.xlu0 %v951
          %v953 = vpop.xlane.xlu0 %952
          %v954 = vadd.f32 %v873, %v931
          %955 = vadd.xlane.f32.xlu0 %v954
          %v956 = vpop.xlane.xlu0 %955
          %v957 = vadd.f32 %v935, %v717
          %v958 = vadd.f32 %v935, %v718
          %v959 = vadd.f32 %v938, %v717
          %v960 = vadd.f32 %v938, %v718
          %v961 = vadd.f32 %v941, %v717
          %v962 = vadd.f32 %v941, %v718
          %v963 = vadd.f32 %v944, %v717
          %v964 = vadd.f32 %v944, %v718
          %v965 = vadd.f32 %v947, %v717
          %v966 = vadd.f32 %v947, %v718
          %v967 = vadd.f32 %v950, %v717
          %v968 = vadd.f32 %v950, %v718
          %v969 = vadd.f32 %v953, %v717
          %v970 = vadd.f32 %v953, %v718
          %v971 = vadd.f32 %v956, %v717
          %v972 = vadd.f32 %v956, %v718
          %v973 = vsub.f32 %v957, %v856
          %v974 = vsub.f32 %v958, %v914
          %v975 = vsub.f32 %v959, %v858
          %v976 = vsub.f32 %v960, %v916
          %v977 = vsub.f32 %v961, %v861
          %v978 = vsub.f32 %v962, %v919
          %v979 = vsub.f32 %v963, %v863
          %v980 = vsub.f32 %v964, %v921
          %v981 = vsub.f32 %v965, %v866
          %v982 = vsub.f32 %v966, %v924
          %v983 = vsub.f32 %v967, %v868
          %v984 = vsub.f32 %v968, %v926
          %v985 = vsub.f32 %v969, %v871
          %v986 = vsub.f32 %v970, %v929
          %v987 = vsub.f32 %v971, %v873
          %v988 = vsub.f32 %v972, %v931
          %v989 = vmax.f32 %v973, 1.0
          %v990 = vmax.f32 %v974, 1.0
          %v991 = vmax.f32 %v975, 1.0
          %v992 = vmax.f32 %v976, 1.0
          %v993 = vmax.f32 %v977, 1.0
          %v994 = vmax.f32 %v978, 1.0
          %v995 = vmax.f32 %v979, 1.0
          %v996 = vmax.f32 %v980, 1.0
          %v997 = vmax.f32 %v981, 1.0
          %v998 = vmax.f32 %v982, 1.0
          %v999 = vmax.f32 %v983, 1.0
          %v1000 = vmax.f32 %v984, 1.0
          %v1001 = vmax.f32 %v985, 1.0
          %v1002 = vmax.f32 %v986, 1.0
          %v1003 = vmax.f32 %v987, 1.0
          %v1004 = vmax.f32 %v988, 1.0
          %v1005 = vrcp.pop %v989
          %v1006 = vmul.f32 %v989, %v1005
          %v1007 = vsub.f32 1.0, %v1006
          %v1008 = vmul.f32 %v1005, %v1007
          %v1009 = vadd.f32 %v1005, %v1008
          %vm1010 = vweird.f32 %v989
          %vm1011 = vweird.f32 %v1005
          %vm1012 = vmor %vm1010, %vm1011
          %v1013 = vsel %vm1012, %v1005, %v1009
          %v1014 = vand.u32 2147483647, %v989
          %vm1015 = vcmp.eq.f32.partialorder %v1014, 8.507059e+37
          %v1016 = vand.u32 %v989, 2147483648
          %v1017 = vor.u32 1.1754944e-38, %v1016
          %v1018 = vsel %vm1015, %v1017, %v1013
          %v1019 = vmul.f32 %v856, %v1018
          %v1020 = vrcp.pop %v990
          %v1021 = vmul.f32 %v990, %v1020
          %v1022 = vsub.f32 1.0, %v1021
          %v1023 = vmul.f32 %v1020, %v1022
          %v1024 = vadd.f32 %v1020, %v1023
          %vm1025 = vweird.f32 %v990
          %vm1026 = vweird.f32 %v1020
          %vm1027 = vmor %vm1025, %vm1026
          %v1028 = vsel %vm1027, %v1020, %v1024
          %v1029 = vand.u32 2147483647, %v990
          %vm1030 = vcmp.eq.f32.partialorder %v1029, 8.507059e+37
          %v1031 = vand.u32 %v990, 2147483648
          %v1032 = vor.u32 1.1754944e-38, %v1031
          %v1033 = vsel %vm1030, %v1032, %v1028
          %v1034 = vmul.f32 %v914, %v1033
          %v1035 = vrcp.pop %v991
          %v1036 = vmul.f32 %v991, %v1035
          %v1037 = vsub.f32 1.0, %v1036
          %v1038 = vmul.f32 %v1035, %v1037
          %v1039 = vadd.f32 %v1035, %v1038
          %vm1040 = vweird.f32 %v991
          %vm1041 = vweird.f32 %v1035
          %vm1042 = vmor %vm1040, %vm1041
          %v1043 = vsel %vm1042, %v1035, %v1039
          %v1044 = vand.u32 2147483647, %v991
          %vm1045 = vcmp.eq.f32.partialorder %v1044, 8.507059e+37
          %v1046 = vand.u32 %v991, 2147483648
          %v1047 = vor.u32 1.1754944e-38, %v1046
          %v1048 = vsel %vm1045, %v1047, %v1043
          %v1049 = vmul.f32 %v858, %v1048
          %v1050 = vrcp.pop %v992
          %v1051 = vmul.f32 %v992, %v1050
          %v1052 = vsub.f32 1.0, %v1051
          %v1053 = vmul.f32 %v1050, %v1052
          %v1054 = vadd.f32 %v1050, %v1053
          %vm1055 = vweird.f32 %v992
          %vm1056 = vweird.f32 %v1050
          %vm1057 = vmor %vm1055, %vm1056
          %v1058 = vsel %vm1057, %v1050, %v1054
          %v1059 = vand.u32 2147483647, %v992
          %vm1060 = vcmp.eq.f32.partialorder %v1059, 8.507059e+37
          %v1061 = vand.u32 %v992, 2147483648
          %v1062 = vor.u32 1.1754944e-38, %v1061
          %v1063 = vsel %vm1060, %v1062, %v1058
          %v1064 = vmul.f32 %v916, %v1063
          %v1065 = vrcp.pop %v993
          %v1066 = vmul.f32 %v993, %v1065
          %v1067 = vsub.f32 1.0, %v1066
          %v1068 = vmul.f32 %v1065, %v1067
          %v1069 = vadd.f32 %v1065, %v1068
          %vm1070 = vweird.f32 %v993
          %vm1071 = vweird.f32 %v1065
          %vm1072 = vmor %vm1070, %vm1071
          %v1073 = vsel %vm1072, %v1065, %v1069
          %v1074 = vand.u32 2147483647, %v993
          %vm1075 = vcmp.eq.f32.partialorder %v1074, 8.507059e+37
          %v1076 = vand.u32 %v993, 2147483648
          %v1077 = vor.u32 1.1754944e-38, %v1076
          %v1078 = vsel %vm1075, %v1077, %v1073
          %v1079 = vmul.f32 %v861, %v1078
          %v1080 = vrcp.pop %v994
          %v1081 = vmul.f32 %v994, %v1080
          %v1082 = vsub.f32 1.0, %v1081
          %v1083 = vmul.f32 %v1080, %v1082
          %v1084 = vadd.f32 %v1080, %v1083
          %vm1085 = vweird.f32 %v994
          %vm1086 = vweird.f32 %v1080
          %vm1087 = vmor %vm1085, %vm1086
          %v1088 = vsel %vm1087, %v1080, %v1084
          %v1089 = vand.u32 2147483647, %v994
          %vm1090 = vcmp.eq.f32.partialorder %v1089, 8.507059e+37
          %v1091 = vand.u32 %v994, 2147483648
          %v1092 = vor.u32 1.1754944e-38, %v1091
          %v1093 = vsel %vm1090, %v1092, %v1088
          %v1094 = vmul.f32 %v919, %v1093
          %v1095 = vrcp.pop %v995
          %v1096 = vmul.f32 %v995, %v1095
          %v1097 = vsub.f32 1.0, %v1096
          %v1098 = vmul.f32 %v1095, %v1097
          %v1099 = vadd.f32 %v1095, %v1098
          %vm1100 = vweird.f32 %v995
          %vm1101 = vweird.f32 %v1095
          %vm1102 = vmor %vm1100, %vm1101
          %v1103 = vsel %vm1102, %v1095, %v1099
          %v1104 = vand.u32 2147483647, %v995
          %vm1105 = vcmp.eq.f32.partialorder %v1104, 8.507059e+37
          %v1106 = vand.u32 %v995, 2147483648
          %v1107 = vor.u32 1.1754944e-38, %v1106
          %v1108 = vsel %vm1105, %v1107, %v1103
          %v1109 = vmul.f32 %v863, %v1108
          %v1110 = vrcp.pop %v996
          %v1111 = vmul.f32 %v996, %v1110
          %v1112 = vsub.f32 1.0, %v1111
          %v1113 = vmul.f32 %v1110, %v1112
          %v1114 = vadd.f32 %v1110, %v1113
          %vm1115 = vweird.f32 %v996
          %vm1116 = vweird.f32 %v1110
          %vm1117 = vmor %vm1115, %vm1116
          %v1118 = vsel %vm1117, %v1110, %v1114
          %v1119 = vand.u32 2147483647, %v996
          %vm1120 = vcmp.eq.f32.partialorder %v1119, 8.507059e+37
          %v1121 = vand.u32 %v996, 2147483648
          %v1122 = vor.u32 1.1754944e-38, %v1121
          %v1123 = vsel %vm1120, %v1122, %v1118
          %v1124 = vmul.f32 %v921, %v1123
          %v1125 = vrcp.pop %v997
          %v1126 = vmul.f32 %v997, %v1125
          %v1127 = vsub.f32 1.0, %v1126
          %v1128 = vmul.f32 %v1125, %v1127
          %v1129 = vadd.f32 %v1125, %v1128
          %vm1130 = vweird.f32 %v997
          %vm1131 = vweird.f32 %v1125
          %vm1132 = vmor %vm1130, %vm1131
          %v1133 = vsel %vm1132, %v1125, %v1129
          %v1134 = vand.u32 2147483647, %v997
          %vm1135 = vcmp.eq.f32.partialorder %v1134, 8.507059e+37
          %v1136 = vand.u32 %v997, 2147483648
          %v1137 = vor.u32 1.1754944e-38, %v1136
          %v1138 = vsel %vm1135, %v1137, %v1133
          %v1139 = vmul.f32 %v866, %v1138
          %v1140 = vrcp.pop %v998
          %v1141 = vmul.f32 %v998, %v1140
          %v1142 = vsub.f32 1.0, %v1141
          %v1143 = vmul.f32 %v1140, %v1142
          %v1144 = vadd.f32 %v1140, %v1143
          %vm1145 = vweird.f32 %v998
          %vm1146 = vweird.f32 %v1140
          %vm1147 = vmor %vm1145, %vm1146
          %v1148 = vsel %vm1147, %v1140, %v1144
          %v1149 = vand.u32 2147483647, %v998
          %vm1150 = vcmp.eq.f32.partialorder %v1149, 8.507059e+37
          %v1151 = vand.u32 %v998, 2147483648
          %v1152 = vor.u32 1.1754944e-38, %v1151
          %v1153 = vsel %vm1150, %v1152, %v1148
          %v1154 = vmul.f32 %v924, %v1153
          %v1155 = vrcp.pop %v999
          %v1156 = vmul.f32 %v999, %v1155
          %v1157 = vsub.f32 1.0, %v1156
          %v1158 = vmul.f32 %v1155, %v1157
          %v1159 = vadd.f32 %v1155, %v1158
          %vm1160 = vweird.f32 %v999
          %vm1161 = vweird.f32 %v1155
          %vm1162 = vmor %vm1160, %vm1161
          %v1163 = vsel %vm1162, %v1155, %v1159
          %v1164 = vand.u32 2147483647, %v999
          %vm1165 = vcmp.eq.f32.partialorder %v1164, 8.507059e+37
          %v1166 = vand.u32 %v999, 2147483648
          %v1167 = vor.u32 1.1754944e-38, %v1166
          %v1168 = vsel %vm1165, %v1167, %v1163
          %v1169 = vmul.f32 %v868, %v1168
          %v1170 = vrcp.pop %v1000
          %v1171 = vmul.f32 %v1000, %v1170
          %v1172 = vsub.f32 1.0, %v1171
          %v1173 = vmul.f32 %v1170, %v1172
          %v1174 = vadd.f32 %v1170, %v1173
          %vm1175 = vweird.f32 %v1000
          %vm1176 = vweird.f32 %v1170
          %vm1177 = vmor %vm1175, %vm1176
          %v1178 = vsel %vm1177, %v1170, %v1174
          %v1179 = vand.u32 2147483647, %v1000
          %vm1180 = vcmp.eq.f32.partialorder %v1179, 8.507059e+37
          %v1181 = vand.u32 %v1000, 2147483648
          %v1182 = vor.u32 1.1754944e-38, %v1181
          %v1183 = vsel %vm1180, %v1182, %v1178
          %v1184 = vmul.f32 %v926, %v1183
          %v1185 = vrcp.pop %v1001
          %v1186 = vmul.f32 %v1001, %v1185
          %v1187 = vsub.f32 1.0, %v1186
          %v1188 = vmul.f32 %v1185, %v1187
          %v1189 = vadd.f32 %v1185, %v1188
          %vm1190 = vweird.f32 %v1001
          %vm1191 = vweird.f32 %v1185
          %vm1192 = vmor %vm1190, %vm1191
          %v1193 = vsel %vm1192, %v1185, %v1189
          %v1194 = vand.u32 2147483647, %v1001
          %vm1195 = vcmp.eq.f32.partialorder %v1194, 8.507059e+37
          %v1196 = vand.u32 %v1001, 2147483648
          %v1197 = vor.u32 1.1754944e-38, %v1196
          %v1198 = vsel %vm1195, %v1197, %v1193
          %v1199 = vmul.f32 %v871, %v1198
          %v1200 = vrcp.pop %v1002
          %v1201 = vmul.f32 %v1002, %v1200
          %v1202 = vsub.f32 1.0, %v1201
          %v1203 = vmul.f32 %v1200, %v1202
          %v1204 = vadd.f32 %v1200, %v1203
          %vm1205 = vweird.f32 %v1002
          %vm1206 = vweird.f32 %v1200
          %vm1207 = vmor %vm1205, %vm1206
          %v1208 = vsel %vm1207, %v1200, %v1204
          %v1209 = vand.u32 2147483647, %v1002
          %vm1210 = vcmp.eq.f32.partialorder %v1209, 8.507059e+37
          %v1211 = vand.u32 %v1002, 2147483648
          %v1212 = vor.u32 1.1754944e-38, %v1211
          %v1213 = vsel %vm1210, %v1212, %v1208
          %v1214 = vmul.f32 %v929, %v1213
          %v1215 = vrcp.pop %v1003
          %v1216 = vmul.f32 %v1003, %v1215
          %v1217 = vsub.f32 1.0, %v1216
          %v1218 = vmul.f32 %v1215, %v1217
          %v1219 = vadd.f32 %v1215, %v1218
          %vm1220 = vweird.f32 %v1003
          %vm1221 = vweird.f32 %v1215
          %vm1222 = vmor %vm1220, %vm1221
          %v1223 = vsel %vm1222, %v1215, %v1219
          %v1224 = vand.u32 2147483647, %v1003
          %vm1225 = vcmp.eq.f32.partialorder %v1224, 8.507059e+37
          %v1226 = vand.u32 %v1003, 2147483648
          %v1227 = vor.u32 1.1754944e-38, %v1226
          %v1228 = vsel %vm1225, %v1227, %v1223
          %v1229 = vmul.f32 %v873, %v1228
          %v1230 = vrcp.pop %v1004
          %v1231 = vmul.f32 %v1004, %v1230
          %v1232 = vsub.f32 1.0, %v1231
          %v1233 = vmul.f32 %v1230, %v1232
          %v1234 = vadd.f32 %v1230, %v1233
          %vm1235 = vweird.f32 %v1004
          %vm1236 = vweird.f32 %v1230
          %vm1237 = vmor %vm1235, %vm1236
          %v1238 = vsel %vm1237, %v1230, %v1234
          %v1239 = vand.u32 2147483647, %v1004
          %vm1240 = vcmp.eq.f32.partialorder %v1239, 8.507059e+37
          %v1241 = vand.u32 %v1004, 2147483648
          %v1242 = vor.u32 1.1754944e-38, %v1241
          %v1243 = vsel %vm1240, %v1242, %v1238
          %v1244 = vmul.f32 %v931, %v1243
          %v1245 = vmax.f32 %v1019, %v1079
          %v1246 = vmax.f32 %v1049, %v1109
          %v1247 = vmax.f32 %v1245, %v1139
          %v1248 = vmax.f32 %v1246, %v1169
          %v1249 = vmax.f32 %v1247, %v1199
          %v1250 = vmax.f32 %v1248, %v1229
          %v1251 = vmax.f32 %v1249, %v1250
          %v1252 = vrot.slane %v1251, 4
          %v1253 = vmax.f32 %v1251, %v1252
          %v1254 = vrot.slane %v1253, 2
          %v1255 = vmax.f32 %v1253, %v1254
          %v1256 = vrot.slane %v1255, 1
          %v1257 = vmax.f32 %v1255, %v1256
          %v1258 = vmax.f32 %v1034, %v1094
          %v1259 = vmax.f32 %v1064, %v1124
          %v1260 = vmax.f32 %v1258, %v1154
          %v1261 = vmax.f32 %v1259, %v1184
          %v1262 = vmax.f32 %v1260, %v1214
          %v1263 = vmax.f32 %v1261, %v1244
          %v1264 = vmax.f32 %v1262, %v1263
          %v1265 = vrot.slane %v1264, 4
          %v1266 = vmax.f32 %v1264, %v1265
          %v1267 = vrot.slane %v1266, 2
          %v1268 = vmax.f32 %v1266, %v1267
          %v1269 = vrot.slane %v1268, 1
          %v1270 = vmax.f32 %v1268, %v1269
          %v1271 = vmax.f32 %v1257, 0.0
          %v1272 = vmax.f32 %v1270, 0.0
          %v1273 = vadd.s32 %v173, 64
          %v1274 = vadd.s32 %v174, 64
          %v1275 = vadd.s32 %v175, 64
          %v1276 = vadd.s32 %v176, 64
          %v1277 = vadd.s32 %v177, 64
          %v1278 = vadd.s32 %v178, 64
          %v1279 = vadd.s32 %v179, 64
          %v1280 = vadd.s32 %v180, 64
          %vm1281 = vcmp.eq.s32.totalorder %v719, %v1273
          %vm1282 = vcmp.eq.s32.totalorder %v720, %v1273
          %vm1283 = vcmp.eq.s32.totalorder %v719, %v1274
          %vm1284 = vcmp.eq.s32.totalorder %v720, %v1274
          %vm1285 = vcmp.eq.s32.totalorder %v719, %v1275
          %vm1286 = vcmp.eq.s32.totalorder %v720, %v1275
          %vm1287 = vcmp.eq.s32.totalorder %v719, %v1276
          %vm1288 = vcmp.eq.s32.totalorder %v720, %v1276
          %vm1289 = vcmp.eq.s32.totalorder %v719, %v1277
          %vm1290 = vcmp.eq.s32.totalorder %v720, %v1277
          %vm1291 = vcmp.eq.s32.totalorder %v719, %v1278
          %vm1292 = vcmp.eq.s32.totalorder %v720, %v1278
          %vm1293 = vcmp.eq.s32.totalorder %v719, %v1279
          %vm1294 = vcmp.eq.s32.totalorder %v720, %v1279
          %vm1295 = vcmp.eq.s32.totalorder %v719, %v1280
          %vm1296 = vcmp.eq.s32.totalorder %v720, %v1280
          %vm1297 = vcmp.gt.s32.totalorder %v1273, 0
          %vm1298 = vcmp.gt.s32.totalorder %v1274, 0
          %vm1299 = vcmp.gt.s32.totalorder %v1275, 0
          %vm1300 = vcmp.gt.s32.totalorder %v1276, 0
          %vm1301 = vcmp.gt.s32.totalorder %v1277, 0
          %vm1302 = vcmp.gt.s32.totalorder %v1278, 0
          %vm1303 = vcmp.gt.s32.totalorder %v1279, 0
          %vm1304 = vcmp.gt.s32.totalorder %v1280, 0
          %v1305 = vsel %vm1297, 1, 0
          %v1306 = vsel %vm1298, 1, 0
          %v1307 = vsel %vm1299, 1, 0
          %v1308 = vsel %vm1300, 1, 0
          %v1309 = vsel %vm1301, 1, 0
          %v1310 = vsel %vm1302, 1, 0
          %v1311 = vsel %vm1303, 1, 0
          %v1312 = vsel %vm1304, 1, 0
          %vm1313 = vcmp.eq.s32.totalorder %v1305, 1
          %vm1314 = vcmp.eq.s32.totalorder %v1306, 1
          %vm1315 = vcmp.eq.s32.totalorder %v1307, 1
          %vm1316 = vcmp.eq.s32.totalorder %v1308, 1
          %vm1317 = vcmp.eq.s32.totalorder %v1309, 1
          %vm1318 = vcmp.eq.s32.totalorder %v1310, 1
          %vm1319 = vcmp.eq.s32.totalorder %v1311, 1
          %vm1320 = vcmp.eq.s32.totalorder %v1312, 1
          %vm1321 = vmand %vm1281, %vm1313
          %vm1322 = vmand %vm1282, %vm1313
          %vm1323 = vmand %vm1283, %vm1314
          %vm1324 = vmand %vm1284, %vm1314
          %vm1325 = vmand %vm1285, %vm1315
          %vm1326 = vmand %vm1286, %vm1315
          %vm1327 = vmand %vm1287, %vm1316
          %vm1328 = vmand %vm1288, %vm1316
          %vm1329 = vmand %vm1289, %vm1317
          %vm1330 = vmand %vm1290, %vm1317
          %vm1331 = vmand %vm1291, %vm1318
          %vm1332 = vmand %vm1292, %vm1318
          %vm1333 = vmand %vm1293, %vm1319
          %vm1334 = vmand %vm1294, %vm1319
          %vm1335 = vmand %vm1295, %vm1320
          %vm1336 = vmand %vm1296, %vm1320
          %v1337 = vsel %vm1321, 1, 0
          %v1338 = vsel %vm1322, 1, 0
          %v1339 = vsel %vm1323, 1, 0
          %v1340 = vsel %vm1324, 1, 0
          %v1341 = vsel %vm1325, 1, 0
          %v1342 = vsel %vm1326, 1, 0
          %v1343 = vsel %vm1327, 1, 0
          %v1344 = vsel %vm1328, 1, 0
          %v1345 = vsel %vm1329, 1, 0
          %v1346 = vsel %vm1330, 1, 0
          %v1347 = vsel %vm1331, 1, 0
          %v1348 = vsel %vm1332, 1, 0
          %v1349 = vsel %vm1333, 1, 0
          %v1350 = vsel %vm1334, 1, 0
          %v1351 = vsel %vm1335, 1, 0
          %v1352 = vsel %vm1336, 1, 0
          %v1353 = vcvt.s32.f32 %v1337
          %v1354 = vcvt.s32.f32 %v1338
          %v1355 = vcvt.s32.f32 %v1339
          %v1356 = vcvt.s32.f32 %v1340
          %v1357 = vcvt.s32.f32 %v1341
          %v1358 = vcvt.s32.f32 %v1342
          %v1359 = vcvt.s32.f32 %v1343
          %v1360 = vcvt.s32.f32 %v1344
          %v1361 = vcvt.s32.f32 %v1345
          %v1362 = vcvt.s32.f32 %v1346
          %v1363 = vcvt.s32.f32 %v1347
          %v1364 = vcvt.s32.f32 %v1348
          %v1365 = vcvt.s32.f32 %v1349
          %v1366 = vcvt.s32.f32 %v1350
          %v1367 = vcvt.s32.f32 %v1351
          %v1368 = vcvt.s32.f32 %v1352
          %v1369 = vpack.c.bf16 %v1355, %v1353
          %v1370 = vpack.c.bf16 %v1356, %v1354
          %v1371 = vpack.c.bf16 %v1359, %v1357
          %v1372 = vpack.c.bf16 %v1360, %v1358
          %v1373 = vpack.c.bf16 %v1363, %v1361
          %v1374 = vpack.c.bf16 %v1364, %v1362
          %v1375 = vpack.c.bf16 %v1367, %v1365
          %v1376 = vpack.c.bf16 %v1368, %v1366
          %1377 = vmatpush.bf16.msra.mxu0 %v560
          %1378 = vmatpush.bf16.msra.mxu0 %v558
          %1379 = vmatpush.bf16.msra.mxu0 %v556
          %1380 = vmatpush.bf16.msra.mxu0 %v554
          %1381 = vmatpush.bf16.msra.mxu0 %v552
          %1382 = vmatpush.bf16.msra.mxu0 %v550
          %1383 = vmatpush.bf16.msra.mxu0 %v548
          %1384 = vmatpush.bf16.msra.mxu0 %v546
          %1385 = vmatmul.bf16.gmra.mxu0 %v1369
          %v1386 = vpop.f32.mrf.mxu0
          %v1387 = vadd.f32 0.0, %v1386
          %v1388 = vpop.f32.mrf.mxu0
          %v1389 = vadd.f32 0.0, %v1388
          %1390 = vmatmul.bf16.gmra.mxu0 %v1371
          %v1391 = vpop.f32.mrf.mxu0
          %v1392 = vadd.f32 0.0, %v1391
          %v1393 = vpop.f32.mrf.mxu0
          %v1394 = vadd.f32 0.0, %v1393
          %1395 = vmatmul.bf16.gmra.mxu0 %v1373
          %v1396 = vpop.f32.mrf.mxu0
          %v1397 = vadd.f32 0.0, %v1396
          %v1398 = vpop.f32.mrf.mxu0
          %v1399 = vadd.f32 0.0, %v1398
          %1400 = vmatmul.bf16.gmra.mxu0 %v1375
          %v1401 = vpop.f32.mrf.mxu0
          %v1402 = vadd.f32 0.0, %v1401
          %v1403 = vpop.f32.mrf.mxu0
          %v1404 = vadd.f32 0.0, %v1403
          %1405 = vdwg.mxu0
          %1406 = vmatpush.bf16.msra.mxu0 %v576
          %1407 = vmatpush.bf16.msra.mxu0 %v574
          %1408 = vmatpush.bf16.msra.mxu0 %v572
          %1409 = vmatpush.bf16.msra.mxu0 %v570
          %1410 = vmatpush.bf16.msra.mxu0 %v568
          %1411 = vmatpush.bf16.msra.mxu0 %v566
          %1412 = vmatpush.bf16.msra.mxu0 %v564
          %1413 = vmatpush.bf16.msra.mxu0 %v562
          %1414 = vmatmul.bf16.gmra.mxu0 %v1370
          %v1415 = vpop.f32.mrf.mxu0
          %v1416 = vadd.f32 %v1387, %v1415
          %v1417 = vpop.f32.mrf.mxu0
          %v1418 = vadd.f32 %v1389, %v1417
          %1419 = vmatmul.bf16.gmra.mxu0 %v1372
          %v1420 = vpop.f32.mrf.mxu0
          %v1421 = vadd.f32 %v1392, %v1420
          %v1422 = vpop.f32.mrf.mxu0
          %v1423 = vadd.f32 %v1394, %v1422
          %1424 = vmatmul.bf16.gmra.mxu0 %v1374
          %v1425 = vpop.f32.mrf.mxu0
          %v1426 = vadd.f32 %v1397, %v1425
          %v1427 = vpop.f32.mrf.mxu0
          %v1428 = vadd.f32 %v1399, %v1427
          %1429 = vmatmul.bf16.gmra.mxu0 %v1376
          %v1430 = vpop.f32.mrf.mxu0
          %v1431 = vadd.f32 %v1402, %v1430
          %v1432 = vpop.f32.mrf.mxu0
          %v1433 = vadd.f32 %v1404, %v1432
          %1434 = vdwg.mxu0
          %1435 = vmatpush.bf16.msra.mxu0 %v561
          %1436 = vmatpush.bf16.msra.mxu0 %v559
          %1437 = vmatpush.bf16.msra.mxu0 %v557
          %1438 = vmatpush.bf16.msra.mxu0 %v555
          %1439 = vmatpush.bf16.msra.mxu0 %v553
          %1440 = vmatpush.bf16.msra.mxu0 %v551
          %1441 = vmatpush.bf16.msra.mxu0 %v549
          %1442 = vmatpush.bf16.msra.mxu0 %v547
          %1443 = vmatmul.bf16.gmra.mxu0 %v1369
          %v1444 = vpop.f32.mrf.mxu0
          %v1445 = vadd.f32 0.0, %v1444
          %v1446 = vpop.f32.mrf.mxu0
          %v1447 = vadd.f32 0.0, %v1446
          %1448 = vmatmul.bf16.gmra.mxu0 %v1371
          %v1449 = vpop.f32.mrf.mxu0
          %v1450 = vadd.f32 0.0, %v1449
          %v1451 = vpop.f32.mrf.mxu0
          %v1452 = vadd.f32 0.0, %v1451
          %1453 = vmatmul.bf16.gmra.mxu0 %v1373
          %v1454 = vpop.f32.mrf.mxu0
          %v1455 = vadd.f32 0.0, %v1454
          %v1456 = vpop.f32.mrf.mxu0
          %v1457 = vadd.f32 0.0, %v1456
          %1458 = vmatmul.bf16.gmra.mxu0 %v1375
          %v1459 = vpop.f32.mrf.mxu0
          %v1460 = vadd.f32 0.0, %v1459
          %v1461 = vpop.f32.mrf.mxu0
          %v1462 = vadd.f32 0.0, %v1461
          %1463 = vdwg.mxu0
          %1464 = vmatpush.bf16.msra.mxu0 %v577
          %1465 = vmatpush.bf16.msra.mxu0 %v575
          %1466 = vmatpush.bf16.msra.mxu0 %v573
          %1467 = vmatpush.bf16.msra.mxu0 %v571
          %1468 = vmatpush.bf16.msra.mxu0 %v569
          %1469 = vmatpush.bf16.msra.mxu0 %v567
          %1470 = vmatpush.bf16.msra.mxu0 %v565
          %1471 = vmatpush.bf16.msra.mxu0 %v563
          %1472 = vmatmul.bf16.gmra.mxu0 %v1370
          %v1473 = vpop.f32.mrf.mxu0
          %v1474 = vadd.f32 %v1445, %v1473
          %v1475 = vpop.f32.mrf.mxu0
          %v1476 = vadd.f32 %v1447, %v1475
          %1477 = vmatmul.bf16.gmra.mxu0 %v1372
          %v1478 = vpop.f32.mrf.mxu0
          %v1479 = vadd.f32 %v1450, %v1478
          %v1480 = vpop.f32.mrf.mxu0
          %v1481 = vadd.f32 %v1452, %v1480
          %1482 = vmatmul.bf16.gmra.mxu0 %v1374
          %v1483 = vpop.f32.mrf.mxu0
          %v1484 = vadd.f32 %v1455, %v1483
          %v1485 = vpop.f32.mrf.mxu0
          %v1486 = vadd.f32 %v1457, %v1485
          %1487 = vmatmul.bf16.gmra.mxu0 %v1376
          %v1488 = vpop.f32.mrf.mxu0
          %v1489 = vadd.f32 %v1460, %v1488
          %v1490 = vpop.f32.mrf.mxu0
          %v1491 = vadd.f32 %v1462, %v1490
          %1492 = vdwg.mxu0
          %v1493 = vadd.f32 %v1416, %v1474
          %1494 = vadd.xlane.f32.xlu0 %v1493
          %v1495 = vpop.xlane.xlu0 %1494
          %v1496 = vadd.f32 %v1418, %v1476
          %1497 = vadd.xlane.f32.xlu0 %v1496
          %v1498 = vpop.xlane.xlu0 %1497
          %v1499 = vadd.f32 %v1421, %v1479
          %1500 = vadd.xlane.f32.xlu0 %v1499
          %v1501 = vpop.xlane.xlu0 %1500
          %v1502 = vadd.f32 %v1423, %v1481
          %1503 = vadd.xlane.f32.xlu0 %v1502
          %v1504 = vpop.xlane.xlu0 %1503
          %v1505 = vadd.f32 %v1426, %v1484
          %1506 = vadd.xlane.f32.xlu0 %v1505
          %v1507 = vpop.xlane.xlu0 %1506
          %v1508 = vadd.f32 %v1428, %v1486
          %1509 = vadd.xlane.f32.xlu0 %v1508
          %v1510 = vpop.xlane.xlu0 %1509
          %v1511 = vadd.f32 %v1431, %v1489
          %1512 = vadd.xlane.f32.xlu0 %v1511
          %v1513 = vpop.xlane.xlu0 %1512
          %v1514 = vadd.f32 %v1433, %v1491
          %1515 = vadd.xlane.f32.xlu0 %v1514
          %v1516 = vpop.xlane.xlu0 %1515
          %v1517 = vadd.f32 %v1495, %v717
          %v1518 = vadd.f32 %v1495, %v718
          %v1519 = vadd.f32 %v1498, %v717
          %v1520 = vadd.f32 %v1498, %v718
          %v1521 = vadd.f32 %v1501, %v717
          %v1522 = vadd.f32 %v1501, %v718
          %v1523 = vadd.f32 %v1504, %v717
          %v1524 = vadd.f32 %v1504, %v718
          %v1525 = vadd.f32 %v1507, %v717
          %v1526 = vadd.f32 %v1507, %v718
          %v1527 = vadd.f32 %v1510, %v717
          %v1528 = vadd.f32 %v1510, %v718
          %v1529 = vadd.f32 %v1513, %v717
          %v1530 = vadd.f32 %v1513, %v718
          %v1531 = vadd.f32 %v1516, %v717
          %v1532 = vadd.f32 %v1516, %v718
          %v1533 = vsub.f32 %v1517, %v1416
          %v1534 = vsub.f32 %v1518, %v1474
          %v1535 = vsub.f32 %v1519, %v1418
          %v1536 = vsub.f32 %v1520, %v1476
          %v1537 = vsub.f32 %v1521, %v1421
          %v1538 = vsub.f32 %v1522, %v1479
          %v1539 = vsub.f32 %v1523, %v1423
          %v1540 = vsub.f32 %v1524, %v1481
          %v1541 = vsub.f32 %v1525, %v1426
          %v1542 = vsub.f32 %v1526, %v1484
          %v1543 = vsub.f32 %v1527, %v1428
          %v1544 = vsub.f32 %v1528, %v1486
          %v1545 = vsub.f32 %v1529, %v1431
          %v1546 = vsub.f32 %v1530, %v1489
          %v1547 = vsub.f32 %v1531, %v1433
          %v1548 = vsub.f32 %v1532, %v1491
          %v1549 = vmax.f32 %v1533, 1.0
          %v1550 = vmax.f32 %v1534, 1.0
          %v1551 = vmax.f32 %v1535, 1.0
          %v1552 = vmax.f32 %v1536, 1.0
          %v1553 = vmax.f32 %v1537, 1.0
          %v1554 = vmax.f32 %v1538, 1.0
          %v1555 = vmax.f32 %v1539, 1.0
          %v1556 = vmax.f32 %v1540, 1.0
          %v1557 = vmax.f32 %v1541, 1.0
          %v1558 = vmax.f32 %v1542, 1.0
          %v1559 = vmax.f32 %v1543, 1.0
          %v1560 = vmax.f32 %v1544, 1.0
          %v1561 = vmax.f32 %v1545, 1.0
          %v1562 = vmax.f32 %v1546, 1.0
          %v1563 = vmax.f32 %v1547, 1.0
          %v1564 = vmax.f32 %v1548, 1.0
          %v1565 = vrcp.pop %v1549
          %v1566 = vmul.f32 %v1549, %v1565
          %v1567 = vsub.f32 1.0, %v1566
          %v1568 = vmul.f32 %v1565, %v1567
          %v1569 = vadd.f32 %v1565, %v1568
          %vm1570 = vweird.f32 %v1549
          %vm1571 = vweird.f32 %v1565
          %vm1572 = vmor %vm1570, %vm1571
          %v1573 = vsel %vm1572, %v1565, %v1569
          %v1574 = vand.u32 2147483647, %v1549
          %vm1575 = vcmp.eq.f32.partialorder %v1574, 8.507059e+37
          %v1576 = vand.u32 %v1549, 2147483648
          %v1577 = vor.u32 1.1754944e-38, %v1576
          %v1578 = vsel %vm1575, %v1577, %v1573
          %v1579 = vmul.f32 %v1416, %v1578
          %v1580 = vrcp.pop %v1550
          %v1581 = vmul.f32 %v1550, %v1580
          %v1582 = vsub.f32 1.0, %v1581
          %v1583 = vmul.f32 %v1580, %v1582
          %v1584 = vadd.f32 %v1580, %v1583
          %vm1585 = vweird.f32 %v1550
          %vm1586 = vweird.f32 %v1580
          %vm1587 = vmor %vm1585, %vm1586
          %v1588 = vsel %vm1587, %v1580, %v1584
          %v1589 = vand.u32 2147483647, %v1550
          %vm1590 = vcmp.eq.f32.partialorder %v1589, 8.507059e+37
          %v1591 = vand.u32 %v1550, 2147483648
          %v1592 = vor.u32 1.1754944e-38, %v1591
          %v1593 = vsel %vm1590, %v1592, %v1588
          %v1594 = vmul.f32 %v1474, %v1593
          %v1595 = vrcp.pop %v1551
          %v1596 = vmul.f32 %v1551, %v1595
          %v1597 = vsub.f32 1.0, %v1596
          %v1598 = vmul.f32 %v1595, %v1597
          %v1599 = vadd.f32 %v1595, %v1598
          %vm1600 = vweird.f32 %v1551
          %vm1601 = vweird.f32 %v1595
          %vm1602 = vmor %vm1600, %vm1601
          %v1603 = vsel %vm1602, %v1595, %v1599
          %v1604 = vand.u32 2147483647, %v1551
          %vm1605 = vcmp.eq.f32.partialorder %v1604, 8.507059e+37
          %v1606 = vand.u32 %v1551, 2147483648
          %v1607 = vor.u32 1.1754944e-38, %v1606
          %v1608 = vsel %vm1605, %v1607, %v1603
          %v1609 = vmul.f32 %v1418, %v1608
          %v1610 = vrcp.pop %v1552
          %v1611 = vmul.f32 %v1552, %v1610
          %v1612 = vsub.f32 1.0, %v1611
          %v1613 = vmul.f32 %v1610, %v1612
          %v1614 = vadd.f32 %v1610, %v1613
          %vm1615 = vweird.f32 %v1552
          %vm1616 = vweird.f32 %v1610
          %vm1617 = vmor %vm1615, %vm1616
          %v1618 = vsel %vm1617, %v1610, %v1614
          %v1619 = vand.u32 2147483647, %v1552
          %vm1620 = vcmp.eq.f32.partialorder %v1619, 8.507059e+37
          %v1621 = vand.u32 %v1552, 2147483648
          %v1622 = vor.u32 1.1754944e-38, %v1621
          %v1623 = vsel %vm1620, %v1622, %v1618
          %v1624 = vmul.f32 %v1476, %v1623
          %v1625 = vrcp.pop %v1553
          %v1626 = vmul.f32 %v1553, %v1625
          %v1627 = vsub.f32 1.0, %v1626
          %v1628 = vmul.f32 %v1625, %v1627
          %v1629 = vadd.f32 %v1625, %v1628
          %vm1630 = vweird.f32 %v1553
          %vm1631 = vweird.f32 %v1625
          %vm1632 = vmor %vm1630, %vm1631
          %v1633 = vsel %vm1632, %v1625, %v1629
          %v1634 = vand.u32 2147483647, %v1553
          %vm1635 = vcmp.eq.f32.partialorder %v1634, 8.507059e+37
          %v1636 = vand.u32 %v1553, 2147483648
          %v1637 = vor.u32 1.1754944e-38, %v1636
          %v1638 = vsel %vm1635, %v1637, %v1633
          %v1639 = vmul.f32 %v1421, %v1638
          %v1640 = vrcp.pop %v1554
          %v1641 = vmul.f32 %v1554, %v1640
          %v1642 = vsub.f32 1.0, %v1641
          %v1643 = vmul.f32 %v1640, %v1642
          %v1644 = vadd.f32 %v1640, %v1643
          %vm1645 = vweird.f32 %v1554
          %vm1646 = vweird.f32 %v1640
          %vm1647 = vmor %vm1645, %vm1646
          %v1648 = vsel %vm1647, %v1640, %v1644
          %v1649 = vand.u32 2147483647, %v1554
          %vm1650 = vcmp.eq.f32.partialorder %v1649, 8.507059e+37
          %v1651 = vand.u32 %v1554, 2147483648
          %v1652 = vor.u32 1.1754944e-38, %v1651
          %v1653 = vsel %vm1650, %v1652, %v1648
          %v1654 = vmul.f32 %v1479, %v1653
          %v1655 = vrcp.pop %v1555
          %v1656 = vmul.f32 %v1555, %v1655
          %v1657 = vsub.f32 1.0, %v1656
          %v1658 = vmul.f32 %v1655, %v1657
          %v1659 = vadd.f32 %v1655, %v1658
          %vm1660 = vweird.f32 %v1555
          %vm1661 = vweird.f32 %v1655
          %vm1662 = vmor %vm1660, %vm1661
          %v1663 = vsel %vm1662, %v1655, %v1659
          %v1664 = vand.u32 2147483647, %v1555
          %vm1665 = vcmp.eq.f32.partialorder %v1664, 8.507059e+37
          %v1666 = vand.u32 %v1555, 2147483648
          %v1667 = vor.u32 1.1754944e-38, %v1666
          %v1668 = vsel %vm1665, %v1667, %v1663
          %v1669 = vmul.f32 %v1423, %v1668
          %v1670 = vrcp.pop %v1556
          %v1671 = vmul.f32 %v1556, %v1670
          %v1672 = vsub.f32 1.0, %v1671
          %v1673 = vmul.f32 %v1670, %v1672
          %v1674 = vadd.f32 %v1670, %v1673
          %vm1675 = vweird.f32 %v1556
          %vm1676 = vweird.f32 %v1670
          %vm1677 = vmor %vm1675, %vm1676
          %v1678 = vsel %vm1677, %v1670, %v1674
          %v1679 = vand.u32 2147483647, %v1556
          %vm1680 = vcmp.eq.f32.partialorder %v1679, 8.507059e+37
          %v1681 = vand.u32 %v1556, 2147483648
          %v1682 = vor.u32 1.1754944e-38, %v1681
          %v1683 = vsel %vm1680, %v1682, %v1678
          %v1684 = vmul.f32 %v1481, %v1683
          %v1685 = vrcp.pop %v1557
          %v1686 = vmul.f32 %v1557, %v1685
          %v1687 = vsub.f32 1.0, %v1686
          %v1688 = vmul.f32 %v1685, %v1687
          %v1689 = vadd.f32 %v1685, %v1688
          %vm1690 = vweird.f32 %v1557
          %vm1691 = vweird.f32 %v1685
          %vm1692 = vmor %vm1690, %vm1691
          %v1693 = vsel %vm1692, %v1685, %v1689
          %v1694 = vand.u32 2147483647, %v1557
          %vm1695 = vcmp.eq.f32.partialorder %v1694, 8.507059e+37
          %v1696 = vand.u32 %v1557, 2147483648
          %v1697 = vor.u32 1.1754944e-38, %v1696
          %v1698 = vsel %vm1695, %v1697, %v1693
          %v1699 = vmul.f32 %v1426, %v1698
          %v1700 = vrcp.pop %v1558
          %v1701 = vmul.f32 %v1558, %v1700
          %v1702 = vsub.f32 1.0, %v1701
          %v1703 = vmul.f32 %v1700, %v1702
          %v1704 = vadd.f32 %v1700, %v1703
          %vm1705 = vweird.f32 %v1558
          %vm1706 = vweird.f32 %v1700
          %vm1707 = vmor %vm1705, %vm1706
          %v1708 = vsel %vm1707, %v1700, %v1704
          %v1709 = vand.u32 2147483647, %v1558
          %vm1710 = vcmp.eq.f32.partialorder %v1709, 8.507059e+37
          %v1711 = vand.u32 %v1558, 2147483648
          %v1712 = vor.u32 1.1754944e-38, %v1711
          %v1713 = vsel %vm1710, %v1712, %v1708
          %v1714 = vmul.f32 %v1484, %v1713
          %v1715 = vrcp.pop %v1559
          %v1716 = vmul.f32 %v1559, %v1715
          %v1717 = vsub.f32 1.0, %v1716
          %v1718 = vmul.f32 %v1715, %v1717
          %v1719 = vadd.f32 %v1715, %v1718
          %vm1720 = vweird.f32 %v1559
          %vm1721 = vweird.f32 %v1715
          %vm1722 = vmor %vm1720, %vm1721
          %v1723 = vsel %vm1722, %v1715, %v1719
          %v1724 = vand.u32 2147483647, %v1559
          %vm1725 = vcmp.eq.f32.partialorder %v1724, 8.507059e+37
          %v1726 = vand.u32 %v1559, 2147483648
          %v1727 = vor.u32 1.1754944e-38, %v1726
          %v1728 = vsel %vm1725, %v1727, %v1723
          %v1729 = vmul.f32 %v1428, %v1728
          %v1730 = vrcp.pop %v1560
          %v1731 = vmul.f32 %v1560, %v1730
          %v1732 = vsub.f32 1.0, %v1731
          %v1733 = vmul.f32 %v1730, %v1732
          %v1734 = vadd.f32 %v1730, %v1733
          %vm1735 = vweird.f32 %v1560
          %vm1736 = vweird.f32 %v1730
          %vm1737 = vmor %vm1735, %vm1736
          %v1738 = vsel %vm1737, %v1730, %v1734
          %v1739 = vand.u32 2147483647, %v1560
          %vm1740 = vcmp.eq.f32.partialorder %v1739, 8.507059e+37
          %v1741 = vand.u32 %v1560, 2147483648
          %v1742 = vor.u32 1.1754944e-38, %v1741
          %v1743 = vsel %vm1740, %v1742, %v1738
          %v1744 = vmul.f32 %v1486, %v1743
          %v1745 = vrcp.pop %v1561
          %v1746 = vmul.f32 %v1561, %v1745
          %v1747 = vsub.f32 1.0, %v1746
          %v1748 = vmul.f32 %v1745, %v1747
          %v1749 = vadd.f32 %v1745, %v1748
          %vm1750 = vweird.f32 %v1561
          %vm1751 = vweird.f32 %v1745
          %vm1752 = vmor %vm1750, %vm1751
          %v1753 = vsel %vm1752, %v1745, %v1749
          %v1754 = vand.u32 2147483647, %v1561
          %vm1755 = vcmp.eq.f32.partialorder %v1754, 8.507059e+37
          %v1756 = vand.u32 %v1561, 2147483648
          %v1757 = vor.u32 1.1754944e-38, %v1756
          %v1758 = vsel %vm1755, %v1757, %v1753
          %v1759 = vmul.f32 %v1431, %v1758
          %v1760 = vrcp.pop %v1562
          %v1761 = vmul.f32 %v1562, %v1760
          %v1762 = vsub.f32 1.0, %v1761
          %v1763 = vmul.f32 %v1760, %v1762
          %v1764 = vadd.f32 %v1760, %v1763
          %vm1765 = vweird.f32 %v1562
          %vm1766 = vweird.f32 %v1760
          %vm1767 = vmor %vm1765, %vm1766
          %v1768 = vsel %vm1767, %v1760, %v1764
          %v1769 = vand.u32 2147483647, %v1562
          %vm1770 = vcmp.eq.f32.partialorder %v1769, 8.507059e+37
          %v1771 = vand.u32 %v1562, 2147483648
          %v1772 = vor.u32 1.1754944e-38, %v1771
          %v1773 = vsel %vm1770, %v1772, %v1768
          %v1774 = vmul.f32 %v1489, %v1773
          %v1775 = vrcp.pop %v1563
          %v1776 = vmul.f32 %v1563, %v1775
          %v1777 = vsub.f32 1.0, %v1776
          %v1778 = vmul.f32 %v1775, %v1777
          %v1779 = vadd.f32 %v1775, %v1778
          %vm1780 = vweird.f32 %v1563
          %vm1781 = vweird.f32 %v1775
          %vm1782 = vmor %vm1780, %vm1781
          %v1783 = vsel %vm1782, %v1775, %v1779
          %v1784 = vand.u32 2147483647, %v1563
          %vm1785 = vcmp.eq.f32.partialorder %v1784, 8.507059e+37
          %v1786 = vand.u32 %v1563, 2147483648
          %v1787 = vor.u32 1.1754944e-38, %v1786
          %v1788 = vsel %vm1785, %v1787, %v1783
          %v1789 = vmul.f32 %v1433, %v1788
          %v1790 = vrcp.pop %v1564
          %v1791 = vmul.f32 %v1564, %v1790
          %v1792 = vsub.f32 1.0, %v1791
          %v1793 = vmul.f32 %v1790, %v1792
          %v1794 = vadd.f32 %v1790, %v1793
          %vm1795 = vweird.f32 %v1564
          %vm1796 = vweird.f32 %v1790
          %vm1797 = vmor %vm1795, %vm1796
          %v1798 = vsel %vm1797, %v1790, %v1794
          %v1799 = vand.u32 2147483647, %v1564
          %vm1800 = vcmp.eq.f32.partialorder %v1799, 8.507059e+37
          %v1801 = vand.u32 %v1564, 2147483648
          %v1802 = vor.u32 1.1754944e-38, %v1801
          %v1803 = vsel %vm1800, %v1802, %v1798
          %v1804 = vmul.f32 %v1491, %v1803
          %v1805 = vmax.f32 %v1579, %v1639
          %v1806 = vmax.f32 %v1609, %v1669
          %v1807 = vmax.f32 %v1805, %v1699
          %v1808 = vmax.f32 %v1806, %v1729
          %v1809 = vmax.f32 %v1807, %v1759
          %v1810 = vmax.f32 %v1808, %v1789
          %v1811 = vmax.f32 %v1809, %v1810
          %v1812 = vrot.slane %v1811, 4
          %v1813 = vmax.f32 %v1811, %v1812
          %v1814 = vrot.slane %v1813, 2
          %v1815 = vmax.f32 %v1813, %v1814
          %v1816 = vrot.slane %v1815, 1
          %v1817 = vmax.f32 %v1815, %v1816
          %v1818 = vmax.f32 %v1594, %v1654
          %v1819 = vmax.f32 %v1624, %v1684
          %v1820 = vmax.f32 %v1818, %v1714
          %v1821 = vmax.f32 %v1819, %v1744
          %v1822 = vmax.f32 %v1820, %v1774
          %v1823 = vmax.f32 %v1821, %v1804
          %v1824 = vmax.f32 %v1822, %v1823
          %v1825 = vrot.slane %v1824, 4
          %v1826 = vmax.f32 %v1824, %v1825
          %v1827 = vrot.slane %v1826, 2
          %v1828 = vmax.f32 %v1826, %v1827
          %v1829 = vrot.slane %v1828, 1
          %v1830 = vmax.f32 %v1828, %v1829
          %v1831 = vmax.f32 %v1271, %v1817
          %v1832 = vmax.f32 %v1272, %v1830
          %v1833 = vadd.s32 %v173, 128
          %v1834 = vadd.s32 %v174, 128
          %v1835 = vadd.s32 %v175, 128
          %v1836 = vadd.s32 %v176, 128
          %v1837 = vadd.s32 %v177, 128
          %v1838 = vadd.s32 %v178, 128
          %v1839 = vadd.s32 %v179, 128
          %v1840 = vadd.s32 %v180, 128
          %vm1841 = vcmp.eq.s32.totalorder %v719, %v1833
          %vm1842 = vcmp.eq.s32.totalorder %v720, %v1833
          %vm1843 = vcmp.eq.s32.totalorder %v719, %v1834
          %vm1844 = vcmp.eq.s32.totalorder %v720, %v1834
          %vm1845 = vcmp.eq.s32.totalorder %v719, %v1835
          %vm1846 = vcmp.eq.s32.totalorder %v720, %v1835
          %vm1847 = vcmp.eq.s32.totalorder %v719, %v1836
          %vm1848 = vcmp.eq.s32.totalorder %v720, %v1836
          %vm1849 = vcmp.eq.s32.totalorder %v719, %v1837
          %vm1850 = vcmp.eq.s32.totalorder %v720, %v1837
          %vm1851 = vcmp.eq.s32.totalorder %v719, %v1838
          %vm1852 = vcmp.eq.s32.totalorder %v720, %v1838
          %vm1853 = vcmp.eq.s32.totalorder %v719, %v1839
          %vm1854 = vcmp.eq.s32.totalorder %v720, %v1839
          %vm1855 = vcmp.eq.s32.totalorder %v719, %v1840
          %vm1856 = vcmp.eq.s32.totalorder %v720, %v1840
          %vm1857 = vcmp.gt.s32.totalorder %v1833, 0
          %vm1858 = vcmp.gt.s32.totalorder %v1834, 0
          %vm1859 = vcmp.gt.s32.totalorder %v1835, 0
          %vm1860 = vcmp.gt.s32.totalorder %v1836, 0
          %vm1861 = vcmp.gt.s32.totalorder %v1837, 0
          %vm1862 = vcmp.gt.s32.totalorder %v1838, 0
          %vm1863 = vcmp.gt.s32.totalorder %v1839, 0
          %vm1864 = vcmp.gt.s32.totalorder %v1840, 0
          %v1865 = vsel %vm1857, 1, 0
          %v1866 = vsel %vm1858, 1, 0
          %v1867 = vsel %vm1859, 1, 0
          %v1868 = vsel %vm1860, 1, 0
          %v1869 = vsel %vm1861, 1, 0
          %v1870 = vsel %vm1862, 1, 0
          %v1871 = vsel %vm1863, 1, 0
          %v1872 = vsel %vm1864, 1, 0
          %vm1873 = vcmp.eq.s32.totalorder %v1865, 1
          %vm1874 = vcmp.eq.s32.totalorder %v1866, 1
          %vm1875 = vcmp.eq.s32.totalorder %v1867, 1
          %vm1876 = vcmp.eq.s32.totalorder %v1868, 1
          %vm1877 = vcmp.eq.s32.totalorder %v1869, 1
          %vm1878 = vcmp.eq.s32.totalorder %v1870, 1
          %vm1879 = vcmp.eq.s32.totalorder %v1871, 1
          %vm1880 = vcmp.eq.s32.totalorder %v1872, 1
          %vm1881 = vmand %vm1841, %vm1873
          %vm1882 = vmand %vm1842, %vm1873
          %vm1883 = vmand %vm1843, %vm1874
          %vm1884 = vmand %vm1844, %vm1874
          %vm1885 = vmand %vm1845, %vm1875
          %vm1886 = vmand %vm1846, %vm1875
          %vm1887 = vmand %vm1847, %vm1876
          %vm1888 = vmand %vm1848, %vm1876
          %vm1889 = vmand %vm1849, %vm1877
          %vm1890 = vmand %vm1850, %vm1877
          %vm1891 = vmand %vm1851, %vm1878
          %vm1892 = vmand %vm1852, %vm1878
          %vm1893 = vmand %vm1853, %vm1879
          %vm1894 = vmand %vm1854, %vm1879
          %vm1895 = vmand %vm1855, %vm1880
          %vm1896 = vmand %vm1856, %vm1880
          %v1897 = vsel %vm1881, 1, 0
          %v1898 = vsel %vm1882, 1, 0
          %v1899 = vsel %vm1883, 1, 0
          %v1900 = vsel %vm1884, 1, 0
          %v1901 = vsel %vm1885, 1, 0
          %v1902 = vsel %vm1886, 1, 0
          %v1903 = vsel %vm1887, 1, 0
          %v1904 = vsel %vm1888, 1, 0
          %v1905 = vsel %vm1889, 1, 0
          %v1906 = vsel %vm1890, 1, 0
          %v1907 = vsel %vm1891, 1, 0
          %v1908 = vsel %vm1892, 1, 0
          %v1909 = vsel %vm1893, 1, 0
          %v1910 = vsel %vm1894, 1, 0
          %v1911 = vsel %vm1895, 1, 0
          %v1912 = vsel %vm1896, 1, 0
          %v1913 = vcvt.s32.f32 %v1897
          %v1914 = vcvt.s32.f32 %v1898
          %v1915 = vcvt.s32.f32 %v1899
          %v1916 = vcvt.s32.f32 %v1900
          %v1917 = vcvt.s32.f32 %v1901
          %v1918 = vcvt.s32.f32 %v1902
          %v1919 = vcvt.s32.f32 %v1903
          %v1920 = vcvt.s32.f32 %v1904
          %v1921 = vcvt.s32.f32 %v1905
          %v1922 = vcvt.s32.f32 %v1906
          %v1923 = vcvt.s32.f32 %v1907
          %v1924 = vcvt.s32.f32 %v1908
          %v1925 = vcvt.s32.f32 %v1909
          %v1926 = vcvt.s32.f32 %v1910
          %v1927 = vcvt.s32.f32 %v1911
          %v1928 = vcvt.s32.f32 %v1912
          %v1929 = vpack.c.bf16 %v1915, %v1913
          %v1930 = vpack.c.bf16 %v1916, %v1914
          %v1931 = vpack.c.bf16 %v1919, %v1917
          %v1932 = vpack.c.bf16 %v1920, %v1918
          %v1933 = vpack.c.bf16 %v1923, %v1921
          %v1934 = vpack.c.bf16 %v1924, %v1922
          %v1935 = vpack.c.bf16 %v1927, %v1925
          %v1936 = vpack.c.bf16 %v1928, %v1926
          %1937 = vmatpush.bf16.msra.mxu0 %v560
          %1938 = vmatpush.bf16.msra.mxu0 %v558
          %1939 = vmatpush.bf16.msra.mxu0 %v556
          %1940 = vmatpush.bf16.msra.mxu0 %v554
          %1941 = vmatpush.bf16.msra.mxu0 %v552
          %1942 = vmatpush.bf16.msra.mxu0 %v550
          %1943 = vmatpush.bf16.msra.mxu0 %v548
          %1944 = vmatpush.bf16.msra.mxu0 %v546
          %1945 = vmatmul.bf16.gmra.mxu0 %v1929
          %v1946 = vpop.f32.mrf.mxu0
          %v1947 = vadd.f32 0.0, %v1946
          %v1948 = vpop.f32.mrf.mxu0
          %v1949 = vadd.f32 0.0, %v1948
          %1950 = vmatmul.bf16.gmra.mxu0 %v1931
          %v1951 = vpop.f32.mrf.mxu0
          %v1952 = vadd.f32 0.0, %v1951
          %v1953 = vpop.f32.mrf.mxu0
          %v1954 = vadd.f32 0.0, %v1953
          %1955 = vmatmul.bf16.gmra.mxu0 %v1933
          %v1956 = vpop.f32.mrf.mxu0
          %v1957 = vadd.f32 0.0, %v1956
          %v1958 = vpop.f32.mrf.mxu0
          %v1959 = vadd.f32 0.0, %v1958
          %1960 = vmatmul.bf16.gmra.mxu0 %v1935
          %v1961 = vpop.f32.mrf.mxu0
          %v1962 = vadd.f32 0.0, %v1961
          %v1963 = vpop.f32.mrf.mxu0
          %v1964 = vadd.f32 0.0, %v1963
          %1965 = vdwg.mxu0
          %1966 = vmatpush.bf16.msra.mxu0 %v576
          %1967 = vmatpush.bf16.msra.mxu0 %v574
          %1968 = vmatpush.bf16.msra.mxu0 %v572
          %1969 = vmatpush.bf16.msra.mxu0 %v570
          %1970 = vmatpush.bf16.msra.mxu0 %v568
          %1971 = vmatpush.bf16.msra.mxu0 %v566
          %1972 = vmatpush.bf16.msra.mxu0 %v564
          %1973 = vmatpush.bf16.msra.mxu0 %v562
          %1974 = vmatmul.bf16.gmra.mxu0 %v1930
          %v1975 = vpop.f32.mrf.mxu0
          %v1976 = vadd.f32 %v1947, %v1975
          %v1977 = vpop.f32.mrf.mxu0
          %v1978 = vadd.f32 %v1949, %v1977
          %1979 = vmatmul.bf16.gmra.mxu0 %v1932
          %v1980 = vpop.f32.mrf.mxu0
          %v1981 = vadd.f32 %v1952, %v1980
          %v1982 = vpop.f32.mrf.mxu0
          %v1983 = vadd.f32 %v1954, %v1982
          %1984 = vmatmul.bf16.gmra.mxu0 %v1934
          %v1985 = vpop.f32.mrf.mxu0
          %v1986 = vadd.f32 %v1957, %v1985
          %v1987 = vpop.f32.mrf.mxu0
          %v1988 = vadd.f32 %v1959, %v1987
          %1989 = vmatmul.bf16.gmra.mxu0 %v1936
          %v1990 = vpop.f32.mrf.mxu0
          %v1991 = vadd.f32 %v1962, %v1990
          %v1992 = vpop.f32.mrf.mxu0
          %v1993 = vadd.f32 %v1964, %v1992
          %1994 = vdwg.mxu0
          %1995 = vmatpush.bf16.msra.mxu0 %v561
          %1996 = vmatpush.bf16.msra.mxu0 %v559
          %1997 = vmatpush.bf16.msra.mxu0 %v557
          %1998 = vmatpush.bf16.msra.mxu0 %v555
          %1999 = vmatpush.bf16.msra.mxu0 %v553
          %2000 = vmatpush.bf16.msra.mxu0 %v551
          %2001 = vmatpush.bf16.msra.mxu0 %v549
          %2002 = vmatpush.bf16.msra.mxu0 %v547
          %2003 = vmatmul.bf16.gmra.mxu0 %v1929
          %v2004 = vpop.f32.mrf.mxu0
          %v2005 = vadd.f32 0.0, %v2004
          %v2006 = vpop.f32.mrf.mxu0
          %v2007 = vadd.f32 0.0, %v2006
          %2008 = vmatmul.bf16.gmra.mxu0 %v1931
          %v2009 = vpop.f32.mrf.mxu0
          %v2010 = vadd.f32 0.0, %v2009
          %v2011 = vpop.f32.mrf.mxu0
          %v2012 = vadd.f32 0.0, %v2011
          %2013 = vmatmul.bf16.gmra.mxu0 %v1933
          %v2014 = vpop.f32.mrf.mxu0
          %v2015 = vadd.f32 0.0, %v2014
          %v2016 = vpop.f32.mrf.mxu0
          %v2017 = vadd.f32 0.0, %v2016
          %2018 = vmatmul.bf16.gmra.mxu0 %v1935
          %v2019 = vpop.f32.mrf.mxu0
          %v2020 = vadd.f32 0.0, %v2019
          %v2021 = vpop.f32.mrf.mxu0
          %v2022 = vadd.f32 0.0, %v2021
          %2023 = vdwg.mxu0
          %2024 = vmatpush.bf16.msra.mxu0 %v577
          %2025 = vmatpush.bf16.msra.mxu0 %v575
          %2026 = vmatpush.bf16.msra.mxu0 %v573
          %2027 = vmatpush.bf16.msra.mxu0 %v571
          %2028 = vmatpush.bf16.msra.mxu0 %v569
          %2029 = vmatpush.bf16.msra.mxu0 %v567
          %2030 = vmatpush.bf16.msra.mxu0 %v565
          %2031 = vmatpush.bf16.msra.mxu0 %v563
          %2032 = vmatmul.bf16.gmra.mxu0 %v1930
          %v2033 = vpop.f32.mrf.mxu0
          %v2034 = vadd.f32 %v2005, %v2033
          %v2035 = vpop.f32.mrf.mxu0
          %v2036 = vadd.f32 %v2007, %v2035
          %2037 = vmatmul.bf16.gmra.mxu0 %v1932
          %v2038 = vpop.f32.mrf.mxu0
          %v2039 = vadd.f32 %v2010, %v2038
          %v2040 = vpop.f32.mrf.mxu0
          %v2041 = vadd.f32 %v2012, %v2040
          %2042 = vmatmul.bf16.gmra.mxu0 %v1934
          %v2043 = vpop.f32.mrf.mxu0
          %v2044 = vadd.f32 %v2015, %v2043
          %v2045 = vpop.f32.mrf.mxu0
          %v2046 = vadd.f32 %v2017, %v2045
          %2047 = vmatmul.bf16.gmra.mxu0 %v1936
          %v2048 = vpop.f32.mrf.mxu0
          %v2049 = vadd.f32 %v2020, %v2048
          %v2050 = vpop.f32.mrf.mxu0
          %v2051 = vadd.f32 %v2022, %v2050
          %2052 = vdwg.mxu0
          %v2053 = vadd.f32 %v1976, %v2034
          %2054 = vadd.xlane.f32.xlu0 %v2053
          %v2055 = vpop.xlane.xlu0 %2054
          %v2056 = vadd.f32 %v1978, %v2036
          %2057 = vadd.xlane.f32.xlu0 %v2056
          %v2058 = vpop.xlane.xlu0 %2057
          %v2059 = vadd.f32 %v1981, %v2039
          %2060 = vadd.xlane.f32.xlu0 %v2059
          %v2061 = vpop.xlane.xlu0 %2060
          %v2062 = vadd.f32 %v1983, %v2041
          %2063 = vadd.xlane.f32.xlu0 %v2062
          %v2064 = vpop.xlane.xlu0 %2063
          %v2065 = vadd.f32 %v1986, %v2044
          %2066 = vadd.xlane.f32.xlu0 %v2065
          %v2067 = vpop.xlane.xlu0 %2066
          %v2068 = vadd.f32 %v1988, %v2046
          %2069 = vadd.xlane.f32.xlu0 %v2068
          %v2070 = vpop.xlane.xlu0 %2069
          %v2071 = vadd.f32 %v1991, %v2049
          %2072 = vadd.xlane.f32.xlu0 %v2071
          %v2073 = vpop.xlane.xlu0 %2072
          %v2074 = vadd.f32 %v1993, %v2051
          %2075 = vadd.xlane.f32.xlu0 %v2074
          %v2076 = vpop.xlane.xlu0 %2075
          %v2077 = vadd.f32 %v2055, %v717
          %v2078 = vadd.f32 %v2055, %v718
          %v2079 = vadd.f32 %v2058, %v717
          %v2080 = vadd.f32 %v2058, %v718
          %v2081 = vadd.f32 %v2061, %v717
          %v2082 = vadd.f32 %v2061, %v718
          %v2083 = vadd.f32 %v2064, %v717
          %v2084 = vadd.f32 %v2064, %v718
          %v2085 = vadd.f32 %v2067, %v717
          %v2086 = vadd.f32 %v2067, %v718
          %v2087 = vadd.f32 %v2070, %v717
          %v2088 = vadd.f32 %v2070, %v718
          %v2089 = vadd.f32 %v2073, %v717
          %v2090 = vadd.f32 %v2073, %v718
          %v2091 = vadd.f32 %v2076, %v717
          %v2092 = vadd.f32 %v2076, %v718
          %v2093 = vsub.f32 %v2077, %v1976
          %v2094 = vsub.f32 %v2078, %v2034
          %v2095 = vsub.f32 %v2079, %v1978
          %v2096 = vsub.f32 %v2080, %v2036
          %v2097 = vsub.f32 %v2081, %v1981
          %v2098 = vsub.f32 %v2082, %v2039
          %v2099 = vsub.f32 %v2083, %v1983
          %v2100 = vsub.f32 %v2084, %v2041
          %v2101 = vsub.f32 %v2085, %v1986
          %v2102 = vsub.f32 %v2086, %v2044
          %v2103 = vsub.f32 %v2087, %v1988
          %v2104 = vsub.f32 %v2088, %v2046
          %v2105 = vsub.f32 %v2089, %v1991
          %v2106 = vsub.f32 %v2090, %v2049
          %v2107 = vsub.f32 %v2091, %v1993
          %v2108 = vsub.f32 %v2092, %v2051
          %v2109 = vmax.f32 %v2093, 1.0
          %v2110 = vmax.f32 %v2094, 1.0
          %v2111 = vmax.f32 %v2095, 1.0
          %v2112 = vmax.f32 %v2096, 1.0
          %v2113 = vmax.f32 %v2097, 1.0
          %v2114 = vmax.f32 %v2098, 1.0
          %v2115 = vmax.f32 %v2099, 1.0
          %v2116 = vmax.f32 %v2100, 1.0
          %v2117 = vmax.f32 %v2101, 1.0
          %v2118 = vmax.f32 %v2102, 1.0
          %v2119 = vmax.f32 %v2103, 1.0
          %v2120 = vmax.f32 %v2104, 1.0
          %v2121 = vmax.f32 %v2105, 1.0
          %v2122 = vmax.f32 %v2106, 1.0
          %v2123 = vmax.f32 %v2107, 1.0
          %v2124 = vmax.f32 %v2108, 1.0
          %v2125 = vrcp.pop %v2109
          %v2126 = vmul.f32 %v2109, %v2125
          %v2127 = vsub.f32 1.0, %v2126
          %v2128 = vmul.f32 %v2125, %v2127
          %v2129 = vadd.f32 %v2125, %v2128
          %vm2130 = vweird.f32 %v2109
          %vm2131 = vweird.f32 %v2125
          %vm2132 = vmor %vm2130, %vm2131
          %v2133 = vsel %vm2132, %v2125, %v2129
          %v2134 = vand.u32 2147483647, %v2109
          %vm2135 = vcmp.eq.f32.partialorder %v2134, 8.507059e+37
          %v2136 = vand.u32 %v2109, 2147483648
          %v2137 = vor.u32 1.1754944e-38, %v2136
          %v2138 = vsel %vm2135, %v2137, %v2133
          %v2139 = vmul.f32 %v1976, %v2138
          %v2140 = vrcp.pop %v2110
          %v2141 = vmul.f32 %v2110, %v2140
          %v2142 = vsub.f32 1.0, %v2141
          %v2143 = vmul.f32 %v2140, %v2142
          %v2144 = vadd.f32 %v2140, %v2143
          %vm2145 = vweird.f32 %v2110
          %vm2146 = vweird.f32 %v2140
          %vm2147 = vmor %vm2145, %vm2146
          %v2148 = vsel %vm2147, %v2140, %v2144
          %v2149 = vand.u32 2147483647, %v2110
          %vm2150 = vcmp.eq.f32.partialorder %v2149, 8.507059e+37
          %v2151 = vand.u32 %v2110, 2147483648
          %v2152 = vor.u32 1.1754944e-38, %v2151
          %v2153 = vsel %vm2150, %v2152, %v2148
          %v2154 = vmul.f32 %v2034, %v2153
          %v2155 = vrcp.pop %v2111
          %v2156 = vmul.f32 %v2111, %v2155
          %v2157 = vsub.f32 1.0, %v2156
          %v2158 = vmul.f32 %v2155, %v2157
          %v2159 = vadd.f32 %v2155, %v2158
          %vm2160 = vweird.f32 %v2111
          %vm2161 = vweird.f32 %v2155
          %vm2162 = vmor %vm2160, %vm2161
          %v2163 = vsel %vm2162, %v2155, %v2159
          %v2164 = vand.u32 2147483647, %v2111
          %vm2165 = vcmp.eq.f32.partialorder %v2164, 8.507059e+37
          %v2166 = vand.u32 %v2111, 2147483648
          %v2167 = vor.u32 1.1754944e-38, %v2166
          %v2168 = vsel %vm2165, %v2167, %v2163
          %v2169 = vmul.f32 %v1978, %v2168
          %v2170 = vrcp.pop %v2112
          %v2171 = vmul.f32 %v2112, %v2170
          %v2172 = vsub.f32 1.0, %v2171
          %v2173 = vmul.f32 %v2170, %v2172
          %v2174 = vadd.f32 %v2170, %v2173
          %vm2175 = vweird.f32 %v2112
          %vm2176 = vweird.f32 %v2170
          %vm2177 = vmor %vm2175, %vm2176
          %v2178 = vsel %vm2177, %v2170, %v2174
          %v2179 = vand.u32 2147483647, %v2112
          %vm2180 = vcmp.eq.f32.partialorder %v2179, 8.507059e+37
          %v2181 = vand.u32 %v2112, 2147483648
          %v2182 = vor.u32 1.1754944e-38, %v2181
          %v2183 = vsel %vm2180, %v2182, %v2178
          %v2184 = vmul.f32 %v2036, %v2183
          %v2185 = vrcp.pop %v2113
          %v2186 = vmul.f32 %v2113, %v2185
          %v2187 = vsub.f32 1.0, %v2186
          %v2188 = vmul.f32 %v2185, %v2187
          %v2189 = vadd.f32 %v2185, %v2188
          %vm2190 = vweird.f32 %v2113
          %vm2191 = vweird.f32 %v2185
          %vm2192 = vmor %vm2190, %vm2191
          %v2193 = vsel %vm2192, %v2185, %v2189
          %v2194 = vand.u32 2147483647, %v2113
          %vm2195 = vcmp.eq.f32.partialorder %v2194, 8.507059e+37
          %v2196 = vand.u32 %v2113, 2147483648
          %v2197 = vor.u32 1.1754944e-38, %v2196
          %v2198 = vsel %vm2195, %v2197, %v2193
          %v2199 = vmul.f32 %v1981, %v2198
          %v2200 = vrcp.pop %v2114
          %v2201 = vmul.f32 %v2114, %v2200
          %v2202 = vsub.f32 1.0, %v2201
          %v2203 = vmul.f32 %v2200, %v2202
          %v2204 = vadd.f32 %v2200, %v2203
          %vm2205 = vweird.f32 %v2114
          %vm2206 = vweird.f32 %v2200
          %vm2207 = vmor %vm2205, %vm2206
          %v2208 = vsel %vm2207, %v2200, %v2204
          %v2209 = vand.u32 2147483647, %v2114
          %vm2210 = vcmp.eq.f32.partialorder %v2209, 8.507059e+37
          %v2211 = vand.u32 %v2114, 2147483648
          %v2212 = vor.u32 1.1754944e-38, %v2211
          %v2213 = vsel %vm2210, %v2212, %v2208
          %v2214 = vmul.f32 %v2039, %v2213
          %v2215 = vrcp.pop %v2115
          %v2216 = vmul.f32 %v2115, %v2215
          %v2217 = vsub.f32 1.0, %v2216
          %v2218 = vmul.f32 %v2215, %v2217
          %v2219 = vadd.f32 %v2215, %v2218
          %vm2220 = vweird.f32 %v2115
          %vm2221 = vweird.f32 %v2215
          %vm2222 = vmor %vm2220, %vm2221
          %v2223 = vsel %vm2222, %v2215, %v2219
          %v2224 = vand.u32 2147483647, %v2115
          %vm2225 = vcmp.eq.f32.partialorder %v2224, 8.507059e+37
          %v2226 = vand.u32 %v2115, 2147483648
          %v2227 = vor.u32 1.1754944e-38, %v2226
          %v2228 = vsel %vm2225, %v2227, %v2223
          %v2229 = vmul.f32 %v1983, %v2228
          %v2230 = vrcp.pop %v2116
          %v2231 = vmul.f32 %v2116, %v2230
          %v2232 = vsub.f32 1.0, %v2231
          %v2233 = vmul.f32 %v2230, %v2232
          %v2234 = vadd.f32 %v2230, %v2233
          %vm2235 = vweird.f32 %v2116
          %vm2236 = vweird.f32 %v2230
          %vm2237 = vmor %vm2235, %vm2236
          %v2238 = vsel %vm2237, %v2230, %v2234
          %v2239 = vand.u32 2147483647, %v2116
          %vm2240 = vcmp.eq.f32.partialorder %v2239, 8.507059e+37
          %v2241 = vand.u32 %v2116, 2147483648
          %v2242 = vor.u32 1.1754944e-38, %v2241
          %v2243 = vsel %vm2240, %v2242, %v2238
          %v2244 = vmul.f32 %v2041, %v2243
          %v2245 = vrcp.pop %v2117
          %v2246 = vmul.f32 %v2117, %v2245
          %v2247 = vsub.f32 1.0, %v2246
          %v2248 = vmul.f32 %v2245, %v2247
          %v2249 = vadd.f32 %v2245, %v2248
          %vm2250 = vweird.f32 %v2117
          %vm2251 = vweird.f32 %v2245
          %vm2252 = vmor %vm2250, %vm2251
          %v2253 = vsel %vm2252, %v2245, %v2249
          %v2254 = vand.u32 2147483647, %v2117
          %vm2255 = vcmp.eq.f32.partialorder %v2254, 8.507059e+37
          %v2256 = vand.u32 %v2117, 2147483648
          %v2257 = vor.u32 1.1754944e-38, %v2256
          %v2258 = vsel %vm2255, %v2257, %v2253
          %v2259 = vmul.f32 %v1986, %v2258
          %v2260 = vrcp.pop %v2118
          %v2261 = vmul.f32 %v2118, %v2260
          %v2262 = vsub.f32 1.0, %v2261
          %v2263 = vmul.f32 %v2260, %v2262
          %v2264 = vadd.f32 %v2260, %v2263
          %vm2265 = vweird.f32 %v2118
          %vm2266 = vweird.f32 %v2260
          %vm2267 = vmor %vm2265, %vm2266
          %v2268 = vsel %vm2267, %v2260, %v2264
          %v2269 = vand.u32 2147483647, %v2118
          %vm2270 = vcmp.eq.f32.partialorder %v2269, 8.507059e+37
          %v2271 = vand.u32 %v2118, 2147483648
          %v2272 = vor.u32 1.1754944e-38, %v2271
          %v2273 = vsel %vm2270, %v2272, %v2268
          %v2274 = vmul.f32 %v2044, %v2273
          %v2275 = vrcp.pop %v2119
          %v2276 = vmul.f32 %v2119, %v2275
          %v2277 = vsub.f32 1.0, %v2276
          %v2278 = vmul.f32 %v2275, %v2277
          %v2279 = vadd.f32 %v2275, %v2278
          %vm2280 = vweird.f32 %v2119
          %vm2281 = vweird.f32 %v2275
          %vm2282 = vmor %vm2280, %vm2281
          %v2283 = vsel %vm2282, %v2275, %v2279
          %v2284 = vand.u32 2147483647, %v2119
          %vm2285 = vcmp.eq.f32.partialorder %v2284, 8.507059e+37
          %v2286 = vand.u32 %v2119, 2147483648
          %v2287 = vor.u32 1.1754944e-38, %v2286
          %v2288 = vsel %vm2285, %v2287, %v2283
          %v2289 = vmul.f32 %v1988, %v2288
          %v2290 = vrcp.pop %v2120
          %v2291 = vmul.f32 %v2120, %v2290
          %v2292 = vsub.f32 1.0, %v2291
          %v2293 = vmul.f32 %v2290, %v2292
          %v2294 = vadd.f32 %v2290, %v2293
          %vm2295 = vweird.f32 %v2120
          %vm2296 = vweird.f32 %v2290
          %vm2297 = vmor %vm2295, %vm2296
          %v2298 = vsel %vm2297, %v2290, %v2294
          %v2299 = vand.u32 2147483647, %v2120
          %vm2300 = vcmp.eq.f32.partialorder %v2299, 8.507059e+37
          %v2301 = vand.u32 %v2120, 2147483648
          %v2302 = vor.u32 1.1754944e-38, %v2301
          %v2303 = vsel %vm2300, %v2302, %v2298
          %v2304 = vmul.f32 %v2046, %v2303
          %v2305 = vrcp.pop %v2121
          %v2306 = vmul.f32 %v2121, %v2305
          %v2307 = vsub.f32 1.0, %v2306
          %v2308 = vmul.f32 %v2305, %v2307
          %v2309 = vadd.f32 %v2305, %v2308
          %vm2310 = vweird.f32 %v2121
          %vm2311 = vweird.f32 %v2305
          %vm2312 = vmor %vm2310, %vm2311
          %v2313 = vsel %vm2312, %v2305, %v2309
          %v2314 = vand.u32 2147483647, %v2121
          %vm2315 = vcmp.eq.f32.partialorder %v2314, 8.507059e+37
          %v2316 = vand.u32 %v2121, 2147483648
          %v2317 = vor.u32 1.1754944e-38, %v2316
          %v2318 = vsel %vm2315, %v2317, %v2313
          %v2319 = vmul.f32 %v1991, %v2318
          %v2320 = vrcp.pop %v2122
          %v2321 = vmul.f32 %v2122, %v2320
          %v2322 = vsub.f32 1.0, %v2321
          %v2323 = vmul.f32 %v2320, %v2322
          %v2324 = vadd.f32 %v2320, %v2323
          %vm2325 = vweird.f32 %v2122
          %vm2326 = vweird.f32 %v2320
          %vm2327 = vmor %vm2325, %vm2326
          %v2328 = vsel %vm2327, %v2320, %v2324
          %v2329 = vand.u32 2147483647, %v2122
          %vm2330 = vcmp.eq.f32.partialorder %v2329, 8.507059e+37
          %v2331 = vand.u32 %v2122, 2147483648
          %v2332 = vor.u32 1.1754944e-38, %v2331
          %v2333 = vsel %vm2330, %v2332, %v2328
          %v2334 = vmul.f32 %v2049, %v2333
          %v2335 = vrcp.pop %v2123
          %v2336 = vmul.f32 %v2123, %v2335
          %v2337 = vsub.f32 1.0, %v2336
          %v2338 = vmul.f32 %v2335, %v2337
          %v2339 = vadd.f32 %v2335, %v2338
          %vm2340 = vweird.f32 %v2123
          %vm2341 = vweird.f32 %v2335
          %vm2342 = vmor %vm2340, %vm2341
          %v2343 = vsel %vm2342, %v2335, %v2339
          %v2344 = vand.u32 2147483647, %v2123
          %vm2345 = vcmp.eq.f32.partialorder %v2344, 8.507059e+37
          %v2346 = vand.u32 %v2123, 2147483648
          %v2347 = vor.u32 1.1754944e-38, %v2346
          %v2348 = vsel %vm2345, %v2347, %v2343
          %v2349 = vmul.f32 %v1993, %v2348
          %v2350 = vrcp.pop %v2124
          %v2351 = vmul.f32 %v2124, %v2350
          %v2352 = vsub.f32 1.0, %v2351
          %v2353 = vmul.f32 %v2350, %v2352
          %v2354 = vadd.f32 %v2350, %v2353
          %vm2355 = vweird.f32 %v2124
          %vm2356 = vweird.f32 %v2350
          %vm2357 = vmor %vm2355, %vm2356
          %v2358 = vsel %vm2357, %v2350, %v2354
          %v2359 = vand.u32 2147483647, %v2124
          %vm2360 = vcmp.eq.f32.partialorder %v2359, 8.507059e+37
          %v2361 = vand.u32 %v2124, 2147483648
          %v2362 = vor.u32 1.1754944e-38, %v2361
          %v2363 = vsel %vm2360, %v2362, %v2358
          %v2364 = vmul.f32 %v2051, %v2363
          %v2365 = vmax.f32 %v2139, %v2199
          %v2366 = vmax.f32 %v2169, %v2229
          %v2367 = vmax.f32 %v2365, %v2259
          %v2368 = vmax.f32 %v2366, %v2289
          %v2369 = vmax.f32 %v2367, %v2319
          %v2370 = vmax.f32 %v2368, %v2349
          %v2371 = vmax.f32 %v2369, %v2370
          %v2372 = vrot.slane %v2371, 4
          %v2373 = vmax.f32 %v2371, %v2372
          %v2374 = vrot.slane %v2373, 2
          %v2375 = vmax.f32 %v2373, %v2374
          %v2376 = vrot.slane %v2375, 1
          %v2377 = vmax.f32 %v2375, %v2376
          %v2378 = vmax.f32 %v2154, %v2214
          %v2379 = vmax.f32 %v2184, %v2244
          %v2380 = vmax.f32 %v2378, %v2274
          %v2381 = vmax.f32 %v2379, %v2304
          %v2382 = vmax.f32 %v2380, %v2334
          %v2383 = vmax.f32 %v2381, %v2364
          %v2384 = vmax.f32 %v2382, %v2383
          %v2385 = vrot.slane %v2384, 4
          %v2386 = vmax.f32 %v2384, %v2385
          %v2387 = vrot.slane %v2386, 2
          %v2388 = vmax.f32 %v2386, %v2387
          %v2389 = vrot.slane %v2388, 1
          %v2390 = vmax.f32 %v2388, %v2389
          %v2391 = vmax.f32 %v1831, %v2377
          %v2392 = vmax.f32 %v1832, %v2390
          %v2393 = vadd.s32 %v173, 192
          %v2394 = vadd.s32 %v174, 192
          %v2395 = vadd.s32 %v175, 192
          %v2396 = vadd.s32 %v176, 192
          %v2397 = vadd.s32 %v177, 192
          %v2398 = vadd.s32 %v178, 192
          %v2399 = vadd.s32 %v179, 192
          %v2400 = vadd.s32 %v180, 192
          %vm2401 = vcmp.eq.s32.totalorder %v719, %v2393
          %vm2402 = vcmp.eq.s32.totalorder %v720, %v2393
          %vm2403 = vcmp.eq.s32.totalorder %v719, %v2394
          %vm2404 = vcmp.eq.s32.totalorder %v720, %v2394
          %vm2405 = vcmp.eq.s32.totalorder %v719, %v2395
          %vm2406 = vcmp.eq.s32.totalorder %v720, %v2395
          %vm2407 = vcmp.eq.s32.totalorder %v719, %v2396
          %vm2408 = vcmp.eq.s32.totalorder %v720, %v2396
          %vm2409 = vcmp.eq.s32.totalorder %v719, %v2397
          %vm2410 = vcmp.eq.s32.totalorder %v720, %v2397
          %vm2411 = vcmp.eq.s32.totalorder %v719, %v2398
          %vm2412 = vcmp.eq.s32.totalorder %v720, %v2398
          %vm2413 = vcmp.eq.s32.totalorder %v719, %v2399
          %vm2414 = vcmp.eq.s32.totalorder %v720, %v2399
          %vm2415 = vcmp.eq.s32.totalorder %v719, %v2400
          %vm2416 = vcmp.eq.s32.totalorder %v720, %v2400
          %vm2417 = vcmp.gt.s32.totalorder %v2393, 0
          %vm2418 = vcmp.gt.s32.totalorder %v2394, 0
          %vm2419 = vcmp.gt.s32.totalorder %v2395, 0
          %vm2420 = vcmp.gt.s32.totalorder %v2396, 0
          %vm2421 = vcmp.gt.s32.totalorder %v2397, 0
          %vm2422 = vcmp.gt.s32.totalorder %v2398, 0
          %vm2423 = vcmp.gt.s32.totalorder %v2399, 0
          %vm2424 = vcmp.gt.s32.totalorder %v2400, 0
          %v2425 = vsel %vm2417, 1, 0
          %v2426 = vsel %vm2418, 1, 0
          %v2427 = vsel %vm2419, 1, 0
          %v2428 = vsel %vm2420, 1, 0
          %v2429 = vsel %vm2421, 1, 0
          %v2430 = vsel %vm2422, 1, 0
          %v2431 = vsel %vm2423, 1, 0
          %v2432 = vsel %vm2424, 1, 0
          %vm2433 = vcmp.eq.s32.totalorder %v2425, 1
          %vm2434 = vcmp.eq.s32.totalorder %v2426, 1
          %vm2435 = vcmp.eq.s32.totalorder %v2427, 1
          %vm2436 = vcmp.eq.s32.totalorder %v2428, 1
          %vm2437 = vcmp.eq.s32.totalorder %v2429, 1
          %vm2438 = vcmp.eq.s32.totalorder %v2430, 1
          %vm2439 = vcmp.eq.s32.totalorder %v2431, 1
          %vm2440 = vcmp.eq.s32.totalorder %v2432, 1
          %vm2441 = vmand %vm2401, %vm2433
          %vm2442 = vmand %vm2402, %vm2433
          %vm2443 = vmand %vm2403, %vm2434
          %vm2444 = vmand %vm2404, %vm2434
          %vm2445 = vmand %vm2405, %vm2435
          %vm2446 = vmand %vm2406, %vm2435
          %vm2447 = vmand %vm2407, %vm2436
          %vm2448 = vmand %vm2408, %vm2436
          %vm2449 = vmand %vm2409, %vm2437
          %vm2450 = vmand %vm2410, %vm2437
          %vm2451 = vmand %vm2411, %vm2438
          %vm2452 = vmand %vm2412, %vm2438
          %vm2453 = vmand %vm2413, %vm2439
          %vm2454 = vmand %vm2414, %vm2439
          %vm2455 = vmand %vm2415, %vm2440
          %vm2456 = vmand %vm2416, %vm2440
          %v2457 = vsel %vm2441, 1, 0
          %v2458 = vsel %vm2442, 1, 0
          %v2459 = vsel %vm2443, 1, 0
          %v2460 = vsel %vm2444, 1, 0
          %v2461 = vsel %vm2445, 1, 0
          %v2462 = vsel %vm2446, 1, 0
          %v2463 = vsel %vm2447, 1, 0
          %v2464 = vsel %vm2448, 1, 0
          %v2465 = vsel %vm2449, 1, 0
          %v2466 = vsel %vm2450, 1, 0
          %v2467 = vsel %vm2451, 1, 0
          %v2468 = vsel %vm2452, 1, 0
          %v2469 = vsel %vm2453, 1, 0
          %v2470 = vsel %vm2454, 1, 0
          %v2471 = vsel %vm2455, 1, 0
          %v2472 = vsel %vm2456, 1, 0
          %v2473 = vcvt.s32.f32 %v2457
          %v2474 = vcvt.s32.f32 %v2458
          %v2475 = vcvt.s32.f32 %v2459
          %v2476 = vcvt.s32.f32 %v2460
          %v2477 = vcvt.s32.f32 %v2461
          %v2478 = vcvt.s32.f32 %v2462
          %v2479 = vcvt.s32.f32 %v2463
          %v2480 = vcvt.s32.f32 %v2464
          %v2481 = vcvt.s32.f32 %v2465
          %v2482 = vcvt.s32.f32 %v2466
          %v2483 = vcvt.s32.f32 %v2467
          %v2484 = vcvt.s32.f32 %v2468
          %v2485 = vcvt.s32.f32 %v2469
          %v2486 = vcvt.s32.f32 %v2470
          %v2487 = vcvt.s32.f32 %v2471
          %v2488 = vcvt.s32.f32 %v2472
          %v2489 = vpack.c.bf16 %v2475, %v2473
          %v2490 = vpack.c.bf16 %v2476, %v2474
          %v2491 = vpack.c.bf16 %v2479, %v2477
          %v2492 = vpack.c.bf16 %v2480, %v2478
          %v2493 = vpack.c.bf16 %v2483, %v2481
          %v2494 = vpack.c.bf16 %v2484, %v2482
          %v2495 = vpack.c.bf16 %v2487, %v2485
          %v2496 = vpack.c.bf16 %v2488, %v2486
          %2497 = vmatpush.bf16.msra.mxu0 %v560
          %2498 = vmatpush.bf16.msra.mxu0 %v558
          %2499 = vmatpush.bf16.msra.mxu0 %v556
          %2500 = vmatpush.bf16.msra.mxu0 %v554
          %2501 = vmatpush.bf16.msra.mxu0 %v552
          %2502 = vmatpush.bf16.msra.mxu0 %v550
          %2503 = vmatpush.bf16.msra.mxu0 %v548
          %2504 = vmatpush.bf16.msra.mxu0 %v546
          %2505 = vmatmul.bf16.gmra.mxu0 %v2489
          %v2506 = vpop.f32.mrf.mxu0
          %v2507 = vadd.f32 0.0, %v2506
          %v2508 = vpop.f32.mrf.mxu0
          %v2509 = vadd.f32 0.0, %v2508
          %2510 = vmatmul.bf16.gmra.mxu0 %v2491
          %v2511 = vpop.f32.mrf.mxu0
          %v2512 = vadd.f32 0.0, %v2511
          %v2513 = vpop.f32.mrf.mxu0
          %v2514 = vadd.f32 0.0, %v2513
          %2515 = vmatmul.bf16.gmra.mxu0 %v2493
          %v2516 = vpop.f32.mrf.mxu0
          %v2517 = vadd.f32 0.0, %v2516
          %v2518 = vpop.f32.mrf.mxu0
          %v2519 = vadd.f32 0.0, %v2518
          %2520 = vmatmul.bf16.gmra.mxu0 %v2495
          %v2521 = vpop.f32.mrf.mxu0
          %v2522 = vadd.f32 0.0, %v2521
          %v2523 = vpop.f32.mrf.mxu0
          %v2524 = vadd.f32 0.0, %v2523
          %2525 = vdwg.mxu0
          %2526 = vmatpush.bf16.msra.mxu0 %v576
          %2527 = vmatpush.bf16.msra.mxu0 %v574
          %2528 = vmatpush.bf16.msra.mxu0 %v572
          %2529 = vmatpush.bf16.msra.mxu0 %v570
          %2530 = vmatpush.bf16.msra.mxu0 %v568
          %2531 = vmatpush.bf16.msra.mxu0 %v566
          %2532 = vmatpush.bf16.msra.mxu0 %v564
          %2533 = vmatpush.bf16.msra.mxu0 %v562
          %2534 = vmatmul.bf16.gmra.mxu0 %v2490
          %v2535 = vpop.f32.mrf.mxu0
          %v2536 = vadd.f32 %v2507, %v2535
          %v2537 = vpop.f32.mrf.mxu0
          %v2538 = vadd.f32 %v2509, %v2537
          %2539 = vmatmul.bf16.gmra.mxu0 %v2492
          %v2540 = vpop.f32.mrf.mxu0
          %v2541 = vadd.f32 %v2512, %v2540
          %v2542 = vpop.f32.mrf.mxu0
          %v2543 = vadd.f32 %v2514, %v2542
          %2544 = vmatmul.bf16.gmra.mxu0 %v2494
          %v2545 = vpop.f32.mrf.mxu0
          %v2546 = vadd.f32 %v2517, %v2545
          %v2547 = vpop.f32.mrf.mxu0
          %v2548 = vadd.f32 %v2519, %v2547
          %2549 = vmatmul.bf16.gmra.mxu0 %v2496
          %v2550 = vpop.f32.mrf.mxu0
          %v2551 = vadd.f32 %v2522, %v2550
          %v2552 = vpop.f32.mrf.mxu0
          %v2553 = vadd.f32 %v2524, %v2552
          %2554 = vdwg.mxu0
          %2555 = vmatpush.bf16.msra.mxu0 %v561
          %2556 = vmatpush.bf16.msra.mxu0 %v559
          %2557 = vmatpush.bf16.msra.mxu0 %v557
          %2558 = vmatpush.bf16.msra.mxu0 %v555
          %2559 = vmatpush.bf16.msra.mxu0 %v553
          %2560 = vmatpush.bf16.msra.mxu0 %v551
          %2561 = vmatpush.bf16.msra.mxu0 %v549
          %2562 = vmatpush.bf16.msra.mxu0 %v547
          %2563 = vmatmul.bf16.gmra.mxu0 %v2489
          %v2564 = vpop.f32.mrf.mxu0
          %v2565 = vadd.f32 0.0, %v2564
          %v2566 = vpop.f32.mrf.mxu0
          %v2567 = vadd.f32 0.0, %v2566
          %2568 = vmatmul.bf16.gmra.mxu0 %v2491
          %v2569 = vpop.f32.mrf.mxu0
          %v2570 = vadd.f32 0.0, %v2569
          %v2571 = vpop.f32.mrf.mxu0
          %v2572 = vadd.f32 0.0, %v2571
          %2573 = vmatmul.bf16.gmra.mxu0 %v2493
          %v2574 = vpop.f32.mrf.mxu0
          %v2575 = vadd.f32 0.0, %v2574
          %v2576 = vpop.f32.mrf.mxu0
          %v2577 = vadd.f32 0.0, %v2576
          %2578 = vmatmul.bf16.gmra.mxu0 %v2495
          %v2579 = vpop.f32.mrf.mxu0
          %v2580 = vadd.f32 0.0, %v2579
          %v2581 = vpop.f32.mrf.mxu0
          %v2582 = vadd.f32 0.0, %v2581
          %2583 = vdwg.mxu0
          %2584 = vmatpush.bf16.msra.mxu0 %v577
          %2585 = vmatpush.bf16.msra.mxu0 %v575
          %2586 = vmatpush.bf16.msra.mxu0 %v573
          %2587 = vmatpush.bf16.msra.mxu0 %v571
          %2588 = vmatpush.bf16.msra.mxu0 %v569
          %2589 = vmatpush.bf16.msra.mxu0 %v567
          %2590 = vmatpush.bf16.msra.mxu0 %v565
          %2591 = vmatpush.bf16.msra.mxu0 %v563
          %2592 = vmatmul.bf16.gmra.mxu0 %v2490
          %v2593 = vpop.f32.mrf.mxu0
          %v2594 = vadd.f32 %v2565, %v2593
          %v2595 = vpop.f32.mrf.mxu0
          %v2596 = vadd.f32 %v2567, %v2595
          %2597 = vmatmul.bf16.gmra.mxu0 %v2492
          %v2598 = vpop.f32.mrf.mxu0
          %v2599 = vadd.f32 %v2570, %v2598
          %v2600 = vpop.f32.mrf.mxu0
          %v2601 = vadd.f32 %v2572, %v2600
          %2602 = vmatmul.bf16.gmra.mxu0 %v2494
          %v2603 = vpop.f32.mrf.mxu0
          %v2604 = vadd.f32 %v2575, %v2603
          %v2605 = vpop.f32.mrf.mxu0
          %v2606 = vadd.f32 %v2577, %v2605
          %2607 = vmatmul.bf16.gmra.mxu0 %v2496
          %v2608 = vpop.f32.mrf.mxu0
          %v2609 = vadd.f32 %v2580, %v2608
          %v2610 = vpop.f32.mrf.mxu0
          %v2611 = vadd.f32 %v2582, %v2610
          %2612 = vdwg.mxu0
          %v2613 = vadd.f32 %v2536, %v2594
          %2614 = vadd.xlane.f32.xlu0 %v2613
          %v2615 = vpop.xlane.xlu0 %2614
          %v2616 = vadd.f32 %v2538, %v2596
          %2617 = vadd.xlane.f32.xlu0 %v2616
          %v2618 = vpop.xlane.xlu0 %2617
          %v2619 = vadd.f32 %v2541, %v2599
          %2620 = vadd.xlane.f32.xlu0 %v2619
          %v2621 = vpop.xlane.xlu0 %2620
          %v2622 = vadd.f32 %v2543, %v2601
          %2623 = vadd.xlane.f32.xlu0 %v2622
          %v2624 = vpop.xlane.xlu0 %2623
          %v2625 = vadd.f32 %v2546, %v2604
          %2626 = vadd.xlane.f32.xlu0 %v2625
          %v2627 = vpop.xlane.xlu0 %2626
          %v2628 = vadd.f32 %v2548, %v2606
          %2629 = vadd.xlane.f32.xlu0 %v2628
          %v2630 = vpop.xlane.xlu0 %2629
          %v2631 = vadd.f32 %v2551, %v2609
          %2632 = vadd.xlane.f32.xlu0 %v2631
          %v2633 = vpop.xlane.xlu0 %2632
          %v2634 = vadd.f32 %v2553, %v2611
          %2635 = vadd.xlane.f32.xlu0 %v2634
          %v2636 = vpop.xlane.xlu0 %2635
          %v2637 = vadd.f32 %v2615, %v717
          %v2638 = vadd.f32 %v2615, %v718
          %v2639 = vadd.f32 %v2618, %v717
          %v2640 = vadd.f32 %v2618, %v718
          %v2641 = vadd.f32 %v2621, %v717
          %v2642 = vadd.f32 %v2621, %v718
          %v2643 = vadd.f32 %v2624, %v717
          %v2644 = vadd.f32 %v2624, %v718
          %v2645 = vadd.f32 %v2627, %v717
          %v2646 = vadd.f32 %v2627, %v718
          %v2647 = vadd.f32 %v2630, %v717
          %v2648 = vadd.f32 %v2630, %v718
          %v2649 = vadd.f32 %v2633, %v717
          %v2650 = vadd.f32 %v2633, %v718
          %v2651 = vadd.f32 %v2636, %v717
          %v2652 = vadd.f32 %v2636, %v718
          %v2653 = vsub.f32 %v2637, %v2536
          %v2654 = vsub.f32 %v2638, %v2594
          %v2655 = vsub.f32 %v2639, %v2538
          %v2656 = vsub.f32 %v2640, %v2596
          %v2657 = vsub.f32 %v2641, %v2541
          %v2658 = vsub.f32 %v2642, %v2599
          %v2659 = vsub.f32 %v2643, %v2543
          %v2660 = vsub.f32 %v2644, %v2601
          %v2661 = vsub.f32 %v2645, %v2546
          %v2662 = vsub.f32 %v2646, %v2604
          %v2663 = vsub.f32 %v2647, %v2548
          %v2664 = vsub.f32 %v2648, %v2606
          %v2665 = vsub.f32 %v2649, %v2551
          %v2666 = vsub.f32 %v2650, %v2609
          %v2667 = vsub.f32 %v2651, %v2553
          %v2668 = vsub.f32 %v2652, %v2611
          %v2669 = vmax.f32 %v2653, 1.0
          %v2670 = vmax.f32 %v2654, 1.0
          %v2671 = vmax.f32 %v2655, 1.0
          %v2672 = vmax.f32 %v2656, 1.0
          %v2673 = vmax.f32 %v2657, 1.0
          %v2674 = vmax.f32 %v2658, 1.0
          %v2675 = vmax.f32 %v2659, 1.0
          %v2676 = vmax.f32 %v2660, 1.0
          %v2677 = vmax.f32 %v2661, 1.0
          %v2678 = vmax.f32 %v2662, 1.0
          %v2679 = vmax.f32 %v2663, 1.0
          %v2680 = vmax.f32 %v2664, 1.0
          %v2681 = vmax.f32 %v2665, 1.0
          %v2682 = vmax.f32 %v2666, 1.0
          %v2683 = vmax.f32 %v2667, 1.0
          %v2684 = vmax.f32 %v2668, 1.0
          %v2685 = vrcp.pop %v2669
          %v2686 = vmul.f32 %v2669, %v2685
          %v2687 = vsub.f32 1.0, %v2686
          %v2688 = vmul.f32 %v2685, %v2687
          %v2689 = vadd.f32 %v2685, %v2688
          %vm2690 = vweird.f32 %v2669
          %vm2691 = vweird.f32 %v2685
          %vm2692 = vmor %vm2690, %vm2691
          %v2693 = vsel %vm2692, %v2685, %v2689
          %v2694 = vand.u32 2147483647, %v2669
          %vm2695 = vcmp.eq.f32.partialorder %v2694, 8.507059e+37
          %v2696 = vand.u32 %v2669, 2147483648
          %v2697 = vor.u32 1.1754944e-38, %v2696
          %v2698 = vsel %vm2695, %v2697, %v2693
          %v2699 = vmul.f32 %v2536, %v2698
          %v2700 = vrcp.pop %v2670
          %v2701 = vmul.f32 %v2670, %v2700
          %v2702 = vsub.f32 1.0, %v2701
          %v2703 = vmul.f32 %v2700, %v2702
          %v2704 = vadd.f32 %v2700, %v2703
          %vm2705 = vweird.f32 %v2670
          %vm2706 = vweird.f32 %v2700
          %vm2707 = vmor %vm2705, %vm2706
          %v2708 = vsel %vm2707, %v2700, %v2704
          %v2709 = vand.u32 2147483647, %v2670
          %vm2710 = vcmp.eq.f32.partialorder %v2709, 8.507059e+37
          %v2711 = vand.u32 %v2670, 2147483648
          %v2712 = vor.u32 1.1754944e-38, %v2711
          %v2713 = vsel %vm2710, %v2712, %v2708
          %v2714 = vmul.f32 %v2594, %v2713
          %v2715 = vrcp.pop %v2671
          %v2716 = vmul.f32 %v2671, %v2715
          %v2717 = vsub.f32 1.0, %v2716
          %v2718 = vmul.f32 %v2715, %v2717
          %v2719 = vadd.f32 %v2715, %v2718
          %vm2720 = vweird.f32 %v2671
          %vm2721 = vweird.f32 %v2715
          %vm2722 = vmor %vm2720, %vm2721
          %v2723 = vsel %vm2722, %v2715, %v2719
          %v2724 = vand.u32 2147483647, %v2671
          %vm2725 = vcmp.eq.f32.partialorder %v2724, 8.507059e+37
          %v2726 = vand.u32 %v2671, 2147483648
          %v2727 = vor.u32 1.1754944e-38, %v2726
          %v2728 = vsel %vm2725, %v2727, %v2723
          %v2729 = vmul.f32 %v2538, %v2728
          %v2730 = vrcp.pop %v2672
          %v2731 = vmul.f32 %v2672, %v2730
          %v2732 = vsub.f32 1.0, %v2731
          %v2733 = vmul.f32 %v2730, %v2732
          %v2734 = vadd.f32 %v2730, %v2733
          %vm2735 = vweird.f32 %v2672
          %vm2736 = vweird.f32 %v2730
          %vm2737 = vmor %vm2735, %vm2736
          %v2738 = vsel %vm2737, %v2730, %v2734
          %v2739 = vand.u32 2147483647, %v2672
          %vm2740 = vcmp.eq.f32.partialorder %v2739, 8.507059e+37
          %v2741 = vand.u32 %v2672, 2147483648
          %v2742 = vor.u32 1.1754944e-38, %v2741
          %v2743 = vsel %vm2740, %v2742, %v2738
          %v2744 = vmul.f32 %v2596, %v2743
          %v2745 = vrcp.pop %v2673
          %v2746 = vmul.f32 %v2673, %v2745
          %v2747 = vsub.f32 1.0, %v2746
          %v2748 = vmul.f32 %v2745, %v2747
          %v2749 = vadd.f32 %v2745, %v2748
          %vm2750 = vweird.f32 %v2673
          %vm2751 = vweird.f32 %v2745
          %vm2752 = vmor %vm2750, %vm2751
          %v2753 = vsel %vm2752, %v2745, %v2749
          %v2754 = vand.u32 2147483647, %v2673
          %vm2755 = vcmp.eq.f32.partialorder %v2754, 8.507059e+37
          %v2756 = vand.u32 %v2673, 2147483648
          %v2757 = vor.u32 1.1754944e-38, %v2756
          %v2758 = vsel %vm2755, %v2757, %v2753
          %v2759 = vmul.f32 %v2541, %v2758
          %v2760 = vrcp.pop %v2674
          %v2761 = vmul.f32 %v2674, %v2760
          %v2762 = vsub.f32 1.0, %v2761
          %v2763 = vmul.f32 %v2760, %v2762
          %v2764 = vadd.f32 %v2760, %v2763
          %vm2765 = vweird.f32 %v2674
          %vm2766 = vweird.f32 %v2760
          %vm2767 = vmor %vm2765, %vm2766
          %v2768 = vsel %vm2767, %v2760, %v2764
          %v2769 = vand.u32 2147483647, %v2674
          %vm2770 = vcmp.eq.f32.partialorder %v2769, 8.507059e+37
          %v2771 = vand.u32 %v2674, 2147483648
          %v2772 = vor.u32 1.1754944e-38, %v2771
          %v2773 = vsel %vm2770, %v2772, %v2768
          %v2774 = vmul.f32 %v2599, %v2773
          %v2775 = vrcp.pop %v2675
          %v2776 = vmul.f32 %v2675, %v2775
          %v2777 = vsub.f32 1.0, %v2776
          %v2778 = vmul.f32 %v2775, %v2777
          %v2779 = vadd.f32 %v2775, %v2778
          %vm2780 = vweird.f32 %v2675
          %vm2781 = vweird.f32 %v2775
          %vm2782 = vmor %vm2780, %vm2781
          %v2783 = vsel %vm2782, %v2775, %v2779
          %v2784 = vand.u32 2147483647, %v2675
          %vm2785 = vcmp.eq.f32.partialorder %v2784, 8.507059e+37
          %v2786 = vand.u32 %v2675, 2147483648
          %v2787 = vor.u32 1.1754944e-38, %v2786
          %v2788 = vsel %vm2785, %v2787, %v2783
          %v2789 = vmul.f32 %v2543, %v2788
          %v2790 = vrcp.pop %v2676
          %v2791 = vmul.f32 %v2676, %v2790
          %v2792 = vsub.f32 1.0, %v2791
          %v2793 = vmul.f32 %v2790, %v2792
          %v2794 = vadd.f32 %v2790, %v2793
          %vm2795 = vweird.f32 %v2676
          %vm2796 = vweird.f32 %v2790
          %vm2797 = vmor %vm2795, %vm2796
          %v2798 = vsel %vm2797, %v2790, %v2794
          %v2799 = vand.u32 2147483647, %v2676
          %vm2800 = vcmp.eq.f32.partialorder %v2799, 8.507059e+37
          %v2801 = vand.u32 %v2676, 2147483648
          %v2802 = vor.u32 1.1754944e-38, %v2801
          %v2803 = vsel %vm2800, %v2802, %v2798
          %v2804 = vmul.f32 %v2601, %v2803
          %v2805 = vrcp.pop %v2677
          %v2806 = vmul.f32 %v2677, %v2805
          %v2807 = vsub.f32 1.0, %v2806
          %v2808 = vmul.f32 %v2805, %v2807
          %v2809 = vadd.f32 %v2805, %v2808
          %vm2810 = vweird.f32 %v2677
          %vm2811 = vweird.f32 %v2805
          %vm2812 = vmor %vm2810, %vm2811
          %v2813 = vsel %vm2812, %v2805, %v2809
          %v2814 = vand.u32 2147483647, %v2677
          %vm2815 = vcmp.eq.f32.partialorder %v2814, 8.507059e+37
          %v2816 = vand.u32 %v2677, 2147483648
          %v2817 = vor.u32 1.1754944e-38, %v2816
          %v2818 = vsel %vm2815, %v2817, %v2813
          %v2819 = vmul.f32 %v2546, %v2818
          %v2820 = vrcp.pop %v2678
          %v2821 = vmul.f32 %v2678, %v2820
          %v2822 = vsub.f32 1.0, %v2821
          %v2823 = vmul.f32 %v2820, %v2822
          %v2824 = vadd.f32 %v2820, %v2823
          %vm2825 = vweird.f32 %v2678
          %vm2826 = vweird.f32 %v2820
          %vm2827 = vmor %vm2825, %vm2826
          %v2828 = vsel %vm2827, %v2820, %v2824
          %v2829 = vand.u32 2147483647, %v2678
          %vm2830 = vcmp.eq.f32.partialorder %v2829, 8.507059e+37
          %v2831 = vand.u32 %v2678, 2147483648
          %v2832 = vor.u32 1.1754944e-38, %v2831
          %v2833 = vsel %vm2830, %v2832, %v2828
          %v2834 = vmul.f32 %v2604, %v2833
          %v2835 = vrcp.pop %v2679
          %v2836 = vmul.f32 %v2679, %v2835
          %v2837 = vsub.f32 1.0, %v2836
          %v2838 = vmul.f32 %v2835, %v2837
          %v2839 = vadd.f32 %v2835, %v2838
          %vm2840 = vweird.f32 %v2679
          %vm2841 = vweird.f32 %v2835
          %vm2842 = vmor %vm2840, %vm2841
          %v2843 = vsel %vm2842, %v2835, %v2839
          %v2844 = vand.u32 2147483647, %v2679
          %vm2845 = vcmp.eq.f32.partialorder %v2844, 8.507059e+37
          %v2846 = vand.u32 %v2679, 2147483648
          %v2847 = vor.u32 1.1754944e-38, %v2846
          %v2848 = vsel %vm2845, %v2847, %v2843
          %v2849 = vmul.f32 %v2548, %v2848
          %v2850 = vrcp.pop %v2680
          %v2851 = vmul.f32 %v2680, %v2850
          %v2852 = vsub.f32 1.0, %v2851
          %v2853 = vmul.f32 %v2850, %v2852
          %v2854 = vadd.f32 %v2850, %v2853
          %vm2855 = vweird.f32 %v2680
          %vm2856 = vweird.f32 %v2850
          %vm2857 = vmor %vm2855, %vm2856
          %v2858 = vsel %vm2857, %v2850, %v2854
          %v2859 = vand.u32 2147483647, %v2680
          %vm2860 = vcmp.eq.f32.partialorder %v2859, 8.507059e+37
          %v2861 = vand.u32 %v2680, 2147483648
          %v2862 = vor.u32 1.1754944e-38, %v2861
          %v2863 = vsel %vm2860, %v2862, %v2858
          %v2864 = vmul.f32 %v2606, %v2863
          %v2865 = vrcp.pop %v2681
          %v2866 = vmul.f32 %v2681, %v2865
          %v2867 = vsub.f32 1.0, %v2866
          %v2868 = vmul.f32 %v2865, %v2867
          %v2869 = vadd.f32 %v2865, %v2868
          %vm2870 = vweird.f32 %v2681
          %vm2871 = vweird.f32 %v2865
          %vm2872 = vmor %vm2870, %vm2871
          %v2873 = vsel %vm2872, %v2865, %v2869
          %v2874 = vand.u32 2147483647, %v2681
          %vm2875 = vcmp.eq.f32.partialorder %v2874, 8.507059e+37
          %v2876 = vand.u32 %v2681, 2147483648
          %v2877 = vor.u32 1.1754944e-38, %v2876
          %v2878 = vsel %vm2875, %v2877, %v2873
          %v2879 = vmul.f32 %v2551, %v2878
          %v2880 = vrcp.pop %v2682
          %v2881 = vmul.f32 %v2682, %v2880
          %v2882 = vsub.f32 1.0, %v2881
          %v2883 = vmul.f32 %v2880, %v2882
          %v2884 = vadd.f32 %v2880, %v2883
          %vm2885 = vweird.f32 %v2682
          %vm2886 = vweird.f32 %v2880
          %vm2887 = vmor %vm2885, %vm2886
          %v2888 = vsel %vm2887, %v2880, %v2884
          %v2889 = vand.u32 2147483647, %v2682
          %vm2890 = vcmp.eq.f32.partialorder %v2889, 8.507059e+37
          %v2891 = vand.u32 %v2682, 2147483648
          %v2892 = vor.u32 1.1754944e-38, %v2891
          %v2893 = vsel %vm2890, %v2892, %v2888
          %v2894 = vmul.f32 %v2609, %v2893
          %v2895 = vrcp.pop %v2683
          %v2896 = vmul.f32 %v2683, %v2895
          %v2897 = vsub.f32 1.0, %v2896
          %v2898 = vmul.f32 %v2895, %v2897
          %v2899 = vadd.f32 %v2895, %v2898
          %vm2900 = vweird.f32 %v2683
          %vm2901 = vweird.f32 %v2895
          %vm2902 = vmor %vm2900, %vm2901
          %v2903 = vsel %vm2902, %v2895, %v2899
          %v2904 = vand.u32 2147483647, %v2683
          %vm2905 = vcmp.eq.f32.partialorder %v2904, 8.507059e+37
          %v2906 = vand.u32 %v2683, 2147483648
          %v2907 = vor.u32 1.1754944e-38, %v2906
          %v2908 = vsel %vm2905, %v2907, %v2903
          %v2909 = vmul.f32 %v2553, %v2908
          %v2910 = vrcp.pop %v2684
          %v2911 = vmul.f32 %v2684, %v2910
          %v2912 = vsub.f32 1.0, %v2911
          %v2913 = vmul.f32 %v2910, %v2912
          %v2914 = vadd.f32 %v2910, %v2913
          %vm2915 = vweird.f32 %v2684
          %vm2916 = vweird.f32 %v2910
          %vm2917 = vmor %vm2915, %vm2916
          %v2918 = vsel %vm2917, %v2910, %v2914
          %v2919 = vand.u32 2147483647, %v2684
          %vm2920 = vcmp.eq.f32.partialorder %v2919, 8.507059e+37
          %v2921 = vand.u32 %v2684, 2147483648
          %v2922 = vor.u32 1.1754944e-38, %v2921
          %v2923 = vsel %vm2920, %v2922, %v2918
          %v2924 = vmul.f32 %v2611, %v2923
          %v2925 = vmax.f32 %v2699, %v2759
          %v2926 = vmax.f32 %v2729, %v2789
          %v2927 = vmax.f32 %v2925, %v2819
          %v2928 = vmax.f32 %v2926, %v2849
          %v2929 = vmax.f32 %v2927, %v2879
          %v2930 = vmax.f32 %v2928, %v2909
          %v2931 = vmax.f32 %v2929, %v2930
          %v2932 = vrot.slane %v2931, 4
          %v2933 = vmax.f32 %v2931, %v2932
          %v2934 = vrot.slane %v2933, 2
          %v2935 = vmax.f32 %v2933, %v2934
          %v2936 = vrot.slane %v2935, 1
          %v2937 = vmax.f32 %v2935, %v2936
          %v2938 = vmax.f32 %v2714, %v2774
          %v2939 = vmax.f32 %v2744, %v2804
          %v2940 = vmax.f32 %v2938, %v2834
          %v2941 = vmax.f32 %v2939, %v2864
          %v2942 = vmax.f32 %v2940, %v2894
          %v2943 = vmax.f32 %v2941, %v2924
          %v2944 = vmax.f32 %v2942, %v2943
          %v2945 = vrot.slane %v2944, 4
          %v2946 = vmax.f32 %v2944, %v2945
          %v2947 = vrot.slane %v2946, 2
          %v2948 = vmax.f32 %v2946, %v2947
          %v2949 = vrot.slane %v2948, 1
          %v2950 = vmax.f32 %v2948, %v2949
          %v2951 = vmax.f32 %v2391, %v2937
          %v2952 = vmax.f32 %v2392, %v2950
          %vm2953 = vcmp.gt.f32.partialorder %v717, 0.0
          %vm2954 = vcmp.gt.f32.partialorder %v718, 0.0
          %vm2955 = vcmp.gt.s32.totalorder %v170, 0
          %vm2956 = vcmp.gt.s32.totalorder %v171, 0
          %vm2957 = vmand %vm2953, %vm2955
          %vm2958 = vmand %vm2954, %vm2956
          %v2959 = vsel %vm2957, 1, 0
          %v2960 = vsel %vm2958, 1, 0
          %v2961 = vcvt.s32.f32 %v2959
          %v2962 = vcvt.s32.f32 %v2960
          %v2963 = vsub.f32 1.0, %v2951
          %v2964 = vsub.f32 1.0, %v2952
          %v2965 = vmul.f32 %v2961, %v2963
          %v2966 = vmul.f32 %v2962, %v2964
          %v2967 = vadd.f32 %v2965, %v2966
          %2968 = vadd.xlane.f32.xlu0 %v2967
          %v2969 = vpop.xlane.xlu0 %2968
          %v2970 = vadd.f32 %v2961, %v2962
          %2971 = vadd.xlane.f32.xlu0 %v2970
          %v2972 = vpop.xlane.xlu0 %2971
          %v2973 = vcvt.s32.f32 %v190
          %v2974 = vcvt.s32.f32 %v191
          %v2975 = vcvt.s32.f32 %v192
          %v2976 = vcvt.s32.f32 %v193
          %v2977 = vcvt.s32.f32 %v194
          %v2978 = vcvt.s32.f32 %v195
          %v2979 = vcvt.s32.f32 %v196
          %v2980 = vcvt.s32.f32 %v197
          %v2981 = vcvt.s32.f32 %v198
          %v2982 = vcvt.s32.f32 %v199
          %v2983 = vcvt.s32.f32 %v200
          %v2984 = vcvt.s32.f32 %v201
          %v2985 = vcvt.s32.f32 %v202
          %v2986 = vcvt.s32.f32 %v203
          %v2987 = vcvt.s32.f32 %v204
          %v2988 = vcvt.s32.f32 %v205
          %v2989 = vcvt.s32.f32 %v206
          %v2990 = vcvt.s32.f32 %v207
          %v2991 = vcvt.s32.f32 %v208
          %v2992 = vcvt.s32.f32 %v209
          %v2993 = vcvt.s32.f32 %v210
          %v2994 = vcvt.s32.f32 %v211
          %v2995 = vcvt.s32.f32 %v212
          %v2996 = vcvt.s32.f32 %v213
          %v2997 = vcvt.s32.f32 %v214
          %v2998 = vcvt.s32.f32 %v215
          %v2999 = vcvt.s32.f32 %v216
          %v3000 = vcvt.s32.f32 %v217
          %v3001 = vcvt.s32.f32 %v218
          %v3002 = vcvt.s32.f32 %v219
          %v3003 = vcvt.s32.f32 %v220
          %v3004 = vcvt.s32.f32 %v221
          %vm3005 = vcmask 7168
          %v3006 = vsel %vm3005, %v2973, 0.0
          %v3007 = vsel %vm3005, %v2974, 0.0
          %v3008 = vadd.f32 %v3006, %v3007
          %v3009 = vsel %vm3005, %v2975, 0.0
          %v3010 = vadd.f32 %v3008, %v3009
          %v3011 = vsel %vm3005, %v2976, 0.0
          %v3012 = vadd.f32 %v3010, %v3011
          %v3013 = vsel %vm3005, %v2977, 0.0
          %v3014 = vadd.f32 %v3012, %v3013
          %v3015 = vsel %vm3005, %v2978, 0.0
          %v3016 = vadd.f32 %v3014, %v3015
          %v3017 = vsel %vm3005, %v2979, 0.0
          %v3018 = vadd.f32 %v3016, %v3017
          %v3019 = vsel %vm3005, %v2980, 0.0
          %v3020 = vadd.f32 %v3018, %v3019
          %v3021 = vsel %vm3005, %v2981, 0.0
          %v3022 = vadd.f32 %v3020, %v3021
          %v3023 = vsel %vm3005, %v2982, 0.0
          %v3024 = vadd.f32 %v3022, %v3023
          %v3025 = vsel %vm3005, %v2983, 0.0
          %v3026 = vadd.f32 %v3024, %v3025
          %v3027 = vsel %vm3005, %v2984, 0.0
          %v3028 = vadd.f32 %v3026, %v3027
          %v3029 = vsel %vm3005, %v2985, 0.0
          %v3030 = vadd.f32 %v3028, %v3029
          %v3031 = vsel %vm3005, %v2986, 0.0
          %v3032 = vadd.f32 %v3030, %v3031
          %v3033 = vsel %vm3005, %v2987, 0.0
          %v3034 = vadd.f32 %v3032, %v3033
          %v3035 = vsel %vm3005, %v2988, 0.0
          %v3036 = vadd.f32 %v3034, %v3035
          %v3037 = vsel %vm3005, %v2989, 0.0
          %v3038 = vadd.f32 %v3036, %v3037
          %v3039 = vsel %vm3005, %v2990, 0.0
          %v3040 = vadd.f32 %v3038, %v3039
          %v3041 = vsel %vm3005, %v2991, 0.0
          %v3042 = vadd.f32 %v3040, %v3041
          %v3043 = vsel %vm3005, %v2992, 0.0
          %v3044 = vadd.f32 %v3042, %v3043
          %v3045 = vsel %vm3005, %v2993, 0.0
          %v3046 = vadd.f32 %v3044, %v3045
          %v3047 = vsel %vm3005, %v2994, 0.0
          %v3048 = vadd.f32 %v3046, %v3047
          %v3049 = vsel %vm3005, %v2995, 0.0
          %v3050 = vadd.f32 %v3048, %v3049
          %v3051 = vsel %vm3005, %v2996, 0.0
          %v3052 = vadd.f32 %v3050, %v3051
          %v3053 = vsel %vm3005, %v2997, 0.0
          %v3054 = vadd.f32 %v3052, %v3053
          %v3055 = vsel %vm3005, %v2998, 0.0
          %v3056 = vadd.f32 %v3054, %v3055
          %v3057 = vsel %vm3005, %v2999, 0.0
          %v3058 = vadd.f32 %v3056, %v3057
          %v3059 = vsel %vm3005, %v3000, 0.0
          %v3060 = vadd.f32 %v3058, %v3059
          %v3061 = vsel %vm3005, %v3001, 0.0
          %v3062 = vadd.f32 %v3060, %v3061
          %v3063 = vsel %vm3005, %v3002, 0.0
          %v3064 = vadd.f32 %v3062, %v3063
          %v3065 = vsel %vm3005, %v3003, 0.0
          %v3066 = vadd.f32 %v3064, %v3065
          %v3067 = vsel %vm3005, %v3004, 0.0
          %v3068 = vadd.f32 %v3066, %v3067
          %3069 = vadd.xlane.f32.xlu0 %v3068
          %v3070 = vpop.xlane.xlu0 %3069
          %v3071 = vrot.slane %v3070, 4
          %v3072 = vadd.f32 %v3070, %v3071
          %v3073 = vrot.slane %v3072, 2
          %v3074 = vadd.f32 %v3072, %v3073
          %v3075 = vrot.slane %v3074, 1
          %v3076 = vadd.f32 %v3074, %v3075
          %s3077 = vtos %v3076
          %v3078 = vstv %s3077
          %v3079 = vcvt.s32.f32 %v224
          %v3081 = vperm.slane %v3079, 0
          %v3082 = vperm.slane %v3079, 1
          %vm3085 = vcmask 1040384
          %v3086 = vsel %vm3085, %v3081, 0.0
          %v3087 = vsel %vm3085, %v3082, 0.0
          %v3088 = vadd.f32 %v3086, %v3087
          %3089 = vadd.xlane.f32.xlu0 %v3088
          %v3090 = vpop.xlane.xlu0 %3089
          %v3091 = vrot.slane %v3090, 4
          %v3092 = vadd.f32 %v3090, %v3091
          %v3093 = vrot.slane %v3092, 2
          %v3094 = vadd.f32 %v3092, %v3093
          %v3095 = vrot.slane %v3094, 1
          %v3096 = vadd.f32 %v3094, %v3095
          %s3097 = vtos %v3096
          %v3098 = vstv %s3097
          %v3099 = vadd.f32 %v3078, %v3098
          %v3100 = vrcp.pop 1e+12
          %v3101 = vmul.f32 1e+12, %v3100
          %v3102 = vsub.f32 1.0, %v3101
          %v3103 = vmul.f32 %v3100, %v3102
          %v3104 = vadd.f32 %v3100, %v3103
          %vm3105 = vweird.f32 %v3100
          %v3106 = vsel %vm3105, %v3100, %v3104
          %v3107 = vmul.f32 %v3099, %v3106
          %vm3108 = vcmp.gt.f32.partialorder %v2972, 0.0
          %v3109 = vadd.f32 %v2969, %v3107
          %v3110 = vsel %vm3108, %v3109, 0.0
          %v3111 = vstv %s182
          %vm3112 = vcmp.eq.s32.totalorder %v173, %v3111
          %v3113 = vsel %vm3112, %v3110, %v187
        $region33: #{tpu_custom_call.1} parent=27 // loop_footer
          %s186 = sadd.s32 1, %s182
        $region34: #{tpu_custom_call.1} parent=27 // loop_footer_branch
          %181 = sbr.rel target = $region30
        $region35: #{tpu_custom_call.1} parent=27 // loop_exit
          _
        %3114 = vst [vmem:[%s155] sm:$0xff] %v187
        %s3115 = sand.u32 %s76, 1
        %s3116 = scalar_lea.sflag [#allocation3], %s3115
        %s3117 = sand.u32 %s76, 1
        %s3118 = smul.addr %s3117, 8
        %s3119 = scalar_lea.vmem [#allocation2], %s3118
        // Predicated region
        $region36: #{tpu_custom_call.1} parent=27 // pred_check
          %p3120 = pneg %p86
        $region37: #{tpu_custom_call.1} parent=27 // pred_check_branch
          %3122 = sbr.rel (%p3120) target = $region39
        $region38: #{tpu_custom_call.1} parent=27 // pred_region
          %3124 = vsyncadd %s3116, 0
          %s3125 = smul.addr %s16, 8
          %s3126 = scalar_lea.hbm %s2, %s3125
          %s3128 = sshll.u32 %s3119, 4
          %s3129 = int_to_ptr.vmem [resolvable:$true] %s3128
          %s3130 = sshll.u32 %s3126, 4
          %s3131 = int_to_ptr.hbm [resolvable:$true] %s3130
          %3133 = dma.vmem_to_hbm [thread:$0]  %s3129, 128, %s3131, %s3116
        $region39: #{tpu_custom_call.1} parent=27 // pred_fallthru
          _
      $region28: #{tpu_custom_call.1} parent=5 // pred_fallthru
        _
      %p3134 = scmp.le.s32.totalorder 2, %s11
      // Predicated region
      $region40: #{tpu_custom_call.1} parent=5 // pred_check
        %p3135 = pneg %p3134
      $region41: #{tpu_custom_call.1} parent=5 // pred_check_branch
        %3137 = sbr.rel (%p3135) target = $region43
      $region42: #{tpu_custom_call.1} parent=5 // pred_region
        %s3138 = ssub.s32 %s11, 2
        // Predicated region
        $region44: #{tpu_custom_call.1} parent=42 // pred_check
          %p3139 = pneg %p92
        $region45: #{tpu_custom_call.1} parent=42 // pred_check_branch
          %3141 = sbr.rel (%p3139) target = $region47
        $region46: #{tpu_custom_call.1} parent=42 // pred_region
          %s3142 = sand.u32 %s77, 1
          %s3143 = scalar_lea.sflag [#allocation3], %s3142
          %s3144 = sand.u32 %s77, 1
          %s3145 = smul.addr %s3144, 8
          %s3146 = scalar_lea.vmem [#allocation2], %s3145
          %3148 = dma.done %s3143, 128
        $region47: #{tpu_custom_call.1} parent=42 // pred_fallthru
          _
      $region43: #{tpu_custom_call.1} parent=5 // pred_fallthru
        _
    $region6: #{tpu_custom_call.1} parent=1 // loop_footer
      %s15 = sadd.s32 1, %s11
    $region7: #{tpu_custom_call.1} parent=1 // loop_footer_branch
      %10 = sbr.rel target = $region3
    $region8: #{tpu_custom_call.1} parent=1 // loop_exit
      _
    %3149 = vsyncpa [#allocation3], 1
    %s3150 = scalar_lea.sflag [#allocation3], 1
    %3151 = vsyncpa %s3150, 1

</llo_original>
